<compile_context>
chip_gen: v7x
topology: tpu7x:2x2x1
jax: 0.10.0
libtpu: 0.0.40
codegen_flags: <defaults>
</compile_context>

<pallas_src>
import functools
import math

import numpy as np

import jax
import jax.numpy as jnp
from jax.experimental import pallas as pl
from jax.experimental.pallas import tpu as pltpu

# ----------------------------- model config ---------------------------------
HIDDEN = 32
NUM_HEADS = 4
NUM_LAYERS = 1
N_GRAM_SIZES = [3, 4, 5]
N_GRAM_VOCAB = 30000
BATCH = 2
SEQ = 16
PATCH_BOUNDARIES = [0, 5, 11, 16]


# --------------------------- in-kernel helpers -------------------------------
def _dot_t(a, b):
    """a @ b.T with f32 accumulation (MXU)."""
    return jax.lax.dot_general(a, b, (((1,), (1,)), ((), ())),
                               preferred_element_type=jnp.float32)


def _layernorm(x, w, b, eps):
    """LayerNorm over last dim; w, b have shape (1, H)."""
    mu = jnp.mean(x, axis=-1, keepdims=True)
    var = jnp.mean((x - mu) ** 2, axis=-1, keepdims=True)
    return (x - mu) * jax.lax.rsqrt(var + eps) * w + b


def _mha_out(q, k, v, wo, bo, num_heads, neg_mask=None):
    """Multi-head attention with the output projection folded into the head
    loop:  out = sum_h softmax(q_h k_h^T / sqrt(hd) + neg_mask) v_h @ Wo[:, h]^T + bo.
    neg_mask is an additive mask (0 for keep, -1e30 for masked)."""
    _, H = q.shape
    hd = H // num_heads
    scale = 1.0 / math.sqrt(hd)
    acc = None
    for h in range(num_heads):
        sl = slice(h * hd, (h + 1) * hd)
        s = _dot_t(q[:, sl], k[:, sl]) * scale            # (M, N)
        if neg_mask is not None:
            s = s + neg_mask
        s = s - jnp.max(s, axis=-1, keepdims=True)
        p = jnp.exp(s)
        p = p * pl.reciprocal(jnp.sum(p, axis=-1, keepdims=True), approx=True)
        ctx = jnp.dot(p, v[:, sl], preferred_element_type=jnp.float32)  # (M, hd)
        contrib = _dot_t(ctx, wo[:, sl])                  # (M, H)
        acc = contrib if acc is None else acc + contrib
    return acc + bo


# -------------------- fused Pallas kernel: whole forward ---------------------
def local_encoder_kernel(x_ref, pool_ref,
                         lwqkv_ref, lbqkv_ref, lwo_ref, lbo_ref,
                         lw1_ref, lb1_ref, lw2_ref, lb2_ref,
                         ln1w_ref, ln1b_ref, ln2w_ref, ln2b_ref,
                         cwqkv_ref, cbqkv_ref, cwo_ref, cbo_ref,
                         cnw_ref, cnb_ref,
                         nw_ref, nb_ref,
                         xo_ref, po_ref,
                         *, num_heads, num_layers, has_patches):
    x = x_ref[0].astype(jnp.float32)                      # (S, H)
    S, H = x.shape

    # causal additive mask: -1e30 above the diagonal, 0 elsewhere
    row = jax.lax.broadcasted_iota(jnp.int32, (S, S), 0)
    col = jax.lax.broadcasted_iota(jnp.int32, (S, S), 1)
    causal_neg = jnp.where(col > row, -1e30, 0.0).astype(jnp.float32)

    # transformer encoder layers (PyTorch post-norm layout, eps=1e-5, relu FFN)
    for l in range(num_layers):
        qkv = _dot_t(x, lwqkv_ref[l]) + lbqkv_ref[l]      # (S, 3H)
        attn = _mha_out(qkv[:, :H], qkv[:, H:2 * H], qkv[:, 2 * H:],
                        lwo_ref[l], lbo_ref[l], num_heads, neg_mask=causal_neg)
        x1 = _layernorm(x + attn, ln1w_ref[l], ln1b_ref[l], 1e-5)
        ff = jnp.maximum(_dot_t(x1, lw1_ref[l]) + lb1_ref[l], 0.0)
        ff = _dot_t(ff, lw2_ref[l]) + lb2_ref[l]
        x = _layernorm(x1 + ff, ln2w_ref[l], ln2b_ref[l], 1e-5)

    # pooled per-patch queries: one matmul with a static (NP, S) averaging matrix
    pool = pool_ref[...]                                  # (NP, S)
    q_raw = jnp.dot(pool, x, preferred_element_type=jnp.float32)   # (NP, H)

    if has_patches:
        # Cross-attention for ALL patches at once:
        #   * kv projection computed once over the full sequence
        #     (LayerNorm is row-wise -> LN(x[s:e]) == LN(x)[s:e]),
        #   * per-patch key restriction expressed as an additive score mask.
        cnw = cnw_ref[...]
        cnb = cnb_ref[...]
        qn = _layernorm(q_raw, cnw, cnb, 1e-6)            # (NP, H)
        kvn = _layernorm(x, cnw, cnb, 1e-6)               # (S, H)
        qp = _dot_t(qn, cwqkv_ref[...]) + cbqkv_ref[...]  # (NP, 3H)
        kvp = _dot_t(kvn, cwqkv_ref[...]) + cbqkv_ref[...]  # (S, 3H)
        patch_neg = jnp.where(pool > 0.0, 0.0, -1e30).astype(jnp.float32)  # (NP, S)
        out = _mha_out(qp[:, :H], kvp[:, H:2 * H], kvp[:, 2 * H:],
                       cwo_ref[...], cbo_ref[...], num_heads, neg_mask=patch_neg)
        patches = q_raw + out                             # residual to raw pooled query
    else:
        # no valid patches -> plain mean over the sequence (pool row is 1/S)
        patches = q_raw

    # final LayerNorms (eps=1e-6), written straight to the outputs
    nw = nw_ref[...]
    nb = nb_ref[...]
    xo_ref[0] = _layernorm(x, nw, nb, 1e-6)
    po_ref[0] = _layernorm(patches, nw, nb, 1e-6)


def _full_spec(shape):
    zeros = (0,) * len(shape)
    return pl.BlockSpec(shape, lambda b, _z=zeros: _z)


def local_encoder_call(x, params, patch_pairs):
    B, S, H = x.shape
    L = len(params['layers'])
    has_patches = len(patch_pairs) > 0
    NP = len(patch_pairs) if has_patches else 1

    # static pooled-query matrix: row p averages the rows of patch p
    pool_np = np.zeros((NP, S), np.float32)
    if has_patches:
        for p, (s, e) in enumerate(patch_pairs):
            pool_np[p, s:e] = 1.0 / (e - s)
    else:
        pool_np[0, :] = 1.0 / S
    pool = jnp.asarray(pool_np)

    stack = lambda name: jnp.stack([lp[name] for lp in params['layers']], axis=0)
    lwqkv, lbqkv = stack('wqkv'), stack('bqkv')
    lwo, lbo = stack('wo'), stack('bo')
    lw1, lb1 = stack('w1'), stack('b1')
    lw2, lb2 = stack('w2'), stack('b2')
    ln1w, ln1b = stack('n1w'), stack('n1b')
    ln2w, ln2b = stack('n2w'), stack('n2b')
    cp = params['cross']

    kern = functools.partial(local_encoder_kernel, num_heads=NUM_HEADS,
                             num_layers=L, has_patches=has_patches)

    in_specs = [
        pl.BlockSpec((1, S, H), lambda b: (b, 0, 0)),
        _full_spec((NP, S)),
        _full_spec((L, 3 * H, H)), _full_spec((L, 1, 3 * H)),
        _full_spec((L, H, H)), _full_spec((L, 1, H)),
        _full_spec((L, 4 * H, H)), _full_spec((L, 1, 4 * H)),
        _full_spec((L, H, 4 * H)), _full_spec((L, 1, H)),
        _full_spec((L, 1, H)), _full_spec((L, 1, H)),
        _full_spec((L, 1, H)), _full_spec((L, 1, H)),
        _full_spec((3 * H, H)), _full_spec((1, 3 * H)),
        _full_spec((H, H)), _full_spec((1, H)),
        _full_spec((1, H)), _full_spec((1, H)),
        _full_spec((1, H)), _full_spec((1, H)),
    ]
    out_specs = (
        pl.BlockSpec((1, S, H), lambda b: (b, 0, 0)),
        pl.BlockSpec((1, NP, H), lambda b: (b, 0, 0)),
    )
    out_shape = (
        jax.ShapeDtypeStruct((B, S, H), jnp.float32),
        jax.ShapeDtypeStruct((B, NP, H), jnp.float32),
    )
    return pl.pallas_call(
        kern,
        grid=(B,),
        in_specs=in_specs,
        out_specs=out_specs,
        out_shape=out_shape,
        compiler_params=pltpu.CompilerParams(
            dimension_semantics=("parallel",)),   # v7x: one batch per TensorCore
    )(x, pool,
      lwqkv, lbqkv, lwo, lbo, lw1, lb1, lw2, lb2, ln1w, ln1b, ln2w, ln2b,
      cp['wqkv'], cp['bqkv'], cp['wo'], cp['bo'], cp['nw'], cp['nb'],
      params['norm_w'], params['norm_b'])


# ----------------------------- plain-JAX glue --------------------------------
def compute_n_gram_hashes(byte_seq, n_gram_sizes, mod):
    """Vectorized windowed hash: hash_i = sum_j byte[i+j]*base^(n-1-j) mod m.
    Mathematically identical to the reference rolling hash (always in [0, m))."""
    B, S = byte_seq.shape
    base = 31
    bs = byte_seq.astype(jnp.int32)
    hashes = {}
    for n in n_gram_sizes:
        if S < n:
            continue
        W = S - n + 1
        acc = jnp.zeros((B, W), jnp.int32)
        for j in range(n):
            acc = acc + bs[:, j:j + W] * pow(base, n - 1 - j, mod)
        hashes[n] = acc % mod        # max intermediate ~38M, fits int32
    return hashes


def local_encoder_forward(byte_seq, patch_boundaries, params):
    # byte embeddings + n-gram hash embeddings
    # TODO(synk): embedding-table gathers stay in plain JAX (no clean Pallas
    # equivalent at this size); everything after them is one fused kernel.
    x = params['byte_emb'][byte_seq]                      # (B, S, H)
    hashes = compute_n_gram_hashes(byte_seq, N_GRAM_SIZES, N_GRAM_VOCAB)
    n_gram_scale = 1.0 / (len(N_GRAM_SIZES) + 1)
    for n, hv in hashes.items():
        valid = hv.shape[1]
        if valid > 0:
            emb = params[f'ngram_{n}'][hv] * n_gram_scale
            start = n - 1
            x = x.at[:, start:start + valid].add(emb)

    # dropout -> identity (inference)

    patch_pairs = tuple((s, e) for s, e in zip(patch_boundaries[:-1],
                                               patch_boundaries[1:]) if e > s)
    return local_encoder_call(x.astype(jnp.float32), params, patch_pairs)


# --------------------------- deterministic params ----------------------------
def init_params(key):
    H = HIDDEN
    ks = iter(jax.random.split(key, 64))
    nrm = lambda k, shape, std: (jax.random.normal(k, shape, jnp.float32) * std)

    params = {
        'byte_emb': nrm(next(ks), (256, H), 1.0 / math.sqrt(H)),
        'norm_w': jnp.ones((1, H), jnp.float32),
        'norm_b': jnp.zeros((1, H), jnp.float32),
    }
    for n in N_GRAM_SIZES:
        params[f'ngram_{n}'] = nrm(next(ks), (N_GRAM_VOCAB, H), 0.02)

    layers = []
    for _ in range(NUM_LAYERS):
        layers.append({
            'wqkv': nrm(next(ks), (3 * H, H), 0.02),
            'bqkv': jnp.zeros((1, 3 * H), jnp.float32),
            'wo': nrm(next(ks), (H, H), 0.02),
            'bo': jnp.zeros((1, H), jnp.float32),
            'w1': nrm(next(ks), (4 * H, H), 0.02),
            'b1': jnp.zeros((1, 4 * H), jnp.float32),
            'w2': nrm(next(ks), (H, 4 * H), 0.02),
            'b2': jnp.zeros((1, H), jnp.float32),
            'n1w': jnp.ones((1, H), jnp.float32),
            'n1b': jnp.zeros((1, H), jnp.float32),
            'n2w': jnp.ones((1, H), jnp.float32),
            'n2b': jnp.zeros((1, H), jnp.float32),
        })
    params['layers'] = layers

    params['cross'] = {
        'wqkv': nrm(next(ks), (3 * H, H), 0.02),
        'bqkv': jnp.zeros((1, 3 * H), jnp.float32),
        'wo': nrm(next(ks), (H, H), 0.02),
        'bo': jnp.zeros((1, H), jnp.float32),
        'nw': jnp.ones((1, H), jnp.float32),
        'nb': jnp.zeros((1, H), jnp.float32),
    }
    return params


# --------------------------------- main --------------------------------------
if __name__ == "__main__":
    key = jax.random.PRNGKey(0)
    k_param, k_data = jax.random.split(key)

    params = init_params(k_param)
    byte_seq = jax.random.randint(k_data, (BATCH, SEQ), 0, 256, dtype=jnp.int32)

    fwd = jax.jit(lambda b, p: local_encoder_forward(b, PATCH_BOUNDARIES, p))
    x_norm, patches_norm = fwd(byte_seq, params)
    jax.block_until_ready((x_norm, patches_norm))

    assert x_norm.shape == (BATCH, SEQ, HIDDEN)
    assert patches_norm.shape == (BATCH, len(PATCH_BOUNDARIES) - 1, HIDDEN)
    assert bool(jnp.all(jnp.isfinite(x_norm))) and bool(jnp.all(jnp.isfinite(patches_norm)))
    print("KERNEL_OK")
</pallas_src>

<mosaic_0001>
module attributes {stable_mosaic.version = 11 : i64} {
  func.func @local_encoder_kernel(%arg0: i32, %arg1: memref<1x16x32xf32, #tpu.memory_space<vmem>>, %arg2: memref<3x16xf32, #tpu.memory_space<vmem>>, %arg3: memref<1x96x32xf32, #tpu.memory_space<vmem>>, %arg4: memref<1x1x96xf32, #tpu.memory_space<vmem>>, %arg5: memref<1x32x32xf32, #tpu.memory_space<vmem>>, %arg6: memref<1x1x32xf32, #tpu.memory_space<vmem>>, %arg7: memref<1x128x32xf32, #tpu.memory_space<vmem>>, %arg8: memref<1x1x128xf32, #tpu.memory_space<vmem>>, %arg9: memref<1x32x128xf32, #tpu.memory_space<vmem>>, %arg10: memref<1x1x32xf32, #tpu.memory_space<vmem>>, %arg11: memref<1x1x32xf32, #tpu.memory_space<vmem>>, %arg12: memref<1x1x32xf32, #tpu.memory_space<vmem>>, %arg13: memref<1x1x32xf32, #tpu.memory_space<vmem>>, %arg14: memref<1x1x32xf32, #tpu.memory_space<vmem>>, %arg15: memref<96x32xf32, #tpu.memory_space<vmem>>, %arg16: memref<1x96xf32, #tpu.memory_space<vmem>>, %arg17: memref<32x32xf32, #tpu.memory_space<vmem>>, %arg18: memref<1x32xf32, #tpu.memory_space<vmem>>, %arg19: memref<1x32xf32, #tpu.memory_space<vmem>>, %arg20: memref<1x32xf32, #tpu.memory_space<vmem>>, %arg21: memref<1x32xf32, #tpu.memory_space<vmem>>, %arg22: memref<1x32xf32, #tpu.memory_space<vmem>>, %arg23: memref<1x16x32xf32, #tpu.memory_space<vmem>>, %arg24: memref<1x3x32xf32, #tpu.memory_space<vmem>>) attributes {dimension_semantics = [#tpu.dimension_semantics<parallel>], iteration_bounds = array<i64: 2>, scalar_prefetch = 0 : i64, scratch_operands = 0 : i64, tpu.core_type = #tpu.core_type<tc>, window_params = [{transform_indices = @transform_0, window_bounds = array<i64: 1, 16, 32>}, {pipeline_mode = #tpu.pipeline_mode<synchronous>, transform_indices = @transform_1, window_bounds = array<i64: 3, 16>}, {pipeline_mode = #tpu.pipeline_mode<synchronous>, transform_indices = @transform_2, window_bounds = array<i64: 1, 96, 32>}, {pipeline_mode = #tpu.pipeline_mode<synchronous>, transform_indices = @transform_3, window_bounds = array<i64: 1, 1, 96>}, {pipeline_mode = #tpu.pipeline_mode<synchronous>, transform_indices = @transform_4, window_bounds = array<i64: 1, 32, 32>}, {pipeline_mode = #tpu.pipeline_mode<synchronous>, transform_indices = @transform_5, window_bounds = array<i64: 1, 1, 32>}, {pipeline_mode = #tpu.pipeline_mode<synchronous>, transform_indices = @transform_6, window_bounds = array<i64: 1, 128, 32>}, {pipeline_mode = #tpu.pipeline_mode<synchronous>, transform_indices = @transform_7, window_bounds = array<i64: 1, 1, 128>}, {pipeline_mode = #tpu.pipeline_mode<synchronous>, transform_indices = @transform_8, window_bounds = array<i64: 1, 32, 128>}, {pipeline_mode = #tpu.pipeline_mode<synchronous>, transform_indices = @transform_9, window_bounds = array<i64: 1, 1, 32>}, {pipeline_mode = #tpu.pipeline_mode<synchronous>, transform_indices = @transform_10, window_bounds = array<i64: 1, 1, 32>}, {pipeline_mode = #tpu.pipeline_mode<synchronous>, transform_indices = @transform_11, window_bounds = array<i64: 1, 1, 32>}, {pipeline_mode = #tpu.pipeline_mode<synchronous>, transform_indices = @transform_12, window_bounds = array<i64: 1, 1, 32>}, {pipeline_mode = #tpu.pipeline_mode<synchronous>, transform_indices = @transform_13, window_bounds = array<i64: 1, 1, 32>}, {pipeline_mode = #tpu.pipeline_mode<synchronous>, transform_indices = @transform_14, window_bounds = array<i64: 96, 32>}, {pipeline_mode = #tpu.pipeline_mode<synchronous>, transform_indices = @transform_15, window_bounds = array<i64: 1, 96>}, {pipeline_mode = #tpu.pipeline_mode<synchronous>, transform_indices = @transform_16, window_bounds = array<i64: 32, 32>}, {pipeline_mode = #tpu.pipeline_mode<synchronous>, transform_indices = @transform_17, window_bounds = array<i64: 1, 32>}, {pipeline_mode = #tpu.pipeline_mode<synchronous>, transform_indices = @transform_18, window_bounds = array<i64: 1, 32>}, {pipeline_mode = #tpu.pipeline_mode<synchronous>, transform_indices = @transform_19, window_bounds = array<i64: 1, 32>}, {pipeline_mode = #tpu.pipeline_mode<synchronous>, transform_indices = @transform_20, window_bounds = array<i64: 1, 32>}, {pipeline_mode = #tpu.pipeline_mode<synchronous>, transform_indices = @transform_21, window_bounds = array<i64: 1, 32>}, {transform_indices = @transform_22, window_bounds = array<i64: 1, 16, 32>}, {transform_indices = @transform_23, window_bounds = array<i64: 1, 3, 32>}]} {
    %c0 = arith.constant 0 : index
    %c0_0 = arith.constant 0 : index
    %c0_1 = arith.constant 0 : index
    %0 = vector.load %arg1[%c0, %c0_0, %c0_1] : memref<1x16x32xf32, #tpu.memory_space<vmem>>, vector<1x16x32xf32>
    %1 = vector.shape_cast %0 : vector<1x16x32xf32> to vector<16x32xf32>
    %2 = tpu.iota {dimensions = array<i32: 0>} : vector<16x16xi32>
    %3 = tpu.iota {dimensions = array<i32: 1>} : vector<16x16xi32>
    %4 = arith.cmpi sgt, %3, %2 : vector<16x16xi32>
    %cst = arith.constant -1.000000e+30 : f32
    %cst_2 = arith.constant 0.000000e+00 : f32
    %5 = vector.broadcast %cst : f32 to vector<16x16xf32>
    %6 = vector.broadcast %cst_2 : f32 to vector<16x16xf32>
    %7 = arith.select %4, %5, %6 : vector<16x16xi1>, vector<16x16xf32>
    %c0_3 = arith.constant 0 : index
    %c0_4 = arith.constant 0 : index
    %c0_5 = arith.constant 0 : index
    %8 = vector.load %arg3[%c0_3, %c0_4, %c0_5] : memref<1x96x32xf32, #tpu.memory_space<vmem>>, vector<1x96x32xf32>
    %9 = vector.shape_cast %8 : vector<1x96x32xf32> to vector<96x32xf32>
    %cst_6 = arith.constant dense<0.000000e+00> : vector<16x96xf32>
    %10 = tpu.matmul %1, %9, %cst_6 {dimension_numbers = #tpu.dot_dimension_numbers<[1], [1], [0], [0], [0, 0, 1, 0], [], []>} : vector<16x32xf32>, vector<96x32xf32>, vector<16x96xf32> -> vector<16x96xf32>
    %c0_7 = arith.constant 0 : index
    %c0_8 = arith.constant 0 : index
    %c0_9 = arith.constant 0 : index
    %11 = vector.load %arg4[%c0_7, %c0_8, %c0_9] : memref<1x1x96xf32, #tpu.memory_space<vmem>>, vector<1x1x96xf32>
    %12 = vector.shape_cast %11 : vector<1x1x96xf32> to vector<1x96xf32>
    %13 = vector.broadcast %12 : vector<1x96xf32> to vector<16x96xf32>
    %14 = arith.addf %10, %13 : vector<16x96xf32>
    %15 = vector.extract_strided_slice %14 {offsets = [0, 0], sizes = [16, 32], strides = [1, 1]} : vector<16x96xf32> to vector<16x32xf32>
    %16 = vector.extract_strided_slice %14 {offsets = [0, 32], sizes = [16, 32], strides = [1, 1]} : vector<16x96xf32> to vector<16x32xf32>
    %17 = vector.extract_strided_slice %14 {offsets = [0, 64], sizes = [16, 32], strides = [1, 1]} : vector<16x96xf32> to vector<16x32xf32>
    %c0_10 = arith.constant 0 : index
    %c0_11 = arith.constant 0 : index
    %c0_12 = arith.constant 0 : index
    %18 = vector.load %arg5[%c0_10, %c0_11, %c0_12] : memref<1x32x32xf32, #tpu.memory_space<vmem>>, vector<1x32x32xf32>
    %19 = vector.shape_cast %18 : vector<1x32x32xf32> to vector<32x32xf32>
    %c0_13 = arith.constant 0 : index
    %c0_14 = arith.constant 0 : index
    %c0_15 = arith.constant 0 : index
    %20 = vector.load %arg6[%c0_13, %c0_14, %c0_15] : memref<1x1x32xf32, #tpu.memory_space<vmem>>, vector<1x1x32xf32>
    %21 = vector.shape_cast %20 : vector<1x1x32xf32> to vector<1x32xf32>
    %22 = vector.extract_strided_slice %15 {offsets = [0, 0], sizes = [16, 8], strides = [1, 1]} : vector<16x32xf32> to vector<16x8xf32>
    %23 = vector.extract_strided_slice %16 {offsets = [0, 0], sizes = [16, 8], strides = [1, 1]} : vector<16x32xf32> to vector<16x8xf32>
    %cst_16 = arith.constant dense<0.000000e+00> : vector<16x16xf32>
    %24 = tpu.matmul %22, %23, %cst_16 {dimension_numbers = #tpu.dot_dimension_numbers<[1], [1], [0], [0], [0, 0, 1, 0], [], []>} : vector<16x8xf32>, vector<16x8xf32>, vector<16x16xf32> -> vector<16x16xf32>
    %cst_17 = arith.constant 0.353553385 : f32
    %25 = vector.broadcast %cst_17 : f32 to vector<16x16xf32>
    %26 = arith.mulf %24, %25 : vector<16x16xf32>
    %27 = arith.addf %26, %7 : vector<16x16xf32>
    %cst_18 = arith.constant dense<0xFF800000> : vector<16xf32>
    %28 = vector.multi_reduction <maximumf>, %27, %cst_18 [1] : vector<16x16xf32> to vector<16xf32>
    %29 = vector.shape_cast %28 : vector<16xf32> to vector<16x1xf32>
    %30 = vector.broadcast %29 : vector<16x1xf32> to vector<16x16xf32>
    %31 = arith.subf %27, %30 : vector<16x16xf32>
    %32 = math.exp %31 : vector<16x16xf32>
    %cst_19 = arith.constant dense<0.000000e+00> : vector<16xf32>
    %33 = vector.multi_reduction <add>, %32, %cst_19 [1] : vector<16x16xf32> to vector<16xf32>
    %34 = vector.shape_cast %33 : vector<16xf32> to vector<16x1xf32>
    %35 = tpu.reciprocal %34 {approx = true} : vector<16x1xf32> -> vector<16x1xf32>
    %36 = vector.broadcast %35 : vector<16x1xf32> to vector<16x16xf32>
    %37 = arith.mulf %32, %36 : vector<16x16xf32>
    %38 = vector.extract_strided_slice %17 {offsets = [0, 0], sizes = [16, 8], strides = [1, 1]} : vector<16x32xf32> to vector<16x8xf32>
    %cst_20 = arith.constant dense<0.000000e+00> : vector<16x8xf32>
    %39 = tpu.matmul %37, %38, %cst_20 {dimension_numbers = #tpu.dot_dimension_numbers<[1], [0], [0], [1], [0, 0, 1, 1], [], []>} : vector<16x16xf32>, vector<16x8xf32>, vector<16x8xf32> -> vector<16x8xf32>
    %40 = vector.extract_strided_slice %19 {offsets = [0, 0], sizes = [32, 8], strides = [1, 1]} : vector<32x32xf32> to vector<32x8xf32>
    %cst_21 = arith.constant dense<0.000000e+00> : vector<16x32xf32>
    %41 = tpu.matmul %39, %40, %cst_21 {dimension_numbers = #tpu.dot_dimension_numbers<[1], [1], [0], [0], [0, 0, 1, 0], [], []>} : vector<16x8xf32>, vector<32x8xf32>, vector<16x32xf32> -> vector<16x32xf32>
    %42 = vector.extract_strided_slice %15 {offsets = [0, 8], sizes = [16, 8], strides = [1, 1]} : vector<16x32xf32> to vector<16x8xf32>
    %43 = vector.extract_strided_slice %16 {offsets = [0, 8], sizes = [16, 8], strides = [1, 1]} : vector<16x32xf32> to vector<16x8xf32>
    %cst_22 = arith.constant dense<0.000000e+00> : vector<16x16xf32>
    %44 = tpu.matmul %42, %43, %cst_22 {dimension_numbers = #tpu.dot_dimension_numbers<[1], [1], [0], [0], [0, 0, 1, 0], [], []>} : vector<16x8xf32>, vector<16x8xf32>, vector<16x16xf32> -> vector<16x16xf32>
    %cst_23 = arith.constant 0.353553385 : f32
    %45 = vector.broadcast %cst_23 : f32 to vector<16x16xf32>
    %46 = arith.mulf %44, %45 : vector<16x16xf32>
    %47 = arith.addf %46, %7 : vector<16x16xf32>
    %cst_24 = arith.constant dense<0xFF800000> : vector<16xf32>
    %48 = vector.multi_reduction <maximumf>, %47, %cst_24 [1] : vector<16x16xf32> to vector<16xf32>
    %49 = vector.shape_cast %48 : vector<16xf32> to vector<16x1xf32>
    %50 = vector.broadcast %49 : vector<16x1xf32> to vector<16x16xf32>
    %51 = arith.subf %47, %50 : vector<16x16xf32>
    %52 = math.exp %51 : vector<16x16xf32>
    %cst_25 = arith.constant dense<0.000000e+00> : vector<16xf32>
    %53 = vector.multi_reduction <add>, %52, %cst_25 [1] : vector<16x16xf32> to vector<16xf32>
    %54 = vector.shape_cast %53 : vector<16xf32> to vector<16x1xf32>
    %55 = tpu.reciprocal %54 {approx = true} : vector<16x1xf32> -> vector<16x1xf32>
    %56 = vector.broadcast %55 : vector<16x1xf32> to vector<16x16xf32>
    %57 = arith.mulf %52, %56 : vector<16x16xf32>
    %58 = vector.extract_strided_slice %17 {offsets = [0, 8], sizes = [16, 8], strides = [1, 1]} : vector<16x32xf32> to vector<16x8xf32>
    %cst_26 = arith.constant dense<0.000000e+00> : vector<16x8xf32>
    %59 = tpu.matmul %57, %58, %cst_26 {dimension_numbers = #tpu.dot_dimension_numbers<[1], [0], [0], [1], [0, 0, 1, 1], [], []>} : vector<16x16xf32>, vector<16x8xf32>, vector<16x8xf32> -> vector<16x8xf32>
    %60 = vector.extract_strided_slice %19 {offsets = [0, 8], sizes = [32, 8], strides = [1, 1]} : vector<32x32xf32> to vector<32x8xf32>
    %cst_27 = arith.constant dense<0.000000e+00> : vector<16x32xf32>
    %61 = tpu.matmul %59, %60, %cst_27 {dimension_numbers = #tpu.dot_dimension_numbers<[1], [1], [0], [0], [0, 0, 1, 0], [], []>} : vector<16x8xf32>, vector<32x8xf32>, vector<16x32xf32> -> vector<16x32xf32>
    %62 = arith.addf %41, %61 : vector<16x32xf32>
    %63 = vector.extract_strided_slice %15 {offsets = [0, 16], sizes = [16, 8], strides = [1, 1]} : vector<16x32xf32> to vector<16x8xf32>
    %64 = vector.extract_strided_slice %16 {offsets = [0, 16], sizes = [16, 8], strides = [1, 1]} : vector<16x32xf32> to vector<16x8xf32>
    %cst_28 = arith.constant dense<0.000000e+00> : vector<16x16xf32>
    %65 = tpu.matmul %63, %64, %cst_28 {dimension_numbers = #tpu.dot_dimension_numbers<[1], [1], [0], [0], [0, 0, 1, 0], [], []>} : vector<16x8xf32>, vector<16x8xf32>, vector<16x16xf32> -> vector<16x16xf32>
    %cst_29 = arith.constant 0.353553385 : f32
    %66 = vector.broadcast %cst_29 : f32 to vector<16x16xf32>
    %67 = arith.mulf %65, %66 : vector<16x16xf32>
    %68 = arith.addf %67, %7 : vector<16x16xf32>
    %cst_30 = arith.constant dense<0xFF800000> : vector<16xf32>
    %69 = vector.multi_reduction <maximumf>, %68, %cst_30 [1] : vector<16x16xf32> to vector<16xf32>
    %70 = vector.shape_cast %69 : vector<16xf32> to vector<16x1xf32>
    %71 = vector.broadcast %70 : vector<16x1xf32> to vector<16x16xf32>
    %72 = arith.subf %68, %71 : vector<16x16xf32>
    %73 = math.exp %72 : vector<16x16xf32>
    %cst_31 = arith.constant dense<0.000000e+00> : vector<16xf32>
    %74 = vector.multi_reduction <add>, %73, %cst_31 [1] : vector<16x16xf32> to vector<16xf32>
    %75 = vector.shape_cast %74 : vector<16xf32> to vector<16x1xf32>
    %76 = tpu.reciprocal %75 {approx = true} : vector<16x1xf32> -> vector<16x1xf32>
    %77 = vector.broadcast %76 : vector<16x1xf32> to vector<16x16xf32>
    %78 = arith.mulf %73, %77 : vector<16x16xf32>
    %79 = vector.extract_strided_slice %17 {offsets = [0, 16], sizes = [16, 8], strides = [1, 1]} : vector<16x32xf32> to vector<16x8xf32>
    %cst_32 = arith.constant dense<0.000000e+00> : vector<16x8xf32>
    %80 = tpu.matmul %78, %79, %cst_32 {dimension_numbers = #tpu.dot_dimension_numbers<[1], [0], [0], [1], [0, 0, 1, 1], [], []>} : vector<16x16xf32>, vector<16x8xf32>, vector<16x8xf32> -> vector<16x8xf32>
    %81 = vector.extract_strided_slice %19 {offsets = [0, 16], sizes = [32, 8], strides = [1, 1]} : vector<32x32xf32> to vector<32x8xf32>
    %cst_33 = arith.constant dense<0.000000e+00> : vector<16x32xf32>
    %82 = tpu.matmul %80, %81, %cst_33 {dimension_numbers = #tpu.dot_dimension_numbers<[1], [1], [0], [0], [0, 0, 1, 0], [], []>} : vector<16x8xf32>, vector<32x8xf32>, vector<16x32xf32> -> vector<16x32xf32>
    %83 = arith.addf %62, %82 : vector<16x32xf32>
    %84 = vector.extract_strided_slice %15 {offsets = [0, 24], sizes = [16, 8], strides = [1, 1]} : vector<16x32xf32> to vector<16x8xf32>
    %85 = vector.extract_strided_slice %16 {offsets = [0, 24], sizes = [16, 8], strides = [1, 1]} : vector<16x32xf32> to vector<16x8xf32>
    %cst_34 = arith.constant dense<0.000000e+00> : vector<16x16xf32>
    %86 = tpu.matmul %84, %85, %cst_34 {dimension_numbers = #tpu.dot_dimension_numbers<[1], [1], [0], [0], [0, 0, 1, 0], [], []>} : vector<16x8xf32>, vector<16x8xf32>, vector<16x16xf32> -> vector<16x16xf32>
    %cst_35 = arith.constant 0.353553385 : f32
    %87 = vector.broadcast %cst_35 : f32 to vector<16x16xf32>
    %88 = arith.mulf %86, %87 : vector<16x16xf32>
    %89 = arith.addf %88, %7 : vector<16x16xf32>
    %cst_36 = arith.constant dense<0xFF800000> : vector<16xf32>
    %90 = vector.multi_reduction <maximumf>, %89, %cst_36 [1] : vector<16x16xf32> to vector<16xf32>
    %91 = vector.shape_cast %90 : vector<16xf32> to vector<16x1xf32>
    %92 = vector.broadcast %91 : vector<16x1xf32> to vector<16x16xf32>
    %93 = arith.subf %89, %92 : vector<16x16xf32>
    %94 = math.exp %93 : vector<16x16xf32>
    %cst_37 = arith.constant dense<0.000000e+00> : vector<16xf32>
    %95 = vector.multi_reduction <add>, %94, %cst_37 [1] : vector<16x16xf32> to vector<16xf32>
    %96 = vector.shape_cast %95 : vector<16xf32> to vector<16x1xf32>
    %97 = tpu.reciprocal %96 {approx = true} : vector<16x1xf32> -> vector<16x1xf32>
    %98 = vector.broadcast %97 : vector<16x1xf32> to vector<16x16xf32>
    %99 = arith.mulf %94, %98 : vector<16x16xf32>
    %100 = vector.extract_strided_slice %17 {offsets = [0, 24], sizes = [16, 8], strides = [1, 1]} : vector<16x32xf32> to vector<16x8xf32>
    %cst_38 = arith.constant dense<0.000000e+00> : vector<16x8xf32>
    %101 = tpu.matmul %99, %100, %cst_38 {dimension_numbers = #tpu.dot_dimension_numbers<[1], [0], [0], [1], [0, 0, 1, 1], [], []>} : vector<16x16xf32>, vector<16x8xf32>, vector<16x8xf32> -> vector<16x8xf32>
    %102 = vector.extract_strided_slice %19 {offsets = [0, 24], sizes = [32, 8], strides = [1, 1]} : vector<32x32xf32> to vector<32x8xf32>
    %cst_39 = arith.constant dense<0.000000e+00> : vector<16x32xf32>
    %103 = tpu.matmul %101, %102, %cst_39 {dimension_numbers = #tpu.dot_dimension_numbers<[1], [1], [0], [0], [0, 0, 1, 0], [], []>} : vector<16x8xf32>, vector<32x8xf32>, vector<16x32xf32> -> vector<16x32xf32>
    %104 = arith.addf %83, %103 : vector<16x32xf32>
    %105 = vector.broadcast %21 : vector<1x32xf32> to vector<16x32xf32>
    %106 = arith.addf %104, %105 : vector<16x32xf32>
    %107 = arith.addf %1, %106 : vector<16x32xf32>
    %c0_40 = arith.constant 0 : index
    %c0_41 = arith.constant 0 : index
    %c0_42 = arith.constant 0 : index
    %108 = vector.load %arg11[%c0_40, %c0_41, %c0_42] : memref<1x1x32xf32, #tpu.memory_space<vmem>>, vector<1x1x32xf32>
    %109 = vector.shape_cast %108 : vector<1x1x32xf32> to vector<1x32xf32>
    %c0_43 = arith.constant 0 : index
    %c0_44 = arith.constant 0 : index
    %c0_45 = arith.constant 0 : index
    %110 = vector.load %arg12[%c0_43, %c0_44, %c0_45] : memref<1x1x32xf32, #tpu.memory_space<vmem>>, vector<1x1x32xf32>
    %111 = vector.shape_cast %110 : vector<1x1x32xf32> to vector<1x32xf32>
    %cst_46 = arith.constant dense<0.000000e+00> : vector<16xf32>
    %112 = vector.multi_reduction <add>, %107, %cst_46 [1] : vector<16x32xf32> to vector<16xf32>
    %113 = vector.shape_cast %112 : vector<16xf32> to vector<16x1xf32>
    %cst_47 = arith.constant 3.200000e+01 : f32
    %114 = vector.broadcast %cst_47 : f32 to vector<16x1xf32>
    %115 = arith.divf %113, %114 : vector<16x1xf32>
    %116 = vector.broadcast %115 : vector<16x1xf32> to vector<16x32xf32>
    %117 = arith.subf %107, %116 : vector<16x32xf32>
    %118 = arith.mulf %117, %117 : vector<16x32xf32>
    %cst_48 = arith.constant dense<0.000000e+00> : vector<16xf32>
    %119 = vector.multi_reduction <add>, %118, %cst_48 [1] : vector<16x32xf32> to vector<16xf32>
    %120 = vector.shape_cast %119 : vector<16xf32> to vector<16x1xf32>
    %cst_49 = arith.constant 3.200000e+01 : f32
    %121 = vector.broadcast %cst_49 : f32 to vector<16x1xf32>
    %122 = arith.divf %120, %121 : vector<16x1xf32>
    %123 = vector.broadcast %115 : vector<16x1xf32> to vector<16x32xf32>
    %124 = arith.subf %107, %123 : vector<16x32xf32>
    %cst_50 = arith.constant 9.99999974E-6 : f32
    %125 = vector.broadcast %cst_50 : f32 to vector<16x1xf32>
    %126 = arith.addf %122, %125 : vector<16x1xf32>
    %127 = math.rsqrt %126 : vector<16x1xf32>
    %128 = vector.broadcast %127 : vector<16x1xf32> to vector<16x32xf32>
    %129 = arith.mulf %124, %128 : vector<16x32xf32>
    %130 = vector.broadcast %109 : vector<1x32xf32> to vector<16x32xf32>
    %131 = arith.mulf %129, %130 : vector<16x32xf32>
    %132 = vector.broadcast %111 : vector<1x32xf32> to vector<16x32xf32>
    %133 = arith.addf %131, %132 : vector<16x32xf32>
    %c0_51 = arith.constant 0 : index
    %c0_52 = arith.constant 0 : index
    %c0_53 = arith.constant 0 : index
    %134 = vector.load %arg7[%c0_51, %c0_52, %c0_53] : memref<1x128x32xf32, #tpu.memory_space<vmem>>, vector<1x128x32xf32>
    %135 = vector.shape_cast %134 : vector<1x128x32xf32> to vector<128x32xf32>
    %cst_54 = arith.constant dense<0.000000e+00> : vector<16x128xf32>
    %136 = tpu.matmul %133, %135, %cst_54 {dimension_numbers = #tpu.dot_dimension_numbers<[1], [1], [0], [0], [0, 0, 1, 0], [], []>} : vector<16x32xf32>, vector<128x32xf32>, vector<16x128xf32> -> vector<16x128xf32>
    %c0_55 = arith.constant 0 : index
    %c0_56 = arith.constant 0 : index
    %c0_57 = arith.constant 0 : index
    %137 = vector.load %arg8[%c0_55, %c0_56, %c0_57] : memref<1x1x128xf32, #tpu.memory_space<vmem>>, vector<1x1x128xf32>
    %138 = vector.shape_cast %137 : vector<1x1x128xf32> to vector<1x128xf32>
    %139 = vector.broadcast %138 : vector<1x128xf32> to vector<16x128xf32>
    %140 = arith.addf %136, %139 : vector<16x128xf32>
    %cst_58 = arith.constant 0.000000e+00 : f32
    %141 = vector.broadcast %cst_58 : f32 to vector<16x128xf32>
    %142 = arith.maximumf %140, %141 : vector<16x128xf32>
    %c0_59 = arith.constant 0 : index
    %c0_60 = arith.constant 0 : index
    %c0_61 = arith.constant 0 : index
    %143 = vector.load %arg9[%c0_59, %c0_60, %c0_61] : memref<1x32x128xf32, #tpu.memory_space<vmem>>, vector<1x32x128xf32>
    %144 = vector.shape_cast %143 : vector<1x32x128xf32> to vector<32x128xf32>
    %cst_62 = arith.constant dense<0.000000e+00> : vector<16x32xf32>
    %145 = tpu.matmul %142, %144, %cst_62 {dimension_numbers = #tpu.dot_dimension_numbers<[1], [1], [0], [0], [0, 0, 1, 0], [], []>} : vector<16x128xf32>, vector<32x128xf32>, vector<16x32xf32> -> vector<16x32xf32>
    %c0_63 = arith.constant 0 : index
    %c0_64 = arith.constant 0 : index
    %c0_65 = arith.constant 0 : index
    %146 = vector.load %arg10[%c0_63, %c0_64, %c0_65] : memref<1x1x32xf32, #tpu.memory_space<vmem>>, vector<1x1x32xf32>
    %147 = vector.shape_cast %146 : vector<1x1x32xf32> to vector<1x32xf32>
    %148 = vector.broadcast %147 : vector<1x32xf32> to vector<16x32xf32>
    %149 = arith.addf %145, %148 : vector<16x32xf32>
    %150 = arith.addf %133, %149 : vector<16x32xf32>
    %c0_66 = arith.constant 0 : index
    %c0_67 = arith.constant 0 : index
    %c0_68 = arith.constant 0 : index
    %151 = vector.load %arg13[%c0_66, %c0_67, %c0_68] : memref<1x1x32xf32, #tpu.memory_space<vmem>>, vector<1x1x32xf32>
    %152 = vector.shape_cast %151 : vector<1x1x32xf32> to vector<1x32xf32>
    %c0_69 = arith.constant 0 : index
    %c0_70 = arith.constant 0 : index
    %c0_71 = arith.constant 0 : index
    %153 = vector.load %arg14[%c0_69, %c0_70, %c0_71] : memref<1x1x32xf32, #tpu.memory_space<vmem>>, vector<1x1x32xf32>
    %154 = vector.shape_cast %153 : vector<1x1x32xf32> to vector<1x32xf32>
    %cst_72 = arith.constant dense<0.000000e+00> : vector<16xf32>
    %155 = vector.multi_reduction <add>, %150, %cst_72 [1] : vector<16x32xf32> to vector<16xf32>
    %156 = vector.shape_cast %155 : vector<16xf32> to vector<16x1xf32>
    %cst_73 = arith.constant 3.200000e+01 : f32
    %157 = vector.broadcast %cst_73 : f32 to vector<16x1xf32>
    %158 = arith.divf %156, %157 : vector<16x1xf32>
    %159 = vector.broadcast %158 : vector<16x1xf32> to vector<16x32xf32>
    %160 = arith.subf %150, %159 : vector<16x32xf32>
    %161 = arith.mulf %160, %160 : vector<16x32xf32>
    %cst_74 = arith.constant dense<0.000000e+00> : vector<16xf32>
    %162 = vector.multi_reduction <add>, %161, %cst_74 [1] : vector<16x32xf32> to vector<16xf32>
    %163 = vector.shape_cast %162 : vector<16xf32> to vector<16x1xf32>
    %cst_75 = arith.constant 3.200000e+01 : f32
    %164 = vector.broadcast %cst_75 : f32 to vector<16x1xf32>
    %165 = arith.divf %163, %164 : vector<16x1xf32>
    %166 = vector.broadcast %158 : vector<16x1xf32> to vector<16x32xf32>
    %167 = arith.subf %150, %166 : vector<16x32xf32>
    %cst_76 = arith.constant 9.99999974E-6 : f32
    %168 = vector.broadcast %cst_76 : f32 to vector<16x1xf32>
    %169 = arith.addf %165, %168 : vector<16x1xf32>
    %170 = math.rsqrt %169 : vector<16x1xf32>
    %171 = vector.broadcast %170 : vector<16x1xf32> to vector<16x32xf32>
    %172 = arith.mulf %167, %171 : vector<16x32xf32>
    %173 = vector.broadcast %152 : vector<1x32xf32> to vector<16x32xf32>
    %174 = arith.mulf %172, %173 : vector<16x32xf32>
    %175 = vector.broadcast %154 : vector<1x32xf32> to vector<16x32xf32>
    %176 = arith.addf %174, %175 : vector<16x32xf32>
    %c0_77 = arith.constant 0 : index
    %c0_78 = arith.constant 0 : index
    %177 = vector.load %arg2[%c0_77, %c0_78] : memref<3x16xf32, #tpu.memory_space<vmem>>, vector<3x16xf32>
    %cst_79 = arith.constant dense<0.000000e+00> : vector<3x32xf32>
    %178 = tpu.matmul %177, %176, %cst_79 {dimension_numbers = #tpu.dot_dimension_numbers<[1], [0], [0], [1], [0, 0, 1, 1], [], []>} : vector<3x16xf32>, vector<16x32xf32>, vector<3x32xf32> -> vector<3x32xf32>
    %c0_80 = arith.constant 0 : index
    %c0_81 = arith.constant 0 : index
    %179 = vector.load %arg19[%c0_80, %c0_81] : memref<1x32xf32, #tpu.memory_space<vmem>>, vector<1x32xf32>
    %c0_82 = arith.constant 0 : index
    %c0_83 = arith.constant 0 : index
    %180 = vector.load %arg20[%c0_82, %c0_83] : memref<1x32xf32, #tpu.memory_space<vmem>>, vector<1x32xf32>
    %cst_84 = arith.constant dense<0.000000e+00> : vector<3xf32>
    %181 = vector.multi_reduction <add>, %178, %cst_84 [1] : vector<3x32xf32> to vector<3xf32>
    %182 = vector.shape_cast %181 : vector<3xf32> to vector<3x1xf32>
    %cst_85 = arith.constant 3.200000e+01 : f32
    %183 = vector.broadcast %cst_85 : f32 to vector<3x1xf32>
    %184 = arith.divf %182, %183 : vector<3x1xf32>
    %185 = vector.broadcast %184 : vector<3x1xf32> to vector<3x32xf32>
    %186 = arith.subf %178, %185 : vector<3x32xf32>
    %187 = arith.mulf %186, %186 : vector<3x32xf32>
    %cst_86 = arith.constant dense<0.000000e+00> : vector<3xf32>
    %188 = vector.multi_reduction <add>, %187, %cst_86 [1] : vector<3x32xf32> to vector<3xf32>
    %189 = vector.shape_cast %188 : vector<3xf32> to vector<3x1xf32>
    %cst_87 = arith.constant 3.200000e+01 : f32
    %190 = vector.broadcast %cst_87 : f32 to vector<3x1xf32>
    %191 = arith.divf %189, %190 : vector<3x1xf32>
    %192 = vector.broadcast %184 : vector<3x1xf32> to vector<3x32xf32>
    %193 = arith.subf %178, %192 : vector<3x32xf32>
    %cst_88 = arith.constant 9.99999997E-7 : f32
    %194 = vector.broadcast %cst_88 : f32 to vector<3x1xf32>
    %195 = arith.addf %191, %194 : vector<3x1xf32>
    %196 = math.rsqrt %195 : vector<3x1xf32>
    %197 = vector.broadcast %196 : vector<3x1xf32> to vector<3x32xf32>
    %198 = arith.mulf %193, %197 : vector<3x32xf32>
    %199 = vector.broadcast %179 : vector<1x32xf32> to vector<3x32xf32>
    %200 = arith.mulf %198, %199 : vector<3x32xf32>
    %201 = vector.broadcast %180 : vector<1x32xf32> to vector<3x32xf32>
    %202 = arith.addf %200, %201 : vector<3x32xf32>
    %cst_89 = arith.constant dense<0.000000e+00> : vector<16xf32>
    %203 = vector.multi_reduction <add>, %176, %cst_89 [1] : vector<16x32xf32> to vector<16xf32>
    %204 = vector.shape_cast %203 : vector<16xf32> to vector<16x1xf32>
    %cst_90 = arith.constant 3.200000e+01 : f32
    %205 = vector.broadcast %cst_90 : f32 to vector<16x1xf32>
    %206 = arith.divf %204, %205 : vector<16x1xf32>
    %207 = vector.broadcast %206 : vector<16x1xf32> to vector<16x32xf32>
    %208 = arith.subf %176, %207 : vector<16x32xf32>
    %209 = arith.mulf %208, %208 : vector<16x32xf32>
    %cst_91 = arith.constant dense<0.000000e+00> : vector<16xf32>
    %210 = vector.multi_reduction <add>, %209, %cst_91 [1] : vector<16x32xf32> to vector<16xf32>
    %211 = vector.shape_cast %210 : vector<16xf32> to vector<16x1xf32>
    %cst_92 = arith.constant 3.200000e+01 : f32
    %212 = vector.broadcast %cst_92 : f32 to vector<16x1xf32>
    %213 = arith.divf %211, %212 : vector<16x1xf32>
    %214 = vector.broadcast %206 : vector<16x1xf32> to vector<16x32xf32>
    %215 = arith.subf %176, %214 : vector<16x32xf32>
    %cst_93 = arith.constant 9.99999997E-7 : f32
    %216 = vector.broadcast %cst_93 : f32 to vector<16x1xf32>
    %217 = arith.addf %213, %216 : vector<16x1xf32>
    %218 = math.rsqrt %217 : vector<16x1xf32>
    %219 = vector.broadcast %218 : vector<16x1xf32> to vector<16x32xf32>
    %220 = arith.mulf %215, %219 : vector<16x32xf32>
    %221 = vector.broadcast %179 : vector<1x32xf32> to vector<16x32xf32>
    %222 = arith.mulf %220, %221 : vector<16x32xf32>
    %223 = vector.broadcast %180 : vector<1x32xf32> to vector<16x32xf32>
    %224 = arith.addf %222, %223 : vector<16x32xf32>
    %c0_94 = arith.constant 0 : index
    %c0_95 = arith.constant 0 : index
    %225 = vector.load %arg15[%c0_94, %c0_95] : memref<96x32xf32, #tpu.memory_space<vmem>>, vector<96x32xf32>
    %cst_96 = arith.constant dense<0.000000e+00> : vector<3x96xf32>
    %226 = tpu.matmul %202, %225, %cst_96 {dimension_numbers = #tpu.dot_dimension_numbers<[1], [1], [0], [0], [0, 0, 1, 0], [], []>} : vector<3x32xf32>, vector<96x32xf32>, vector<3x96xf32> -> vector<3x96xf32>
    %c0_97 = arith.constant 0 : index
    %c0_98 = arith.constant 0 : index
    %227 = vector.load %arg16[%c0_97, %c0_98] : memref<1x96xf32, #tpu.memory_space<vmem>>, vector<1x96xf32>
    %228 = vector.broadcast %227 : vector<1x96xf32> to vector<3x96xf32>
    %229 = arith.addf %226, %228 : vector<3x96xf32>
    %c0_99 = arith.constant 0 : index
    %c0_100 = arith.constant 0 : index
    %230 = vector.load %arg15[%c0_99, %c0_100] : memref<96x32xf32, #tpu.memory_space<vmem>>, vector<96x32xf32>
    %cst_101 = arith.constant dense<0.000000e+00> : vector<16x96xf32>
    %231 = tpu.matmul %224, %230, %cst_101 {dimension_numbers = #tpu.dot_dimension_numbers<[1], [1], [0], [0], [0, 0, 1, 0], [], []>} : vector<16x32xf32>, vector<96x32xf32>, vector<16x96xf32> -> vector<16x96xf32>
    %c0_102 = arith.constant 0 : index
    %c0_103 = arith.constant 0 : index
    %232 = vector.load %arg16[%c0_102, %c0_103] : memref<1x96xf32, #tpu.memory_space<vmem>>, vector<1x96xf32>
    %233 = vector.broadcast %232 : vector<1x96xf32> to vector<16x96xf32>
    %234 = arith.addf %231, %233 : vector<16x96xf32>
    %cst_104 = arith.constant 0.000000e+00 : f32
    %235 = vector.broadcast %cst_104 : f32 to vector<3x16xf32>
    %236 = arith.cmpf ogt, %177, %235 : vector<3x16xf32>
    %cst_105 = arith.constant 0.000000e+00 : f32
    %cst_106 = arith.constant -1.000000e+30 : f32
    %237 = vector.broadcast %cst_105 : f32 to vector<3x16xf32>
    %238 = vector.broadcast %cst_106 : f32 to vector<3x16xf32>
    %239 = arith.select %236, %237, %238 : vector<3x16xi1>, vector<3x16xf32>
    %240 = vector.extract_strided_slice %229 {offsets = [0, 0], sizes = [3, 32], strides = [1, 1]} : vector<3x96xf32> to vector<3x32xf32>
    %241 = vector.extract_strided_slice %234 {offsets = [0, 32], sizes = [16, 32], strides = [1, 1]} : vector<16x96xf32> to vector<16x32xf32>
    %242 = vector.extract_strided_slice %234 {offsets = [0, 64], sizes = [16, 32], strides = [1, 1]} : vector<16x96xf32> to vector<16x32xf32>
    %c0_107 = arith.constant 0 : index
    %c0_108 = arith.constant 0 : index
    %243 = vector.load %arg17[%c0_107, %c0_108] : memref<32x32xf32, #tpu.memory_space<vmem>>, vector<32x32xf32>
    %c0_109 = arith.constant 0 : index
    %c0_110 = arith.constant 0 : index
    %244 = vector.load %arg18[%c0_109, %c0_110] : memref<1x32xf32, #tpu.memory_space<vmem>>, vector<1x32xf32>
    %245 = vector.extract_strided_slice %240 {offsets = [0, 0], sizes = [3, 8], strides = [1, 1]} : vector<3x32xf32> to vector<3x8xf32>
    %246 = vector.extract_strided_slice %241 {offsets = [0, 0], sizes = [16, 8], strides = [1, 1]} : vector<16x32xf32> to vector<16x8xf32>
    %cst_111 = arith.constant dense<0.000000e+00> : vector<3x16xf32>
    %247 = tpu.matmul %245, %246, %cst_111 {dimension_numbers = #tpu.dot_dimension_numbers<[1], [1], [0], [0], [0, 0, 1, 0], [], []>} : vector<3x8xf32>, vector<16x8xf32>, vector<3x16xf32> -> vector<3x16xf32>
    %cst_112 = arith.constant 0.353553385 : f32
    %248 = vector.broadcast %cst_112 : f32 to vector<3x16xf32>
    %249 = arith.mulf %247, %248 : vector<3x16xf32>
    %250 = arith.addf %249, %239 : vector<3x16xf32>
    %cst_113 = arith.constant dense<0xFF800000> : vector<3xf32>
    %251 = vector.multi_reduction <maximumf>, %250, %cst_113 [1] : vector<3x16xf32> to vector<3xf32>
    %252 = vector.shape_cast %251 : vector<3xf32> to vector<3x1xf32>
    %253 = vector.broadcast %252 : vector<3x1xf32> to vector<3x16xf32>
    %254 = arith.subf %250, %253 : vector<3x16xf32>
    %255 = math.exp %254 : vector<3x16xf32>
    %cst_114 = arith.constant dense<0.000000e+00> : vector<3xf32>
    %256 = vector.multi_reduction <add>, %255, %cst_114 [1] : vector<3x16xf32> to vector<3xf32>
    %257 = vector.shape_cast %256 : vector<3xf32> to vector<3x1xf32>
    %258 = tpu.reciprocal %257 {approx = true} : vector<3x1xf32> -> vector<3x1xf32>
    %259 = vector.broadcast %258 : vector<3x1xf32> to vector<3x16xf32>
    %260 = arith.mulf %255, %259 : vector<3x16xf32>
    %261 = vector.extract_strided_slice %242 {offsets = [0, 0], sizes = [16, 8], strides = [1, 1]} : vector<16x32xf32> to vector<16x8xf32>
    %cst_115 = arith.constant dense<0.000000e+00> : vector<3x8xf32>
    %262 = tpu.matmul %260, %261, %cst_115 {dimension_numbers = #tpu.dot_dimension_numbers<[1], [0], [0], [1], [0, 0, 1, 1], [], []>} : vector<3x16xf32>, vector<16x8xf32>, vector<3x8xf32> -> vector<3x8xf32>
    %263 = vector.extract_strided_slice %243 {offsets = [0, 0], sizes = [32, 8], strides = [1, 1]} : vector<32x32xf32> to vector<32x8xf32>
    %cst_116 = arith.constant dense<0.000000e+00> : vector<3x32xf32>
    %264 = tpu.matmul %262, %263, %cst_116 {dimension_numbers = #tpu.dot_dimension_numbers<[1], [1], [0], [0], [0, 0, 1, 0], [], []>} : vector<3x8xf32>, vector<32x8xf32>, vector<3x32xf32> -> vector<3x32xf32>
    %265 = vector.extract_strided_slice %240 {offsets = [0, 8], sizes = [3, 8], strides = [1, 1]} : vector<3x32xf32> to vector<3x8xf32>
    %266 = vector.extract_strided_slice %241 {offsets = [0, 8], sizes = [16, 8], strides = [1, 1]} : vector<16x32xf32> to vector<16x8xf32>
    %cst_117 = arith.constant dense<0.000000e+00> : vector<3x16xf32>
    %267 = tpu.matmul %265, %266, %cst_117 {dimension_numbers = #tpu.dot_dimension_numbers<[1], [1], [0], [0], [0, 0, 1, 0], [], []>} : vector<3x8xf32>, vector<16x8xf32>, vector<3x16xf32> -> vector<3x16xf32>
    %cst_118 = arith.constant 0.353553385 : f32
    %268 = vector.broadcast %cst_118 : f32 to vector<3x16xf32>
    %269 = arith.mulf %267, %268 : vector<3x16xf32>
    %270 = arith.addf %269, %239 : vector<3x16xf32>
    %cst_119 = arith.constant dense<0xFF800000> : vector<3xf32>
    %271 = vector.multi_reduction <maximumf>, %270, %cst_119 [1] : vector<3x16xf32> to vector<3xf32>
    %272 = vector.shape_cast %271 : vector<3xf32> to vector<3x1xf32>
    %273 = vector.broadcast %272 : vector<3x1xf32> to vector<3x16xf32>
    %274 = arith.subf %270, %273 : vector<3x16xf32>
    %275 = math.exp %274 : vector<3x16xf32>
    %cst_120 = arith.constant dense<0.000000e+00> : vector<3xf32>
    %276 = vector.multi_reduction <add>, %275, %cst_120 [1] : vector<3x16xf32> to vector<3xf32>
    %277 = vector.shape_cast %276 : vector<3xf32> to vector<3x1xf32>
    %278 = tpu.reciprocal %277 {approx = true} : vector<3x1xf32> -> vector<3x1xf32>
    %279 = vector.broadcast %278 : vector<3x1xf32> to vector<3x16xf32>
    %280 = arith.mulf %275, %279 : vector<3x16xf32>
    %281 = vector.extract_strided_slice %242 {offsets = [0, 8], sizes = [16, 8], strides = [1, 1]} : vector<16x32xf32> to vector<16x8xf32>
    %cst_121 = arith.constant dense<0.000000e+00> : vector<3x8xf32>
    %282 = tpu.matmul %280, %281, %cst_121 {dimension_numbers = #tpu.dot_dimension_numbers<[1], [0], [0], [1], [0, 0, 1, 1], [], []>} : vector<3x16xf32>, vector<16x8xf32>, vector<3x8xf32> -> vector<3x8xf32>
    %283 = vector.extract_strided_slice %243 {offsets = [0, 8], sizes = [32, 8], strides = [1, 1]} : vector<32x32xf32> to vector<32x8xf32>
    %cst_122 = arith.constant dense<0.000000e+00> : vector<3x32xf32>
    %284 = tpu.matmul %282, %283, %cst_122 {dimension_numbers = #tpu.dot_dimension_numbers<[1], [1], [0], [0], [0, 0, 1, 0], [], []>} : vector<3x8xf32>, vector<32x8xf32>, vector<3x32xf32> -> vector<3x32xf32>
    %285 = arith.addf %264, %284 : vector<3x32xf32>
    %286 = vector.extract_strided_slice %240 {offsets = [0, 16], sizes = [3, 8], strides = [1, 1]} : vector<3x32xf32> to vector<3x8xf32>
    %287 = vector.extract_strided_slice %241 {offsets = [0, 16], sizes = [16, 8], strides = [1, 1]} : vector<16x32xf32> to vector<16x8xf32>
    %cst_123 = arith.constant dense<0.000000e+00> : vector<3x16xf32>
    %288 = tpu.matmul %286, %287, %cst_123 {dimension_numbers = #tpu.dot_dimension_numbers<[1], [1], [0], [0], [0, 0, 1, 0], [], []>} : vector<3x8xf32>, vector<16x8xf32>, vector<3x16xf32> -> vector<3x16xf32>
    %cst_124 = arith.constant 0.353553385 : f32
    %289 = vector.broadcast %cst_124 : f32 to vector<3x16xf32>
    %290 = arith.mulf %288, %289 : vector<3x16xf32>
    %291 = arith.addf %290, %239 : vector<3x16xf32>
    %cst_125 = arith.constant dense<0xFF800000> : vector<3xf32>
    %292 = vector.multi_reduction <maximumf>, %291, %cst_125 [1] : vector<3x16xf32> to vector<3xf32>
    %293 = vector.shape_cast %292 : vector<3xf32> to vector<3x1xf32>
    %294 = vector.broadcast %293 : vector<3x1xf32> to vector<3x16xf32>
    %295 = arith.subf %291, %294 : vector<3x16xf32>
    %296 = math.exp %295 : vector<3x16xf32>
    %cst_126 = arith.constant dense<0.000000e+00> : vector<3xf32>
    %297 = vector.multi_reduction <add>, %296, %cst_126 [1] : vector<3x16xf32> to vector<3xf32>
    %298 = vector.shape_cast %297 : vector<3xf32> to vector<3x1xf32>
    %299 = tpu.reciprocal %298 {approx = true} : vector<3x1xf32> -> vector<3x1xf32>
    %300 = vector.broadcast %299 : vector<3x1xf32> to vector<3x16xf32>
    %301 = arith.mulf %296, %300 : vector<3x16xf32>
    %302 = vector.extract_strided_slice %242 {offsets = [0, 16], sizes = [16, 8], strides = [1, 1]} : vector<16x32xf32> to vector<16x8xf32>
    %cst_127 = arith.constant dense<0.000000e+00> : vector<3x8xf32>
    %303 = tpu.matmul %301, %302, %cst_127 {dimension_numbers = #tpu.dot_dimension_numbers<[1], [0], [0], [1], [0, 0, 1, 1], [], []>} : vector<3x16xf32>, vector<16x8xf32>, vector<3x8xf32> -> vector<3x8xf32>
    %304 = vector.extract_strided_slice %243 {offsets = [0, 16], sizes = [32, 8], strides = [1, 1]} : vector<32x32xf32> to vector<32x8xf32>
    %cst_128 = arith.constant dense<0.000000e+00> : vector<3x32xf32>
    %305 = tpu.matmul %303, %304, %cst_128 {dimension_numbers = #tpu.dot_dimension_numbers<[1], [1], [0], [0], [0, 0, 1, 0], [], []>} : vector<3x8xf32>, vector<32x8xf32>, vector<3x32xf32> -> vector<3x32xf32>
    %306 = arith.addf %285, %305 : vector<3x32xf32>
    %307 = vector.extract_strided_slice %240 {offsets = [0, 24], sizes = [3, 8], strides = [1, 1]} : vector<3x32xf32> to vector<3x8xf32>
    %308 = vector.extract_strided_slice %241 {offsets = [0, 24], sizes = [16, 8], strides = [1, 1]} : vector<16x32xf32> to vector<16x8xf32>
    %cst_129 = arith.constant dense<0.000000e+00> : vector<3x16xf32>
    %309 = tpu.matmul %307, %308, %cst_129 {dimension_numbers = #tpu.dot_dimension_numbers<[1], [1], [0], [0], [0, 0, 1, 0], [], []>} : vector<3x8xf32>, vector<16x8xf32>, vector<3x16xf32> -> vector<3x16xf32>
    %cst_130 = arith.constant 0.353553385 : f32
    %310 = vector.broadcast %cst_130 : f32 to vector<3x16xf32>
    %311 = arith.mulf %309, %310 : vector<3x16xf32>
    %312 = arith.addf %311, %239 : vector<3x16xf32>
    %cst_131 = arith.constant dense<0xFF800000> : vector<3xf32>
    %313 = vector.multi_reduction <maximumf>, %312, %cst_131 [1] : vector<3x16xf32> to vector<3xf32>
    %314 = vector.shape_cast %313 : vector<3xf32> to vector<3x1xf32>
    %315 = vector.broadcast %314 : vector<3x1xf32> to vector<3x16xf32>
    %316 = arith.subf %312, %315 : vector<3x16xf32>
    %317 = math.exp %316 : vector<3x16xf32>
    %cst_132 = arith.constant dense<0.000000e+00> : vector<3xf32>
    %318 = vector.multi_reduction <add>, %317, %cst_132 [1] : vector<3x16xf32> to vector<3xf32>
    %319 = vector.shape_cast %318 : vector<3xf32> to vector<3x1xf32>
    %320 = tpu.reciprocal %319 {approx = true} : vector<3x1xf32> -> vector<3x1xf32>
    %321 = vector.broadcast %320 : vector<3x1xf32> to vector<3x16xf32>
    %322 = arith.mulf %317, %321 : vector<3x16xf32>
    %323 = vector.extract_strided_slice %242 {offsets = [0, 24], sizes = [16, 8], strides = [1, 1]} : vector<16x32xf32> to vector<16x8xf32>
    %cst_133 = arith.constant dense<0.000000e+00> : vector<3x8xf32>
    %324 = tpu.matmul %322, %323, %cst_133 {dimension_numbers = #tpu.dot_dimension_numbers<[1], [0], [0], [1], [0, 0, 1, 1], [], []>} : vector<3x16xf32>, vector<16x8xf32>, vector<3x8xf32> -> vector<3x8xf32>
    %325 = vector.extract_strided_slice %243 {offsets = [0, 24], sizes = [32, 8], strides = [1, 1]} : vector<32x32xf32> to vector<32x8xf32>
    %cst_134 = arith.constant dense<0.000000e+00> : vector<3x32xf32>
    %326 = tpu.matmul %324, %325, %cst_134 {dimension_numbers = #tpu.dot_dimension_numbers<[1], [1], [0], [0], [0, 0, 1, 0], [], []>} : vector<3x8xf32>, vector<32x8xf32>, vector<3x32xf32> -> vector<3x32xf32>
    %327 = arith.addf %306, %326 : vector<3x32xf32>
    %328 = vector.broadcast %244 : vector<1x32xf32> to vector<3x32xf32>
    %329 = arith.addf %327, %328 : vector<3x32xf32>
    %330 = arith.addf %178, %329 : vector<3x32xf32>
    %c0_135 = arith.constant 0 : index
    %c0_136 = arith.constant 0 : index
    %331 = vector.load %arg21[%c0_135, %c0_136] : memref<1x32xf32, #tpu.memory_space<vmem>>, vector<1x32xf32>
    %c0_137 = arith.constant 0 : index
    %c0_138 = arith.constant 0 : index
    %332 = vector.load %arg22[%c0_137, %c0_138] : memref<1x32xf32, #tpu.memory_space<vmem>>, vector<1x32xf32>
    %cst_139 = arith.constant dense<0.000000e+00> : vector<16xf32>
    %333 = vector.multi_reduction <add>, %176, %cst_139 [1] : vector<16x32xf32> to vector<16xf32>
    %334 = vector.shape_cast %333 : vector<16xf32> to vector<16x1xf32>
    %cst_140 = arith.constant 3.200000e+01 : f32
    %335 = vector.broadcast %cst_140 : f32 to vector<16x1xf32>
    %336 = arith.divf %334, %335 : vector<16x1xf32>
    %337 = vector.broadcast %336 : vector<16x1xf32> to vector<16x32xf32>
    %338 = arith.subf %176, %337 : vector<16x32xf32>
    %339 = arith.mulf %338, %338 : vector<16x32xf32>
    %cst_141 = arith.constant dense<0.000000e+00> : vector<16xf32>
    %340 = vector.multi_reduction <add>, %339, %cst_141 [1] : vector<16x32xf32> to vector<16xf32>
    %341 = vector.shape_cast %340 : vector<16xf32> to vector<16x1xf32>
    %cst_142 = arith.constant 3.200000e+01 : f32
    %342 = vector.broadcast %cst_142 : f32 to vector<16x1xf32>
    %343 = arith.divf %341, %342 : vector<16x1xf32>
    %344 = vector.broadcast %336 : vector<16x1xf32> to vector<16x32xf32>
    %345 = arith.subf %176, %344 : vector<16x32xf32>
    %cst_143 = arith.constant 9.99999997E-7 : f32
    %346 = vector.broadcast %cst_143 : f32 to vector<16x1xf32>
    %347 = arith.addf %343, %346 : vector<16x1xf32>
    %348 = math.rsqrt %347 : vector<16x1xf32>
    %349 = vector.broadcast %348 : vector<16x1xf32> to vector<16x32xf32>
    %350 = arith.mulf %345, %349 : vector<16x32xf32>
    %351 = vector.broadcast %331 : vector<1x32xf32> to vector<16x32xf32>
    %352 = arith.mulf %350, %351 : vector<16x32xf32>
    %353 = vector.broadcast %332 : vector<1x32xf32> to vector<16x32xf32>
    %354 = arith.addf %352, %353 : vector<16x32xf32>
    %c0_144 = arith.constant 0 : index
    %c0_145 = arith.constant 0 : index
    %c0_146 = arith.constant 0 : index
    %355 = vector.load %arg23[%c0_144, %c0_145, %c0_146] : memref<1x16x32xf32, #tpu.memory_space<vmem>>, vector<1x16x32xf32>
    %356 = vector.shape_cast %355 : vector<1x16x32xf32> to vector<16x32xf32>
    %357 = vector.shape_cast %354 : vector<16x32xf32> to vector<1x16x32xf32>
    tpu.vector_store %arg23[%c0_144, %c0_145, %c0_146], %357 {strides = array<i32>} : memref<1x16x32xf32, #tpu.memory_space<vmem>>, vector<1x16x32xf32>,
    %cst_147 = arith.constant dense<0.000000e+00> : vector<3xf32>
    %358 = vector.multi_reduction <add>, %330, %cst_147 [1] : vector<3x32xf32> to vector<3xf32>
    %359 = vector.shape_cast %358 : vector<3xf32> to vector<3x1xf32>
    %cst_148 = arith.constant 3.200000e+01 : f32
    %360 = vector.broadcast %cst_148 : f32 to vector<3x1xf32>
    %361 = arith.divf %359, %360 : vector<3x1xf32>
    %362 = vector.broadcast %361 : vector<3x1xf32> to vector<3x32xf32>
    %363 = arith.subf %330, %362 : vector<3x32xf32>
    %364 = arith.mulf %363, %363 : vector<3x32xf32>
    %cst_149 = arith.constant dense<0.000000e+00> : vector<3xf32>
    %365 = vector.multi_reduction <add>, %364, %cst_149 [1] : vector<3x32xf32> to vector<3xf32>
    %366 = vector.shape_cast %365 : vector<3xf32> to vector<3x1xf32>
    %cst_150 = arith.constant 3.200000e+01 : f32
    %367 = vector.broadcast %cst_150 : f32 to vector<3x1xf32>
    %368 = arith.divf %366, %367 : vector<3x1xf32>
    %369 = vector.broadcast %361 : vector<3x1xf32> to vector<3x32xf32>
    %370 = arith.subf %330, %369 : vector<3x32xf32>
    %cst_151 = arith.constant 9.99999997E-7 : f32
    %371 = vector.broadcast %cst_151 : f32 to vector<3x1xf32>
    %372 = arith.addf %368, %371 : vector<3x1xf32>
    %373 = math.rsqrt %372 : vector<3x1xf32>
    %374 = vector.broadcast %373 : vector<3x1xf32> to vector<3x32xf32>
    %375 = arith.mulf %370, %374 : vector<3x32xf32>
    %376 = vector.broadcast %331 : vector<1x32xf32> to vector<3x32xf32>
    %377 = arith.mulf %375, %376 : vector<3x32xf32>
    %378 = vector.broadcast %332 : vector<1x32xf32> to vector<3x32xf32>
    %379 = arith.addf %377, %378 : vector<3x32xf32>
    %c0_152 = arith.constant 0 : index
    %c0_153 = arith.constant 0 : index
    %c0_154 = arith.constant 0 : index
    %380 = vector.load %arg24[%c0_152, %c0_153, %c0_154] : memref<1x3x32xf32, #tpu.memory_space<vmem>>, vector<1x3x32xf32>
    %381 = vector.shape_cast %380 : vector<1x3x32xf32> to vector<3x32xf32>
    %382 = vector.shape_cast %379 : vector<3x32xf32> to vector<1x3x32xf32>
    tpu.vector_store %arg24[%c0_152, %c0_153, %c0_154], %382 {strides = array<i32>} : memref<1x3x32xf32, #tpu.memory_space<vmem>>, vector<1x3x32xf32>,
    return
  }
  func.func @transform_0(%arg0: i32) -> (i32, i32, i32) {
    %c0_i32 = arith.constant 0 : i32
    %c0_i32_0 = arith.constant 0 : i32
    %c0_i32_1 = arith.constant 0 : i32
    return %arg0, %c0_i32, %c0_i32_0 : i32, i32, i32
  }
  func.func @transform_1(%arg0: i32) -> (i32, i32) {
    %c0_i32 = arith.constant 0 : i32
    %c0_i32_0 = arith.constant 0 : i32
    %c0_i32_1 = arith.constant 0 : i32
    return %c0_i32, %c0_i32_0 : i32, i32
  }
  func.func @transform_2(%arg0: i32) -> (i32, i32, i32) {
    %c0_i32 = arith.constant 0 : i32
    %c0_i32_0 = arith.constant 0 : i32
    %c0_i32_1 = arith.constant 0 : i32
    %c0_i32_2 = arith.constant 0 : i32
    return %c0_i32, %c0_i32_0, %c0_i32_1 : i32, i32, i32
  }
  func.func @transform_3(%arg0: i32) -> (i32, i32, i32) {
    %c0_i32 = arith.constant 0 : i32
    %c0_i32_0 = arith.constant 0 : i32
    %c0_i32_1 = arith.constant 0 : i32
    %c0_i32_2 = arith.constant 0 : i32
    return %c0_i32, %c0_i32_0, %c0_i32_1 : i32, i32, i32
  }
  func.func @transform_4(%arg0: i32) -> (i32, i32, i32) {
    %c0_i32 = arith.constant 0 : i32
    %c0_i32_0 = arith.constant 0 : i32
    %c0_i32_1 = arith.constant 0 : i32
    %c0_i32_2 = arith.constant 0 : i32
    return %c0_i32, %c0_i32_0, %c0_i32_1 : i32, i32, i32
  }
  func.func @transform_5(%arg0: i32) -> (i32, i32, i32) {
    %c0_i32 = arith.constant 0 : i32
    %c0_i32_0 = arith.constant 0 : i32
    %c0_i32_1 = arith.constant 0 : i32
    %c0_i32_2 = arith.constant 0 : i32
    return %c0_i32, %c0_i32_0, %c0_i32_1 : i32, i32, i32
  }
  func.func @transform_6(%arg0: i32) -> (i32, i32, i32) {
    %c0_i32 = arith.constant 0 : i32
    %c0_i32_0 = arith.constant 0 : i32
    %c0_i32_1 = arith.constant 0 : i32
    %c0_i32_2 = arith.constant 0 : i32
    return %c0_i32, %c0_i32_0, %c0_i32_1 : i32, i32, i32
  }
  func.func @transform_7(%arg0: i32) -> (i32, i32, i32) {
    %c0_i32 = arith.constant 0 : i32
    %c0_i32_0 = arith.constant 0 : i32
    %c0_i32_1 = arith.constant 0 : i32
    %c0_i32_2 = arith.constant 0 : i32
    return %c0_i32, %c0_i32_0, %c0_i32_1 : i32, i32, i32
  }
  func.func @transform_8(%arg0: i32) -> (i32, i32, i32) {
    %c0_i32 = arith.constant 0 : i32
    %c0_i32_0 = arith.constant 0 : i32
    %c0_i32_1 = arith.constant 0 : i32
    %c0_i32_2 = arith.constant 0 : i32
    return %c0_i32, %c0_i32_0, %c0_i32_1 : i32, i32, i32
  }
  func.func @transform_9(%arg0: i32) -> (i32, i32, i32) {
    %c0_i32 = arith.constant 0 : i32
    %c0_i32_0 = arith.constant 0 : i32
    %c0_i32_1 = arith.constant 0 : i32
    %c0_i32_2 = arith.constant 0 : i32
    return %c0_i32, %c0_i32_0, %c0_i32_1 : i32, i32, i32
  }
  func.func @transform_10(%arg0: i32) -> (i32, i32, i32) {
    %c0_i32 = arith.constant 0 : i32
    %c0_i32_0 = arith.constant 0 : i32
    %c0_i32_1 = arith.constant 0 : i32
    %c0_i32_2 = arith.constant 0 : i32
    return %c0_i32, %c0_i32_0, %c0_i32_1 : i32, i32, i32
  }
  func.func @transform_11(%arg0: i32) -> (i32, i32, i32) {
    %c0_i32 = arith.constant 0 : i32
    %c0_i32_0 = arith.constant 0 : i32
    %c0_i32_1 = arith.constant 0 : i32
    %c0_i32_2 = arith.constant 0 : i32
    return %c0_i32, %c0_i32_0, %c0_i32_1 : i32, i32, i32
  }
  func.func @transform_12(%arg0: i32) -> (i32, i32, i32) {
    %c0_i32 = arith.constant 0 : i32
    %c0_i32_0 = arith.constant 0 : i32
    %c0_i32_1 = arith.constant 0 : i32
    %c0_i32_2 = arith.constant 0 : i32
    return %c0_i32, %c0_i32_0, %c0_i32_1 : i32, i32, i32
  }
  func.func @transform_13(%arg0: i32) -> (i32, i32, i32) {
    %c0_i32 = arith.constant 0 : i32
    %c0_i32_0 = arith.constant 0 : i32
    %c0_i32_1 = arith.constant 0 : i32
    %c0_i32_2 = arith.constant 0 : i32
    return %c0_i32, %c0_i32_0, %c0_i32_1 : i32, i32, i32
  }
  func.func @transform_14(%arg0: i32) -> (i32, i32) {
    %c0_i32 = arith.constant 0 : i32
    %c0_i32_0 = arith.constant 0 : i32
    %c0_i32_1 = arith.constant 0 : i32
    return %c0_i32, %c0_i32_0 : i32, i32
  }
  func.func @transform_15(%arg0: i32) -> (i32, i32) {
    %c0_i32 = arith.constant 0 : i32
    %c0_i32_0 = arith.constant 0 : i32
    %c0_i32_1 = arith.constant 0 : i32
    return %c0_i32, %c0_i32_0 : i32, i32
  }
  func.func @transform_16(%arg0: i32) -> (i32, i32) {
    %c0_i32 = arith.constant 0 : i32
    %c0_i32_0 = arith.constant 0 : i32
    %c0_i32_1 = arith.constant 0 : i32
    return %c0_i32, %c0_i32_0 : i32, i32
  }
  func.func @transform_17(%arg0: i32) -> (i32, i32) {
    %c0_i32 = arith.constant 0 : i32
    %c0_i32_0 = arith.constant 0 : i32
    %c0_i32_1 = arith.constant 0 : i32
    return %c0_i32, %c0_i32_0 : i32, i32
  }
  func.func @transform_18(%arg0: i32) -> (i32, i32) {
    %c0_i32 = arith.constant 0 : i32
    %c0_i32_0 = arith.constant 0 : i32
    %c0_i32_1 = arith.constant 0 : i32
    return %c0_i32, %c0_i32_0 : i32, i32
  }
  func.func @transform_19(%arg0: i32) -> (i32, i32) {
    %c0_i32 = arith.constant 0 : i32
    %c0_i32_0 = arith.constant 0 : i32
    %c0_i32_1 = arith.constant 0 : i32
    return %c0_i32, %c0_i32_0 : i32, i32
  }
  func.func @transform_20(%arg0: i32) -> (i32, i32) {
    %c0_i32 = arith.constant 0 : i32
    %c0_i32_0 = arith.constant 0 : i32
    %c0_i32_1 = arith.constant 0 : i32
    return %c0_i32, %c0_i32_0 : i32, i32
  }
  func.func @transform_21(%arg0: i32) -> (i32, i32) {
    %c0_i32 = arith.constant 0 : i32
    %c0_i32_0 = arith.constant 0 : i32
    %c0_i32_1 = arith.constant 0 : i32
    return %c0_i32, %c0_i32_0 : i32, i32
  }
  func.func @transform_22(%arg0: i32) -> (i32, i32, i32) {
    %c0_i32 = arith.constant 0 : i32
    %c0_i32_0 = arith.constant 0 : i32
    %c0_i32_1 = arith.constant 0 : i32
    return %arg0, %c0_i32, %c0_i32_0 : i32, i32, i32
  }
  func.func @transform_23(%arg0: i32) -> (i32, i32, i32) {
    %c0_i32 = arith.constant 0 : i32
    %c0_i32_0 = arith.constant 0 : i32
    %c0_i32_1 = arith.constant 0 : i32
    return %arg0, %c0_i32, %c0_i32_0 : i32, i32, i32
  }
}

</mosaic_0001>

<llo_original>
// kernel: _lambda_.1
$region0: #{_lambda_.1}
  #allocation0 [shape = 'u32[]', space=smem, size = 0x4, offset = 0x4, fixed_abs, tag = 'smem constant byte address 0x4 - core index']
  #allocation1 [shape = 'u32[144,128]{1,0:T(1,128)}', space=vmem, size = 0x12000, scoped, tag = 'internal scratch']
  %s0 = inlined_call_operand.vmem [shape: f32[2,16,32], index: 0, kind: input, shape index: {}]
  %s1 = inlined_call_operand.vmem [shape: f32[3,16], index: 1, kind: input, shape index: {}]
  %s2 = inlined_call_operand.vmem [shape: f32[1,96,32], index: 2, kind: input, shape index: {}]
  %s3 = inlined_call_operand.vmem [shape: f32[1,1,96], index: 3, kind: input, shape index: {}]
  %s4 = inlined_call_operand.vmem [shape: f32[1,32,32], index: 4, kind: input, shape index: {}]
  %s5 = inlined_call_operand.vmem [shape: f32[1,1,32], index: 5, kind: input, shape index: {}]
  %s6 = inlined_call_operand.vmem [shape: f32[1,128,32], index: 6, kind: input, shape index: {}]
  %s7 = inlined_call_operand.vmem [shape: f32[1,1,128], index: 7, kind: input, shape index: {}]
  %s8 = inlined_call_operand.vmem [shape: f32[1,32,128], index: 8, kind: input, shape index: {}]
  %s9 = inlined_call_operand.vmem [shape: f32[1,1,32], index: 9, kind: input, shape index: {}]
  %s10 = inlined_call_operand.vmem [shape: f32[1,1,32], index: 10, kind: input, shape index: {}]
  %s11 = inlined_call_operand.vmem [shape: f32[1,1,32], index: 11, kind: input, shape index: {}]
  %s12 = inlined_call_operand.vmem [shape: f32[1,1,32], index: 12, kind: input, shape index: {}]
  %s13 = inlined_call_operand.vmem [shape: f32[1,1,32], index: 13, kind: input, shape index: {}]
  %s14 = inlined_call_operand.vmem [shape: f32[96,32], index: 14, kind: input, shape index: {}]
  %s15 = inlined_call_operand.vmem [shape: f32[1,96], index: 15, kind: input, shape index: {}]
  %s16 = inlined_call_operand.vmem [shape: f32[32,32], index: 16, kind: input, shape index: {}]
  %s17 = inlined_call_operand.vmem [shape: f32[1,32], index: 17, kind: input, shape index: {}]
  %s18 = inlined_call_operand.vmem [shape: f32[1,32], index: 18, kind: input, shape index: {}]
  %s19 = inlined_call_operand.vmem [shape: f32[1,32], index: 19, kind: input, shape index: {}]
  %s20 = inlined_call_operand.vmem [shape: f32[1,32], index: 20, kind: input, shape index: {}]
  %s21 = inlined_call_operand.vmem [shape: f32[1,32], index: 21, kind: input, shape index: {}]
  %s22 = inlined_call_operand.hbm [shape: f32[2,16,32], index: 22, kind: output, shape index: {0}]
  %s23 = inlined_call_operand.vmem [shape: f32[2,3,32], index: 23, kind: output, shape index: {1}]
  %24 = xla_tuple %s22, %s23
  %s25 = sld [smem:[#allocation0]]
  $region129: #{_lambda_.1} parent=0
    _
  %s27 = ssub.s32 1, %s25
  %s28 = scalar_select 0, %s27, %s25
  $region1: #{_lambda_.1} parent=0
    #allocation2 [shape = 'u8[16384]{0}', space=vmem, size = 0x4000, scoped, tag = 'output window, operand 0']
    #allocation3 [shape = 's32[2]{0}', space=sflag, size = 0x8, scoped, tag = 'scoped memory for _lambda_.1']
    %29 = vsyncpa [#allocation3], 0
    %s30 = scalar_lea.sflag [#allocation3], 1
    %31 = vsyncpa %s30, 0
    loop: start=0, step=1, limit=4
    $region2: #{_lambda_.1} parent=1 // loop_pre_header
      _
    $region3: #{_lambda_.1} parent=1 // loop_header
      %s33 = sphi 0, %s37
      %p34 = scmp.ge.s32.totalorder %s33, 4
      %s43 = sphi 0, %s45
      %s46 = sphi 0, %s43
      %s47 = sphi 0, %s46
      %s63 = sphi 0, %s47
      %s67 = sphi 0, %s67
      %s69 = sphi 0, %s67
      %s70 = sphi 0, %s69
      %s84 = sphi 0, %s70
      %s88 = sphi 0, %s88
      %s90 = sphi 0, %s88
      %s91 = sphi 0, %s90
      %s105 = sphi 0, %s91
      %s109 = sphi 0, %s109
      %s111 = sphi 0, %s109
      %s112 = sphi 0, %s111
      %s126 = sphi 0, %s112
      %s130 = sphi 0, %s130
      %s132 = sphi 0, %s130
      %s133 = sphi 0, %s132
      %s147 = sphi 0, %s133
      %s151 = sphi 0, %s151
      %s153 = sphi 0, %s151
      %s154 = sphi 0, %s153
      %s168 = sphi 0, %s154
      %s172 = sphi 0, %s172
      %s174 = sphi 0, %s172
      %s175 = sphi 0, %s174
      %s189 = sphi 0, %s175
      %s193 = sphi 0, %s193
      %s195 = sphi 0, %s193
      %s196 = sphi 0, %s195
      %s210 = sphi 0, %s196
      %s214 = sphi 0, %s214
      %s216 = sphi 0, %s214
      %s217 = sphi 0, %s216
      %s231 = sphi 0, %s217
      %s235 = sphi 0, %s235
      %s237 = sphi 0, %s235
      %s238 = sphi 0, %s237
      %s252 = sphi 0, %s238
      %s256 = sphi 0, %s256
      %s258 = sphi 0, %s256
      %s259 = sphi 0, %s258
      %s273 = sphi 0, %s259
      %s277 = sphi 0, %s277
      %s279 = sphi 0, %s277
      %s280 = sphi 0, %s279
      %s294 = sphi 0, %s280
      %s298 = sphi 0, %s298
      %s300 = sphi 0, %s298
      %s301 = sphi 0, %s300
      %s315 = sphi 0, %s301
      %s319 = sphi 0, %s319
      %s321 = sphi 0, %s319
      %s322 = sphi 0, %s321
      %s336 = sphi 0, %s322
      %s340 = sphi 0, %s340
      %s342 = sphi 0, %s340
      %s343 = sphi 0, %s342
      %s357 = sphi 0, %s343
      %s361 = sphi 0, %s361
      %s363 = sphi 0, %s361
      %s364 = sphi 0, %s363
      %s378 = sphi 0, %s364
      %s382 = sphi 0, %s382
      %s384 = sphi 0, %s382
      %s385 = sphi 0, %s384
      %s399 = sphi 0, %s385
      %s403 = sphi 0, %s403
      %s405 = sphi 0, %s403
      %s406 = sphi 0, %s405
      %s420 = sphi 0, %s406
      %s424 = sphi 0, %s424
      %s426 = sphi 0, %s424
      %s427 = sphi 0, %s426
      %s441 = sphi 0, %s427
      %s445 = sphi 0, %s445
      %s447 = sphi 0, %s445
      %s448 = sphi 0, %s447
      %s462 = sphi 0, %s448
      %s466 = sphi 0, %s466
      %s468 = sphi 0, %s466
      %s469 = sphi 0, %s468
      %s483 = sphi 0, %s469
      %s487 = sphi 0, %s487
      %s489 = sphi 0, %s487
      %s490 = sphi 0, %s489
      %s504 = sphi 0, %s490
      %s510 = sphi 0, %s512
      %s513 = sphi 0, %s510
      %s514 = sphi 0, %s513
      %s530 = sphi 0, %s514
      %s536 = sphi 0, %s538
      %s539 = sphi 0, %s536
      %s540 = sphi 0, %s539
      %s556 = sphi 0, %s540
    $region4: #{_lambda_.1} parent=1 // loop_header_branch
      %36 = sbr.rel (%p34) target = $region8
    $region5: #{_lambda_.1} parent=1 // loop_body
      %s38 = ssub.s32 %s33, 1
      %s39 = ssub.s32 %s33, 2
      %s40 = sadd.s32 %s33, 1
      %s41 = ssub.s32 %s33, %s40
      %p42 = scmp.eq.s32.totalorder %s41, 0
      %s44 = sadd.s32 %s43, 1
      %s45 = scalar_select %p42, %s43, %s44
      %p48 = pneg %p42
      %p49 = scmp.eq.s32.totalorder %s33, 1
      %p50 = por %p48, %p49
      %p51 = scmp.ne.s32.totalorder %s43, %s46
      %p52 = scmp.eq.s32.totalorder %s33, 0
      %p53 = por %p51, %p52
      %p54 = scmp.ne.s32.totalorder %s43, %s46
      %p55 = scmp.eq.s32.totalorder %s38, 1
      %p56 = por %p54, %p55
      %p57 = scmp.ne.s32.totalorder %s46, %s47
      %p58 = scmp.eq.s32.totalorder %s38, 0
      %p59 = por %p57, %p58
      %p60 = scmp.ne.s32.totalorder %s46, %s47
      %p61 = scmp.eq.s32.totalorder %s39, 1
      %p62 = por %p60, %p61
      %p64 = scmp.ne.s32.totalorder %s47, %s63
      %p65 = scmp.eq.s32.totalorder %s39, 0
      %p66 = por %p64, %p65
      %s68 = sadd.s32 %s67, 1
      %p71 = scmp.eq.s32.totalorder %s33, 1
      %p72 = scmp.ne.s32.totalorder %s67, %s69
      %p73 = scmp.eq.s32.totalorder %s33, 0
      %p74 = por %p72, %p73
      %p75 = scmp.ne.s32.totalorder %s67, %s69
      %p76 = scmp.eq.s32.totalorder %s38, 1
      %p77 = por %p75, %p76
      %p78 = scmp.ne.s32.totalorder %s69, %s70
      %p79 = scmp.eq.s32.totalorder %s38, 0
      %p80 = por %p78, %p79
      %p81 = scmp.ne.s32.totalorder %s69, %s70
      %p82 = scmp.eq.s32.totalorder %s39, 1
      %p83 = por %p81, %p82
      %p85 = scmp.ne.s32.totalorder %s70, %s84
      %p86 = scmp.eq.s32.totalorder %s39, 0
      %p87 = por %p85, %p86
      %s89 = sadd.s32 %s88, 1
      %p92 = scmp.eq.s32.totalorder %s33, 1
      %p93 = scmp.ne.s32.totalorder %s88, %s90
      %p94 = scmp.eq.s32.totalorder %s33, 0
      %p95 = por %p93, %p94
      %p96 = scmp.ne.s32.totalorder %s88, %s90
      %p97 = scmp.eq.s32.totalorder %s38, 1
      %p98 = por %p96, %p97
      %p99 = scmp.ne.s32.totalorder %s90, %s91
      %p100 = scmp.eq.s32.totalorder %s38, 0
      %p101 = por %p99, %p100
      %p102 = scmp.ne.s32.totalorder %s90, %s91
      %p103 = scmp.eq.s32.totalorder %s39, 1
      %p104 = por %p102, %p103
      %p106 = scmp.ne.s32.totalorder %s91, %s105
      %p107 = scmp.eq.s32.totalorder %s39, 0
      %p108 = por %p106, %p107
      %s110 = sadd.s32 %s109, 1
      %p113 = scmp.eq.s32.totalorder %s33, 1
      %p114 = scmp.ne.s32.totalorder %s109, %s111
      %p115 = scmp.eq.s32.totalorder %s33, 0
      %p116 = por %p114, %p115
      %p117 = scmp.ne.s32.totalorder %s109, %s111
      %p118 = scmp.eq.s32.totalorder %s38, 1
      %p119 = por %p117, %p118
      %p120 = scmp.ne.s32.totalorder %s111, %s112
      %p121 = scmp.eq.s32.totalorder %s38, 0
      %p122 = por %p120, %p121
      %p123 = scmp.ne.s32.totalorder %s111, %s112
      %p124 = scmp.eq.s32.totalorder %s39, 1
      %p125 = por %p123, %p124
      %p127 = scmp.ne.s32.totalorder %s112, %s126
      %p128 = scmp.eq.s32.totalorder %s39, 0
      %p129 = por %p127, %p128
      %s131 = sadd.s32 %s130, 1
      %p134 = scmp.eq.s32.totalorder %s33, 1
      %p135 = scmp.ne.s32.totalorder %s130, %s132
      %p136 = scmp.eq.s32.totalorder %s33, 0
      %p137 = por %p135, %p136
      %p138 = scmp.ne.s32.totalorder %s130, %s132
      %p139 = scmp.eq.s32.totalorder %s38, 1
      %p140 = por %p138, %p139
      %p141 = scmp.ne.s32.totalorder %s132, %s133
      %p142 = scmp.eq.s32.totalorder %s38, 0
      %p143 = por %p141, %p142
      %p144 = scmp.ne.s32.totalorder %s132, %s133
      %p145 = scmp.eq.s32.totalorder %s39, 1
      %p146 = por %p144, %p145
      %p148 = scmp.ne.s32.totalorder %s133, %s147
      %p149 = scmp.eq.s32.totalorder %s39, 0
      %p150 = por %p148, %p149
      %s152 = sadd.s32 %s151, 1
      %p155 = scmp.eq.s32.totalorder %s33, 1
      %p156 = scmp.ne.s32.totalorder %s151, %s153
      %p157 = scmp.eq.s32.totalorder %s33, 0
      %p158 = por %p156, %p157
      %p159 = scmp.ne.s32.totalorder %s151, %s153
      %p160 = scmp.eq.s32.totalorder %s38, 1
      %p161 = por %p159, %p160
      %p162 = scmp.ne.s32.totalorder %s153, %s154
      %p163 = scmp.eq.s32.totalorder %s38, 0
      %p164 = por %p162, %p163
      %p165 = scmp.ne.s32.totalorder %s153, %s154
      %p166 = scmp.eq.s32.totalorder %s39, 1
      %p167 = por %p165, %p166
      %p169 = scmp.ne.s32.totalorder %s154, %s168
      %p170 = scmp.eq.s32.totalorder %s39, 0
      %p171 = por %p169, %p170
      %s173 = sadd.s32 %s172, 1
      %p176 = scmp.eq.s32.totalorder %s33, 1
      %p177 = scmp.ne.s32.totalorder %s172, %s174
      %p178 = scmp.eq.s32.totalorder %s33, 0
      %p179 = por %p177, %p178
      %p180 = scmp.ne.s32.totalorder %s172, %s174
      %p181 = scmp.eq.s32.totalorder %s38, 1
      %p182 = por %p180, %p181
      %p183 = scmp.ne.s32.totalorder %s174, %s175
      %p184 = scmp.eq.s32.totalorder %s38, 0
      %p185 = por %p183, %p184
      %p186 = scmp.ne.s32.totalorder %s174, %s175
      %p187 = scmp.eq.s32.totalorder %s39, 1
      %p188 = por %p186, %p187
      %p190 = scmp.ne.s32.totalorder %s175, %s189
      %p191 = scmp.eq.s32.totalorder %s39, 0
      %p192 = por %p190, %p191
      %s194 = sadd.s32 %s193, 1
      %p197 = scmp.eq.s32.totalorder %s33, 1
      %p198 = scmp.ne.s32.totalorder %s193, %s195
      %p199 = scmp.eq.s32.totalorder %s33, 0
      %p200 = por %p198, %p199
      %p201 = scmp.ne.s32.totalorder %s193, %s195
      %p202 = scmp.eq.s32.totalorder %s38, 1
      %p203 = por %p201, %p202
      %p204 = scmp.ne.s32.totalorder %s195, %s196
      %p205 = scmp.eq.s32.totalorder %s38, 0
      %p206 = por %p204, %p205
      %p207 = scmp.ne.s32.totalorder %s195, %s196
      %p208 = scmp.eq.s32.totalorder %s39, 1
      %p209 = por %p207, %p208
      %p211 = scmp.ne.s32.totalorder %s196, %s210
      %p212 = scmp.eq.s32.totalorder %s39, 0
      %p213 = por %p211, %p212
      %s215 = sadd.s32 %s214, 1
      %p218 = scmp.eq.s32.totalorder %s33, 1
      %p219 = scmp.ne.s32.totalorder %s214, %s216
      %p220 = scmp.eq.s32.totalorder %s33, 0
      %p221 = por %p219, %p220
      %p222 = scmp.ne.s32.totalorder %s214, %s216
      %p223 = scmp.eq.s32.totalorder %s38, 1
      %p224 = por %p222, %p223
      %p225 = scmp.ne.s32.totalorder %s216, %s217
      %p226 = scmp.eq.s32.totalorder %s38, 0
      %p227 = por %p225, %p226
      %p228 = scmp.ne.s32.totalorder %s216, %s217
      %p229 = scmp.eq.s32.totalorder %s39, 1
      %p230 = por %p228, %p229
      %p232 = scmp.ne.s32.totalorder %s217, %s231
      %p233 = scmp.eq.s32.totalorder %s39, 0
      %p234 = por %p232, %p233
      %s236 = sadd.s32 %s235, 1
      %p239 = scmp.eq.s32.totalorder %s33, 1
      %p240 = scmp.ne.s32.totalorder %s235, %s237
      %p241 = scmp.eq.s32.totalorder %s33, 0
      %p242 = por %p240, %p241
      %p243 = scmp.ne.s32.totalorder %s235, %s237
      %p244 = scmp.eq.s32.totalorder %s38, 1
      %p245 = por %p243, %p244
      %p246 = scmp.ne.s32.totalorder %s237, %s238
      %p247 = scmp.eq.s32.totalorder %s38, 0
      %p248 = por %p246, %p247
      %p249 = scmp.ne.s32.totalorder %s237, %s238
      %p250 = scmp.eq.s32.totalorder %s39, 1
      %p251 = por %p249, %p250
      %p253 = scmp.ne.s32.totalorder %s238, %s252
      %p254 = scmp.eq.s32.totalorder %s39, 0
      %p255 = por %p253, %p254
      %s257 = sadd.s32 %s256, 1
      %p260 = scmp.eq.s32.totalorder %s33, 1
      %p261 = scmp.ne.s32.totalorder %s256, %s258
      %p262 = scmp.eq.s32.totalorder %s33, 0
      %p263 = por %p261, %p262
      %p264 = scmp.ne.s32.totalorder %s256, %s258
      %p265 = scmp.eq.s32.totalorder %s38, 1
      %p266 = por %p264, %p265
      %p267 = scmp.ne.s32.totalorder %s258, %s259
      %p268 = scmp.eq.s32.totalorder %s38, 0
      %p269 = por %p267, %p268
      %p270 = scmp.ne.s32.totalorder %s258, %s259
      %p271 = scmp.eq.s32.totalorder %s39, 1
      %p272 = por %p270, %p271
      %p274 = scmp.ne.s32.totalorder %s259, %s273
      %p275 = scmp.eq.s32.totalorder %s39, 0
      %p276 = por %p274, %p275
      %s278 = sadd.s32 %s277, 1
      %p281 = scmp.eq.s32.totalorder %s33, 1
      %p282 = scmp.ne.s32.totalorder %s277, %s279
      %p283 = scmp.eq.s32.totalorder %s33, 0
      %p284 = por %p282, %p283
      %p285 = scmp.ne.s32.totalorder %s277, %s279
      %p286 = scmp.eq.s32.totalorder %s38, 1
      %p287 = por %p285, %p286
      %p288 = scmp.ne.s32.totalorder %s279, %s280
      %p289 = scmp.eq.s32.totalorder %s38, 0
      %p290 = por %p288, %p289
      %p291 = scmp.ne.s32.totalorder %s279, %s280
      %p292 = scmp.eq.s32.totalorder %s39, 1
      %p293 = por %p291, %p292
      %p295 = scmp.ne.s32.totalorder %s280, %s294
      %p296 = scmp.eq.s32.totalorder %s39, 0
      %p297 = por %p295, %p296
      %s299 = sadd.s32 %s298, 1
      %p302 = scmp.eq.s32.totalorder %s33, 1
      %p303 = scmp.ne.s32.totalorder %s298, %s300
      %p304 = scmp.eq.s32.totalorder %s33, 0
      %p305 = por %p303, %p304
      %p306 = scmp.ne.s32.totalorder %s298, %s300
      %p307 = scmp.eq.s32.totalorder %s38, 1
      %p308 = por %p306, %p307
      %p309 = scmp.ne.s32.totalorder %s300, %s301
      %p310 = scmp.eq.s32.totalorder %s38, 0
      %p311 = por %p309, %p310
      %p312 = scmp.ne.s32.totalorder %s300, %s301
      %p313 = scmp.eq.s32.totalorder %s39, 1
      %p314 = por %p312, %p313
      %p316 = scmp.ne.s32.totalorder %s301, %s315
      %p317 = scmp.eq.s32.totalorder %s39, 0
      %p318 = por %p316, %p317
      %s320 = sadd.s32 %s319, 1
      %p323 = scmp.eq.s32.totalorder %s33, 1
      %p324 = scmp.ne.s32.totalorder %s319, %s321
      %p325 = scmp.eq.s32.totalorder %s33, 0
      %p326 = por %p324, %p325
      %p327 = scmp.ne.s32.totalorder %s319, %s321
      %p328 = scmp.eq.s32.totalorder %s38, 1
      %p329 = por %p327, %p328
      %p330 = scmp.ne.s32.totalorder %s321, %s322
      %p331 = scmp.eq.s32.totalorder %s38, 0
      %p332 = por %p330, %p331
      %p333 = scmp.ne.s32.totalorder %s321, %s322
      %p334 = scmp.eq.s32.totalorder %s39, 1
      %p335 = por %p333, %p334
      %p337 = scmp.ne.s32.totalorder %s322, %s336
      %p338 = scmp.eq.s32.totalorder %s39, 0
      %p339 = por %p337, %p338
      %s341 = sadd.s32 %s340, 1
      %p344 = scmp.eq.s32.totalorder %s33, 1
      %p345 = scmp.ne.s32.totalorder %s340, %s342
      %p346 = scmp.eq.s32.totalorder %s33, 0
      %p347 = por %p345, %p346
      %p348 = scmp.ne.s32.totalorder %s340, %s342
      %p349 = scmp.eq.s32.totalorder %s38, 1
      %p350 = por %p348, %p349
      %p351 = scmp.ne.s32.totalorder %s342, %s343
      %p352 = scmp.eq.s32.totalorder %s38, 0
      %p353 = por %p351, %p352
      %p354 = scmp.ne.s32.totalorder %s342, %s343
      %p355 = scmp.eq.s32.totalorder %s39, 1
      %p356 = por %p354, %p355
      %p358 = scmp.ne.s32.totalorder %s343, %s357
      %p359 = scmp.eq.s32.totalorder %s39, 0
      %p360 = por %p358, %p359
      %s362 = sadd.s32 %s361, 1
      %p365 = scmp.eq.s32.totalorder %s33, 1
      %p366 = scmp.ne.s32.totalorder %s361, %s363
      %p367 = scmp.eq.s32.totalorder %s33, 0
      %p368 = por %p366, %p367
      %p369 = scmp.ne.s32.totalorder %s361, %s363
      %p370 = scmp.eq.s32.totalorder %s38, 1
      %p371 = por %p369, %p370
      %p372 = scmp.ne.s32.totalorder %s363, %s364
      %p373 = scmp.eq.s32.totalorder %s38, 0
      %p374 = por %p372, %p373
      %p375 = scmp.ne.s32.totalorder %s363, %s364
      %p376 = scmp.eq.s32.totalorder %s39, 1
      %p377 = por %p375, %p376
      %p379 = scmp.ne.s32.totalorder %s364, %s378
      %p380 = scmp.eq.s32.totalorder %s39, 0
      %p381 = por %p379, %p380
      %s383 = sadd.s32 %s382, 1
      %p386 = scmp.eq.s32.totalorder %s33, 1
      %p387 = scmp.ne.s32.totalorder %s382, %s384
      %p388 = scmp.eq.s32.totalorder %s33, 0
      %p389 = por %p387, %p388
      %p390 = scmp.ne.s32.totalorder %s382, %s384
      %p391 = scmp.eq.s32.totalorder %s38, 1
      %p392 = por %p390, %p391
      %p393 = scmp.ne.s32.totalorder %s384, %s385
      %p394 = scmp.eq.s32.totalorder %s38, 0
      %p395 = por %p393, %p394
      %p396 = scmp.ne.s32.totalorder %s384, %s385
      %p397 = scmp.eq.s32.totalorder %s39, 1
      %p398 = por %p396, %p397
      %p400 = scmp.ne.s32.totalorder %s385, %s399
      %p401 = scmp.eq.s32.totalorder %s39, 0
      %p402 = por %p400, %p401
      %s404 = sadd.s32 %s403, 1
      %p407 = scmp.eq.s32.totalorder %s33, 1
      %p408 = scmp.ne.s32.totalorder %s403, %s405
      %p409 = scmp.eq.s32.totalorder %s33, 0
      %p410 = por %p408, %p409
      %p411 = scmp.ne.s32.totalorder %s403, %s405
      %p412 = scmp.eq.s32.totalorder %s38, 1
      %p413 = por %p411, %p412
      %p414 = scmp.ne.s32.totalorder %s405, %s406
      %p415 = scmp.eq.s32.totalorder %s38, 0
      %p416 = por %p414, %p415
      %p417 = scmp.ne.s32.totalorder %s405, %s406
      %p418 = scmp.eq.s32.totalorder %s39, 1
      %p419 = por %p417, %p418
      %p421 = scmp.ne.s32.totalorder %s406, %s420
      %p422 = scmp.eq.s32.totalorder %s39, 0
      %p423 = por %p421, %p422
      %s425 = sadd.s32 %s424, 1
      %p428 = scmp.eq.s32.totalorder %s33, 1
      %p429 = scmp.ne.s32.totalorder %s424, %s426
      %p430 = scmp.eq.s32.totalorder %s33, 0
      %p431 = por %p429, %p430
      %p432 = scmp.ne.s32.totalorder %s424, %s426
      %p433 = scmp.eq.s32.totalorder %s38, 1
      %p434 = por %p432, %p433
      %p435 = scmp.ne.s32.totalorder %s426, %s427
      %p436 = scmp.eq.s32.totalorder %s38, 0
      %p437 = por %p435, %p436
      %p438 = scmp.ne.s32.totalorder %s426, %s427
      %p439 = scmp.eq.s32.totalorder %s39, 1
      %p440 = por %p438, %p439
      %p442 = scmp.ne.s32.totalorder %s427, %s441
      %p443 = scmp.eq.s32.totalorder %s39, 0
      %p444 = por %p442, %p443
      %s446 = sadd.s32 %s445, 1
      %p449 = scmp.eq.s32.totalorder %s33, 1
      %p450 = scmp.ne.s32.totalorder %s445, %s447
      %p451 = scmp.eq.s32.totalorder %s33, 0
      %p452 = por %p450, %p451
      %p453 = scmp.ne.s32.totalorder %s445, %s447
      %p454 = scmp.eq.s32.totalorder %s38, 1
      %p455 = por %p453, %p454
      %p456 = scmp.ne.s32.totalorder %s447, %s448
      %p457 = scmp.eq.s32.totalorder %s38, 0
      %p458 = por %p456, %p457
      %p459 = scmp.ne.s32.totalorder %s447, %s448
      %p460 = scmp.eq.s32.totalorder %s39, 1
      %p461 = por %p459, %p460
      %p463 = scmp.ne.s32.totalorder %s448, %s462
      %p464 = scmp.eq.s32.totalorder %s39, 0
      %p465 = por %p463, %p464
      %s467 = sadd.s32 %s466, 1
      %p470 = scmp.eq.s32.totalorder %s33, 1
      %p471 = scmp.ne.s32.totalorder %s466, %s468
      %p472 = scmp.eq.s32.totalorder %s33, 0
      %p473 = por %p471, %p472
      %p474 = scmp.ne.s32.totalorder %s466, %s468
      %p475 = scmp.eq.s32.totalorder %s38, 1
      %p476 = por %p474, %p475
      %p477 = scmp.ne.s32.totalorder %s468, %s469
      %p478 = scmp.eq.s32.totalorder %s38, 0
      %p479 = por %p477, %p478
      %p480 = scmp.ne.s32.totalorder %s468, %s469
      %p481 = scmp.eq.s32.totalorder %s39, 1
      %p482 = por %p480, %p481
      %p484 = scmp.ne.s32.totalorder %s469, %s483
      %p485 = scmp.eq.s32.totalorder %s39, 0
      %p486 = por %p484, %p485
      %s488 = sadd.s32 %s487, 1
      %p491 = scmp.eq.s32.totalorder %s33, 1
      %p492 = scmp.ne.s32.totalorder %s487, %s489
      %p493 = scmp.eq.s32.totalorder %s33, 0
      %p494 = por %p492, %p493
      %p495 = scmp.ne.s32.totalorder %s487, %s489
      %p496 = scmp.eq.s32.totalorder %s38, 1
      %p497 = por %p495, %p496
      %p498 = scmp.ne.s32.totalorder %s489, %s490
      %p499 = scmp.eq.s32.totalorder %s38, 0
      %p500 = por %p498, %p499
      %p501 = scmp.ne.s32.totalorder %s489, %s490
      %p502 = scmp.eq.s32.totalorder %s39, 1
      %p503 = por %p501, %p502
      %p505 = scmp.ne.s32.totalorder %s490, %s504
      %p506 = scmp.eq.s32.totalorder %s39, 0
      %p507 = por %p505, %p506
      %s508 = ssub.s32 %s33, %s40
      %p509 = scmp.eq.s32.totalorder %s508, 0
      %s511 = sadd.s32 %s510, 1
      %s512 = scalar_select %p509, %s510, %s511
      %p515 = pneg %p509
      %p516 = scmp.eq.s32.totalorder %s33, 1
      %p517 = por %p515, %p516
      %p518 = scmp.ne.s32.totalorder %s510, %s513
      %p519 = scmp.eq.s32.totalorder %s33, 0
      %p520 = por %p518, %p519
      %p521 = scmp.ne.s32.totalorder %s510, %s513
      %p522 = scmp.eq.s32.totalorder %s38, 1
      %p523 = por %p521, %p522
      %p524 = scmp.ne.s32.totalorder %s513, %s514
      %p525 = scmp.eq.s32.totalorder %s38, 0
      %p526 = por %p524, %p525
      %p527 = scmp.ne.s32.totalorder %s513, %s514
      %p528 = scmp.eq.s32.totalorder %s39, 1
      %p529 = por %p527, %p528
      %p531 = scmp.ne.s32.totalorder %s514, %s530
      %p532 = scmp.eq.s32.totalorder %s39, 0
      %p533 = por %p531, %p532
      %s534 = ssub.s32 %s33, %s40
      %p535 = scmp.eq.s32.totalorder %s534, 0
      %s537 = sadd.s32 %s536, 1
      %s538 = scalar_select %p535, %s536, %s537
      %p541 = pneg %p535
      %p542 = scmp.eq.s32.totalorder %s33, 1
      %p543 = por %p541, %p542
      %p544 = scmp.ne.s32.totalorder %s536, %s539
      %p545 = scmp.eq.s32.totalorder %s33, 0
      %p546 = por %p544, %p545
      %p547 = scmp.ne.s32.totalorder %s536, %s539
      %p548 = scmp.eq.s32.totalorder %s38, 1
      %p549 = por %p547, %p548
      %p550 = scmp.ne.s32.totalorder %s539, %s540
      %p551 = scmp.eq.s32.totalorder %s38, 0
      %p552 = por %p550, %p551
      %p553 = scmp.ne.s32.totalorder %s539, %s540
      %p554 = scmp.eq.s32.totalorder %s39, 1
      %p555 = por %p553, %p554
      %p557 = scmp.ne.s32.totalorder %s540, %s556
      %p558 = scmp.eq.s32.totalorder %s39, 0
      %p559 = por %p557, %p558
      %p560 = scmp.le.s32.totalorder 1, %s33
      %p561 = scmp.lt.s32.totalorder %s33, 3
      %p562 = pnand %p560, %p561
      %p563 = pneg %p562
      // Predicated region
      $region9: #{_lambda_.1} parent=5 // pred_check
        _
      $region10: #{_lambda_.1} parent=5 // pred_check_branch
        %565 = sbr.rel (%p562) target = $region12
      $region11: #{_lambda_.1} parent=5 // pred_region
        %s566 = ssub.s32 %s33, 1
        // Predicated region
        $region13: #{_lambda_.1} parent=11 // pred_check
          %p567 = pneg %p80
        $region14: #{_lambda_.1} parent=11 // pred_check_branch
          %569 = sbr.rel (%p567) target = $region16
        $region15: #{_lambda_.1} parent=11 // pred_region
          _
        $region16: #{_lambda_.1} parent=11 // pred_fallthru
          _
        // Predicated region
        $region17: #{_lambda_.1} parent=11 // pred_check
          %p570 = pneg %p101
        $region18: #{_lambda_.1} parent=11 // pred_check_branch
          %572 = sbr.rel (%p570) target = $region20
        $region19: #{_lambda_.1} parent=11 // pred_region
          _
        $region20: #{_lambda_.1} parent=11 // pred_fallthru
          _
        // Predicated region
        $region21: #{_lambda_.1} parent=11 // pred_check
          %p573 = pneg %p122
        $region22: #{_lambda_.1} parent=11 // pred_check_branch
          %575 = sbr.rel (%p573) target = $region24
        $region23: #{_lambda_.1} parent=11 // pred_region
          _
        $region24: #{_lambda_.1} parent=11 // pred_fallthru
          _
        // Predicated region
        $region25: #{_lambda_.1} parent=11 // pred_check
          %p576 = pneg %p143
        $region26: #{_lambda_.1} parent=11 // pred_check_branch
          %578 = sbr.rel (%p576) target = $region28
        $region27: #{_lambda_.1} parent=11 // pred_region
          _
        $region28: #{_lambda_.1} parent=11 // pred_fallthru
          _
        // Predicated region
        $region29: #{_lambda_.1} parent=11 // pred_check
          %p579 = pneg %p164
        $region30: #{_lambda_.1} parent=11 // pred_check_branch
          %581 = sbr.rel (%p579) target = $region32
        $region31: #{_lambda_.1} parent=11 // pred_region
          _
        $region32: #{_lambda_.1} parent=11 // pred_fallthru
          _
        // Predicated region
        $region33: #{_lambda_.1} parent=11 // pred_check
          %p582 = pneg %p185
        $region34: #{_lambda_.1} parent=11 // pred_check_branch
          %584 = sbr.rel (%p582) target = $region36
        $region35: #{_lambda_.1} parent=11 // pred_region
          _
        $region36: #{_lambda_.1} parent=11 // pred_fallthru
          _
        // Predicated region
        $region37: #{_lambda_.1} parent=11 // pred_check
          %p585 = pneg %p206
        $region38: #{_lambda_.1} parent=11 // pred_check_branch
          %587 = sbr.rel (%p585) target = $region40
        $region39: #{_lambda_.1} parent=11 // pred_region
          _
        $region40: #{_lambda_.1} parent=11 // pred_fallthru
          _
        // Predicated region
        $region41: #{_lambda_.1} parent=11 // pred_check
          %p588 = pneg %p227
        $region42: #{_lambda_.1} parent=11 // pred_check_branch
          %590 = sbr.rel (%p588) target = $region44
        $region43: #{_lambda_.1} parent=11 // pred_region
          _
        $region44: #{_lambda_.1} parent=11 // pred_fallthru
          _
        // Predicated region
        $region45: #{_lambda_.1} parent=11 // pred_check
          %p591 = pneg %p248
        $region46: #{_lambda_.1} parent=11 // pred_check_branch
          %593 = sbr.rel (%p591) target = $region48
        $region47: #{_lambda_.1} parent=11 // pred_region
          _
        $region48: #{_lambda_.1} parent=11 // pred_fallthru
          _
        // Predicated region
        $region49: #{_lambda_.1} parent=11 // pred_check
          %p594 = pneg %p269
        $region50: #{_lambda_.1} parent=11 // pred_check_branch
          %596 = sbr.rel (%p594) target = $region52
        $region51: #{_lambda_.1} parent=11 // pred_region
          _
        $region52: #{_lambda_.1} parent=11 // pred_fallthru
          _
        // Predicated region
        $region53: #{_lambda_.1} parent=11 // pred_check
          %p597 = pneg %p290
        $region54: #{_lambda_.1} parent=11 // pred_check_branch
          %599 = sbr.rel (%p597) target = $region56
        $region55: #{_lambda_.1} parent=11 // pred_region
          _
        $region56: #{_lambda_.1} parent=11 // pred_fallthru
          _
        // Predicated region
        $region57: #{_lambda_.1} parent=11 // pred_check
          %p600 = pneg %p311
        $region58: #{_lambda_.1} parent=11 // pred_check_branch
          %602 = sbr.rel (%p600) target = $region60
        $region59: #{_lambda_.1} parent=11 // pred_region
          _
        $region60: #{_lambda_.1} parent=11 // pred_fallthru
          _
        // Predicated region
        $region61: #{_lambda_.1} parent=11 // pred_check
          %p603 = pneg %p332
        $region62: #{_lambda_.1} parent=11 // pred_check_branch
          %605 = sbr.rel (%p603) target = $region64
        $region63: #{_lambda_.1} parent=11 // pred_region
          _
        $region64: #{_lambda_.1} parent=11 // pred_fallthru
          _
        // Predicated region
        $region65: #{_lambda_.1} parent=11 // pred_check
          %p606 = pneg %p353
        $region66: #{_lambda_.1} parent=11 // pred_check_branch
          %608 = sbr.rel (%p606) target = $region68
        $region67: #{_lambda_.1} parent=11 // pred_region
          _
        $region68: #{_lambda_.1} parent=11 // pred_fallthru
          _
        // Predicated region
        $region69: #{_lambda_.1} parent=11 // pred_check
          %p609 = pneg %p374
        $region70: #{_lambda_.1} parent=11 // pred_check_branch
          %611 = sbr.rel (%p609) target = $region72
        $region71: #{_lambda_.1} parent=11 // pred_region
          _
        $region72: #{_lambda_.1} parent=11 // pred_fallthru
          _
        // Predicated region
        $region73: #{_lambda_.1} parent=11 // pred_check
          %p612 = pneg %p395
        $region74: #{_lambda_.1} parent=11 // pred_check_branch
          %614 = sbr.rel (%p612) target = $region76
        $region75: #{_lambda_.1} parent=11 // pred_region
          _
        $region76: #{_lambda_.1} parent=11 // pred_fallthru
          _
        // Predicated region
        $region77: #{_lambda_.1} parent=11 // pred_check
          %p615 = pneg %p416
        $region78: #{_lambda_.1} parent=11 // pred_check_branch
          %617 = sbr.rel (%p615) target = $region80
        $region79: #{_lambda_.1} parent=11 // pred_region
          _
        $region80: #{_lambda_.1} parent=11 // pred_fallthru
          _
        // Predicated region
        $region81: #{_lambda_.1} parent=11 // pred_check
          %p618 = pneg %p437
        $region82: #{_lambda_.1} parent=11 // pred_check_branch
          %620 = sbr.rel (%p618) target = $region84
        $region83: #{_lambda_.1} parent=11 // pred_region
          _
        $region84: #{_lambda_.1} parent=11 // pred_fallthru
          _
        // Predicated region
        $region85: #{_lambda_.1} parent=11 // pred_check
          %p621 = pneg %p458
        $region86: #{_lambda_.1} parent=11 // pred_check_branch
          %623 = sbr.rel (%p621) target = $region88
        $region87: #{_lambda_.1} parent=11 // pred_region
          _
        $region88: #{_lambda_.1} parent=11 // pred_fallthru
          _
        // Predicated region
        $region89: #{_lambda_.1} parent=11 // pred_check
          %p624 = pneg %p479
        $region90: #{_lambda_.1} parent=11 // pred_check_branch
          %626 = sbr.rel (%p624) target = $region92
        $region91: #{_lambda_.1} parent=11 // pred_region
          _
        $region92: #{_lambda_.1} parent=11 // pred_fallthru
          _
        // Predicated region
        $region93: #{_lambda_.1} parent=11 // pred_check
          %p627 = pneg %p500
        $region94: #{_lambda_.1} parent=11 // pred_check_branch
          %629 = sbr.rel (%p627) target = $region96
        $region95: #{_lambda_.1} parent=11 // pred_region
          _
        $region96: #{_lambda_.1} parent=11 // pred_fallthru
          _
      $region12: #{_lambda_.1} parent=5 // pred_fallthru
        _
      %p630 = scmp.lt.s32.totalorder %s33, 2
      // Predicated region
      $region97: #{_lambda_.1} parent=5 // pred_check
        %p631 = pneg %p630
      $region98: #{_lambda_.1} parent=5 // pred_check_branch
        %633 = sbr.rel (%p631) target = $region100
      $region99: #{_lambda_.1} parent=5 // pred_region
        // Predicated region
        $region101: #{_lambda_.1} parent=99 // pred_check
          %p634 = pneg %p53
        $region102: #{_lambda_.1} parent=99 // pred_check_branch
          %636 = sbr.rel (%p634) target = $region104
        $region103: #{_lambda_.1} parent=99 // pred_region
          %p637 = scmp.lt.s32.totalorder %s33, 1
          %s638 = scalar_select %p637, %s33, 1
          %s639 = smul.addr %s638, 2
          %s640 = smul.addr %s639, 8
          %s641 = scalar_lea.vmem %s0, %s640
        $region104: #{_lambda_.1} parent=99 // pred_fallthru
          _
      $region100: #{_lambda_.1} parent=5 // pred_fallthru
        _
      %p642 = scmp.le.s32.totalorder 1, %s33
      %p643 = scmp.lt.s32.totalorder %s33, 3
      %p644 = pnand %p642, %p643
      %p645 = pneg %p644
      // Predicated region
      $region105: #{_lambda_.1} parent=5 // pred_check
        _
      $region106: #{_lambda_.1} parent=5 // pred_check_branch
        %647 = sbr.rel (%p644) target = $region108
      $region107: #{_lambda_.1} parent=5 // pred_region
        %s648 = ssub.s32 %s33, 1
        %p649 = scmp.lt.s32.totalorder %s38, 1
        %s650 = scalar_select %p649, %s38, 1
        %s651 = smul.addr %s650, 2
        %s652 = smul.addr %s651, 8
        %s653 = scalar_lea.vmem %s0, %s652
        %p654 = pneg %p59
        %p655 = pneg %p56
        %p656 = pneg %p80
        %p657 = pneg %p77
        %p658 = pneg %p101
        %p659 = pneg %p98
        %p660 = pneg %p122
        %p661 = pneg %p119
        %p662 = pneg %p143
        %p663 = pneg %p140
        %p664 = pneg %p164
        %p665 = pneg %p161
        %p666 = pneg %p185
        %p667 = pneg %p182
        %p668 = pneg %p206
        %p669 = pneg %p203
        %p670 = pneg %p227
        %p671 = pneg %p224
        %p672 = pneg %p248
        %p673 = pneg %p245
        %p674 = pneg %p269
        %p675 = pneg %p266
        %p676 = pneg %p290
        %p677 = pneg %p287
        %p678 = pneg %p311
        %p679 = pneg %p308
        %p680 = pneg %p332
        %p681 = pneg %p329
        %p682 = pneg %p353
        %p683 = pneg %p350
        %p684 = pneg %p374
        %p685 = pneg %p371
        %p686 = pneg %p395
        %p687 = pneg %p392
        %p688 = pneg %p416
        %p689 = pneg %p413
        %p690 = pneg %p437
        %p691 = pneg %p434
        %p692 = pneg %p458
        %p693 = pneg %p455
        %p694 = pneg %p479
        %p695 = pneg %p476
        %p696 = pneg %p500
        %p697 = pneg %p497
        %p698 = pneg %p526
        %p699 = pneg %p523
        %s700 = sand.u32 %s513, 1
        %s701 = scalar_lea.sflag [#allocation3], %s700
        %s702 = sand.u32 %s513, 1
        %s703 = smul.addr %s702, 16
        %s704 = scalar_lea.vmem [#allocation2], %s703
        %p705 = pneg %p552
        %p706 = pneg %p549
        %p707 = scmp.lt.s32.totalorder %s38, 1
        %s708 = scalar_select %p707, %s38, 1
        %s709 = smul.addr %s708, 4
        %s710 = scalar_lea.vmem %s23, %s709
        %p711 = scmp.lt.s32.totalorder %s38, 1
        %s712 = scalar_select %p711, %s38, 1
        %s713 = smul.addr %s712, 2
        %s714 = smul.addr %s713, 8
        %s715 = scalar_lea.vmem %s0, %s714
        %p716 = scmp.lt.s32.totalorder %s38, 1
        %s717 = scalar_select %p716, %s38, 1
        %s718 = smul.addr %s717, 4
        %s719 = scalar_lea.vmem %s23, %s718
        %v720 = vld [vmem:[%s715] sm:$0xff]
        %v721 = vld [vmem:[%s715 + $0x8] sm:$0xff]
        %v722 = vlaneseq
        %v723 = vshrl.u32 %v722, 7
        %v724 = vadd.s32 %v723, 8
        %v725 = vlaneseq
        %v726 = vand.u32 %v725, 127
        %vm727 = vcmp.gt.s32.totalorder %v726, %v723
        %vm728 = vcmp.gt.s32.totalorder %v726, %v724
        %v729 = vsel %vm727, -1e+30, 0.0
        %v730 = vsel %vm728, -1e+30, 0.0
        %v731 = vld [vmem:[%s2] sm:$0xff]
        %v732 = vld [vmem:[%s2 + $0x8] sm:$0xff]
        %v733 = vld [vmem:[%s2 + $0x10] sm:$0xff]
        %v734 = vld [vmem:[%s2 + $0x18] sm:$0xff]
        %v735 = vld [vmem:[%s2 + $0x20] sm:$0xff]
        %v736 = vld [vmem:[%s2 + $0x28] sm:$0xff]
        %v737 = vld [vmem:[%s2 + $0x30] sm:$0xff]
        %v738 = vld [vmem:[%s2 + $0x38] sm:$0xff]
        %v739 = vld [vmem:[%s2 + $0x40] sm:$0xff]
        %v740 = vld [vmem:[%s2 + $0x48] sm:$0xff]
        %v741 = vld [vmem:[%s2 + $0x50] sm:$0xff]
        %v742 = vld [vmem:[%s2 + $0x58] sm:$0xff]
        %v743 = vld [vmem:[%s3] sm:$0x1]
        %v745 = vlaneseq
        %v746 = vshrl.u32 %v745, 7
        %v747 = vsub.s32 0, %v746
        %v748 = vrot.slane %v743, %v747
        %vm750 = vcmask 261120
        %v752 = vsel %vm750, %v720, 0
        %v755 = vsel %vm750, %v721, 0
        %v758 = vsel %vm750, %v731, 0
        %v761 = vsel %vm750, %v732, 0
        %v764 = vsel %vm750, %v733, 0
        %v767 = vsel %vm750, %v734, 0
        %v770 = vsel %vm750, %v735, 0
        %v773 = vsel %vm750, %v736, 0
        %v776 = vsel %vm750, %v737, 0
        %v779 = vsel %vm750, %v738, 0
        %v782 = vsel %vm750, %v739, 0
        %v785 = vsel %vm750, %v740, 0
        %v788 = vsel %vm750, %v741, 0
        %v791 = vsel %vm750, %v742, 0
        %793 = vmatprep.subr.mxu0 0.0
        %794 = vmatpush1.xpose.msra.mxu0 %v758
        %795 = vmatprep.subr.mxu0 0.0
        %796 = vmatpush1.xpose.msra.mxu0 %v761
        %797 = vmatprep.subr.mxu0 0.0
        %798 = vmatpush1.xpose.msra.mxu0 %v764
        %799 = vmatprep.subr.mxu0 0.0
        %800 = vmatpush1.xpose.msra.mxu0 %v767
        %801 = vmatprep.subr.mxu0 0.0
        %802 = vmatpush1.xpose.msra.mxu0 %v770
        %803 = vmatprep.subr.mxu0 0.0
        %804 = vmatpush1.xpose.msra.mxu0 %v773
        %805 = vmatprep.subr.mxu0 0.0
        %806 = vmatpush1.xpose.msra.mxu0 %v776
        %807 = vmatprep.subr.mxu0 0.0
        %808 = vmatpush1.xpose.msra.mxu0 %v779
        %809 = vmatprep.subr.mxu0 0.0
        %810 = vmatpush1.xpose.msra.mxu0 %v782
        %811 = vmatprep.subr.mxu0 0.0
        %812 = vmatpush1.xpose.msra.mxu0 %v785
        %813 = vmatprep.subr.mxu0 0.0
        %814 = vmatpush1.xpose.msra.mxu0 %v788
        %815 = vmatprep.subr.mxu0 0.0
        %816 = vmatpush1.xpose.msra.mxu0 %v791
        %817 = vmatprep.subr.mxu0 0.0
        %818 = vmatpush1.xpose.msra.mxu0 0.0
        %819 = vmatprep.subr.mxu0 0.0
        %820 = vmatpush1.xpose.msra.mxu0 0.0
        %821 = vmatprep.subr.mxu0 0.0
        %822 = vmatpush1.xpose.msra.mxu0 0.0
        %823 = vmatprep.subr.mxu0 0.0
        %824 = vmatpush1.xpose.msra.mxu0 0.0
        %825 = vmatprep.subr.mxu0 0.0
        %826 = vmatpush1.xpose.msra.mxu0 0.0
        %827 = vmatprep.subr.mxu0 0.0
        %828 = vmatpush1.xpose.msra.mxu0 0.0
        %829 = vmatprep.subr.mxu0 0.0
        %830 = vmatpush1.xpose.msra.mxu0 0.0
        %831 = vmatprep.subr.mxu0 0.0
        %832 = vmatpush1.xpose.msra.mxu0 0.0
        %833 = vmatprep.subr.mxu0 0.0
        %834 = vmatpush1.xpose.msra.mxu0 0.0
        %835 = vmatprep.subr.mxu0 0.0
        %836 = vmatpush1.xpose.msra.mxu0 0.0
        %837 = vmatprep.subr.mxu0 0.0
        %838 = vmatpush1.xpose.msra.mxu0 0.0
        %839 = vmatprep.subr.mxu0 0.0
        %840 = vmatpush1.xpose.msra.mxu0 0.0
        %841 = vmatprep.subr.mxu0 0.0
        %842 = vmatpush1.xpose.msra.mxu0 0.0
        %843 = vmatprep.subr.mxu0 0.0
        %844 = vmatpush1.xpose.msra.mxu0 0.0
        %845 = vmatprep.subr.mxu0 0.0
        %846 = vmatpush1.xpose.msra.mxu0 0.0
        %847 = vmatprep.subr.mxu0 0.0
        %848 = vmatpush1.xpose.msra.mxu0 0.0
        %849 = vmatprep.subr.mxu0 0.0
        %850 = vmatpush1.xpose.msra.mxu0 0.0
        %851 = vmatprep.subr.mxu0 0.0
        %852 = vmatpush1.xpose.msra.mxu0 0.0
        %853 = vmatprep.subr.mxu0 0.0
        %854 = vmatpush1.xpose.msra.mxu0 0.0
        %855 = vmatprep.subr.mxu0 0.0
        %856 = vmatpush1.xpose.msra.mxu0 0.0
        %857 = vmatprep.mubr.f32.mxu0 0.0
        %858 = vmatmul.mubr.f32.gmra.mrb[0].mxu0 %v752
        %v859 = vpop.f32.mrb[0].mxu0
        %v860 = vadd.f32 %v748, %v859
        %v861 = vpop.f32.mrb[0].mxu0
        %862 = vmatprep.mubr.f32.mxu0 0.0
        %863 = vmatmul.mubr.f32.gmra.mrb[0].mxu0 %v755
        %v864 = vpop.f32.mrb[0].mxu0
        %v865 = vadd.f32 %v748, %v864
        %v866 = vpop.f32.mrb[0].mxu0
        %867 = vdwg.mxu0
        %v868 = vld [vmem:[%s4] sm:$0xff]
        %v869 = vld [vmem:[%s4 + $0x8] sm:$0xff]
        %v870 = vld [vmem:[%s4 + $0x10] sm:$0xff]
        %v871 = vld [vmem:[%s4 + $0x18] sm:$0xff]
        %v872 = vld [vmem:[%s5] sm:$0x1]
        %875 = vrot.lane.b32.xlu0 %v860, 96
        %v876 = vpop.permute.xlu0 %875
        %877 = vrot.lane.b32.xlu0 %v865, 96
        %v878 = vpop.permute.xlu0 %877
        %vm879 = vcmask 64512
        %v880 = vsel %vm879, %v860, 0
        %v882 = vsel %vm879, %v865, 0
        %v884 = vsel %vm879, %v876, 0
        %v886 = vsel %vm879, %v878, 0
        %888 = vmatprep.subr.mxu0 0.0
        %889 = vmatpush1.xpose.msra.mxu0 %v884
        %890 = vmatprep.subr.mxu0 0.0
        %891 = vmatpush1.xpose.msra.mxu0 %v886
        %892 = vmatprep.subr.mxu0 0.0
        %893 = vmatpush1.xpose.msra.mxu0 0.0
        %894 = vmatprep.subr.mxu0 0.0
        %895 = vmatpush1.xpose.msra.mxu0 0.0
        %896 = vmatprep.subr.mxu0 0.0
        %897 = vmatpush1.xpose.msra.mxu0 0.0
        %898 = vmatprep.subr.mxu0 0.0
        %899 = vmatpush1.xpose.msra.mxu0 0.0
        %900 = vmatprep.subr.mxu0 0.0
        %901 = vmatpush1.xpose.msra.mxu0 0.0
        %902 = vmatprep.subr.mxu0 0.0
        %903 = vmatpush1.xpose.msra.mxu0 0.0
        %904 = vmatprep.subr.mxu0 0.0
        %905 = vmatpush1.xpose.msra.mxu0 0.0
        %906 = vmatprep.subr.mxu0 0.0
        %907 = vmatpush1.xpose.msra.mxu0 0.0
        %908 = vmatprep.subr.mxu0 0.0
        %909 = vmatpush1.xpose.msra.mxu0 0.0
        %910 = vmatprep.subr.mxu0 0.0
        %911 = vmatpush1.xpose.msra.mxu0 0.0
        %912 = vmatprep.subr.mxu0 0.0
        %913 = vmatpush1.xpose.msra.mxu0 0.0
        %914 = vmatprep.subr.mxu0 0.0
        %915 = vmatpush1.xpose.msra.mxu0 0.0
        %916 = vmatprep.subr.mxu0 0.0
        %917 = vmatpush1.xpose.msra.mxu0 0.0
        %918 = vmatprep.subr.mxu0 0.0
        %919 = vmatpush1.xpose.msra.mxu0 0.0
        %920 = vmatprep.subr.mxu0 0.0
        %921 = vmatpush1.xpose.msra.mxu0 0.0
        %922 = vmatprep.subr.mxu0 0.0
        %923 = vmatpush1.xpose.msra.mxu0 0.0
        %924 = vmatprep.subr.mxu0 0.0
        %925 = vmatpush1.xpose.msra.mxu0 0.0
        %926 = vmatprep.subr.mxu0 0.0
        %927 = vmatpush1.xpose.msra.mxu0 0.0
        %928 = vmatprep.subr.mxu0 0.0
        %929 = vmatpush1.xpose.msra.mxu0 0.0
        %930 = vmatprep.subr.mxu0 0.0
        %931 = vmatpush1.xpose.msra.mxu0 0.0
        %932 = vmatprep.subr.mxu0 0.0
        %933 = vmatpush1.xpose.msra.mxu0 0.0
        %934 = vmatprep.subr.mxu0 0.0
        %935 = vmatpush1.xpose.msra.mxu0 0.0
        %936 = vmatprep.subr.mxu0 0.0
        %937 = vmatpush1.xpose.msra.mxu0 0.0
        %938 = vmatprep.subr.mxu0 0.0
        %939 = vmatpush1.xpose.msra.mxu0 0.0
        %940 = vmatprep.subr.mxu0 0.0
        %941 = vmatpush1.xpose.msra.mxu0 0.0
        %942 = vmatprep.subr.mxu0 0.0
        %943 = vmatpush1.xpose.msra.mxu0 0.0
        %944 = vmatprep.subr.mxu0 0.0
        %945 = vmatpush1.xpose.msra.mxu0 0.0
        %946 = vmatprep.subr.mxu0 0.0
        %947 = vmatpush1.xpose.msra.mxu0 0.0
        %948 = vmatprep.subr.mxu0 0.0
        %949 = vmatpush1.xpose.msra.mxu0 0.0
        %950 = vmatprep.subr.mxu0 0.0
        %951 = vmatpush1.xpose.msra.mxu0 0.0
        %952 = vmatprep.mubr.f32.mxu0 0.0
        %953 = vmatmul.mubr.f32.gmra.mrb[0].mxu0 %v880
        %v954 = vpop.f32.mrb[0].mxu0
        %v955 = vadd.f32 0.0, %v954
        %v956 = vpop.f32.mrb[0].mxu0
        %957 = vmatprep.mubr.f32.mxu0 0.0
        %958 = vmatmul.mubr.f32.gmra.mrb[0].mxu0 %v882
        %v959 = vpop.f32.mrb[0].mxu0
        %v960 = vadd.f32 0.0, %v959
        %v961 = vpop.f32.mrb[0].mxu0
        %962 = vdwg.mxu0
        %v963 = vmul.f32 %v955, 0.35355338
        %v964 = vmul.f32 %v960, 0.35355338
        %v965 = vadd.f32 %v963, %v729
        %v966 = vadd.f32 %v964, %v730
        %vm967 = vcmask 130048
        %v968 = vsel %vm967, %v965, -inf
        %969 = vmax.xlane.f32.xlu0 %v968
        %v970 = vpop.xlane.xlu0 %969
        %v971 = vsel %vm967, %v966, -inf
        %972 = vmax.xlane.f32.xlu0 %v971
        %v973 = vpop.xlane.xlu0 %972
        %v974 = vsub.f32 %v965, %v970
        %v975 = vsub.f32 %v966, %v973
        %v976 = vmul.f32 %v974, 1.442695
        %v977 = vpow.pop %v976
        %v978 = vmul.f32 %v975, 1.442695
        %v979 = vpow.pop %v978
        %v980 = vsel %vm967, %v977, 0.0
        %981 = vadd.xlane.f32.xlu0 %v980
        %v982 = vpop.xlane.xlu0 %981
        %v983 = vsel %vm967, %v979, 0.0
        %984 = vadd.xlane.f32.xlu0 %v983
        %v985 = vpop.xlane.xlu0 %984
        %v986 = vrcp.pop %v982
        %v987 = vrcp.pop %v985
        %v988 = vmul.f32 %v977, %v986
        %v989 = vmul.f32 %v979, %v987
        %990 = vrot.lane.b32.xlu0 %v860, 64
        %v991 = vpop.permute.xlu0 %990
        %992 = vrot.lane.b32.xlu0 %v865, 64
        %v993 = vpop.permute.xlu0 %992
        %v997 = vsel %vm967, %v988, 0
        %v1000 = vsel %vm967, %v989, 0
        %1002 = vmatprep.subr.mxu0 0.0
        %1003 = vmatpush1.msra.mxu0 %v991
        %1004 = vmatprep.subr.mxu0 0.0
        %1005 = vmatpush1.msra.mxu0 %v993
        %1006 = vmatprep.subr.mxu0 0.0
        %1007 = vmatpush1.msra.mxu0 0.0
        %1008 = vmatprep.subr.mxu0 0.0
        %1009 = vmatpush1.msra.mxu0 0.0
        %1010 = vmatprep.subr.mxu0 0.0
        %1011 = vmatpush1.msra.mxu0 0.0
        %1012 = vmatprep.subr.mxu0 0.0
        %1013 = vmatpush1.msra.mxu0 0.0
        %1014 = vmatprep.subr.mxu0 0.0
        %1015 = vmatpush1.msra.mxu0 0.0
        %1016 = vmatprep.subr.mxu0 0.0
        %1017 = vmatpush1.msra.mxu0 0.0
        %1018 = vmatprep.subr.mxu0 0.0
        %1019 = vmatpush1.msra.mxu0 0.0
        %1020 = vmatprep.subr.mxu0 0.0
        %1021 = vmatpush1.msra.mxu0 0.0
        %1022 = vmatprep.subr.mxu0 0.0
        %1023 = vmatpush1.msra.mxu0 0.0
        %1024 = vmatprep.subr.mxu0 0.0
        %1025 = vmatpush1.msra.mxu0 0.0
        %1026 = vmatprep.subr.mxu0 0.0
        %1027 = vmatpush1.msra.mxu0 0.0
        %1028 = vmatprep.subr.mxu0 0.0
        %1029 = vmatpush1.msra.mxu0 0.0
        %1030 = vmatprep.subr.mxu0 0.0
        %1031 = vmatpush1.msra.mxu0 0.0
        %1032 = vmatprep.subr.mxu0 0.0
        %1033 = vmatpush1.msra.mxu0 0.0
        %1034 = vmatprep.subr.mxu0 0.0
        %1035 = vmatpush1.msra.mxu0 0.0
        %1036 = vmatprep.subr.mxu0 0.0
        %1037 = vmatpush1.msra.mxu0 0.0
        %1038 = vmatprep.subr.mxu0 0.0
        %1039 = vmatpush1.msra.mxu0 0.0
        %1040 = vmatprep.subr.mxu0 0.0
        %1041 = vmatpush1.msra.mxu0 0.0
        %1042 = vmatprep.subr.mxu0 0.0
        %1043 = vmatpush1.msra.mxu0 0.0
        %1044 = vmatprep.subr.mxu0 0.0
        %1045 = vmatpush1.msra.mxu0 0.0
        %1046 = vmatprep.subr.mxu0 0.0
        %1047 = vmatpush1.msra.mxu0 0.0
        %1048 = vmatprep.subr.mxu0 0.0
        %1049 = vmatpush1.msra.mxu0 0.0
        %1050 = vmatprep.subr.mxu0 0.0
        %1051 = vmatpush1.msra.mxu0 0.0
        %1052 = vmatprep.subr.mxu0 0.0
        %1053 = vmatpush1.msra.mxu0 0.0
        %1054 = vmatprep.subr.mxu0 0.0
        %1055 = vmatpush1.msra.mxu0 0.0
        %1056 = vmatprep.subr.mxu0 0.0
        %1057 = vmatpush1.msra.mxu0 0.0
        %1058 = vmatprep.subr.mxu0 0.0
        %1059 = vmatpush1.msra.mxu0 0.0
        %1060 = vmatprep.subr.mxu0 0.0
        %1061 = vmatpush1.msra.mxu0 0.0
        %1062 = vmatprep.subr.mxu0 0.0
        %1063 = vmatpush1.msra.mxu0 0.0
        %1064 = vmatprep.subr.mxu0 0.0
        %1065 = vmatpush1.msra.mxu0 0.0
        %1066 = vmatprep.mubr.f32.mxu0 0.0
        %1067 = vmatmul.mubr.f32.gmra.mrb[0].mxu0 %v997
        %v1068 = vpop.f32.mrb[0].mxu0
        %v1069 = vadd.f32 0.0, %v1068
        %v1070 = vpop.f32.mrb[0].mxu0
        %1071 = vmatprep.mubr.f32.mxu0 0.0
        %1072 = vmatmul.mubr.f32.gmra.mrb[0].mxu0 %v1000
        %v1073 = vpop.f32.mrb[0].mxu0
        %v1074 = vadd.f32 0.0, %v1073
        %v1075 = vpop.f32.mrb[0].mxu0
        %1076 = vdwg.mxu0
        %1077 = vrot.lane.b32.xlu0 %v860, 120
        %v1078 = vpop.permute.xlu0 %1077
        %1079 = vrot.lane.b32.xlu0 %v865, 120
        %v1080 = vpop.permute.xlu0 %1079
        %1081 = vrot.lane.b32.xlu0 %v860, 88
        %v1082 = vpop.permute.xlu0 %1081
        %1083 = vrot.lane.b32.xlu0 %v865, 88
        %v1084 = vpop.permute.xlu0 %1083
        %v1085 = vsel %vm879, %v1078, 0
        %v1087 = vsel %vm879, %v1080, 0
        %v1089 = vsel %vm879, %v1082, 0
        %v1091 = vsel %vm879, %v1084, 0
        %1093 = vmatprep.subr.mxu0 0.0
        %1094 = vmatpush1.xpose.msra.mxu0 %v1089
        %1095 = vmatprep.subr.mxu0 0.0
        %1096 = vmatpush1.xpose.msra.mxu0 %v1091
        %1097 = vmatprep.subr.mxu0 0.0
        %1098 = vmatpush1.xpose.msra.mxu0 0.0
        %1099 = vmatprep.subr.mxu0 0.0
        %1100 = vmatpush1.xpose.msra.mxu0 0.0
        %1101 = vmatprep.subr.mxu0 0.0
        %1102 = vmatpush1.xpose.msra.mxu0 0.0
        %1103 = vmatprep.subr.mxu0 0.0
        %1104 = vmatpush1.xpose.msra.mxu0 0.0
        %1105 = vmatprep.subr.mxu0 0.0
        %1106 = vmatpush1.xpose.msra.mxu0 0.0
        %1107 = vmatprep.subr.mxu0 0.0
        %1108 = vmatpush1.xpose.msra.mxu0 0.0
        %1109 = vmatprep.subr.mxu0 0.0
        %1110 = vmatpush1.xpose.msra.mxu0 0.0
        %1111 = vmatprep.subr.mxu0 0.0
        %1112 = vmatpush1.xpose.msra.mxu0 0.0
        %1113 = vmatprep.subr.mxu0 0.0
        %1114 = vmatpush1.xpose.msra.mxu0 0.0
        %1115 = vmatprep.subr.mxu0 0.0
        %1116 = vmatpush1.xpose.msra.mxu0 0.0
        %1117 = vmatprep.subr.mxu0 0.0
        %1118 = vmatpush1.xpose.msra.mxu0 0.0
        %1119 = vmatprep.subr.mxu0 0.0
        %1120 = vmatpush1.xpose.msra.mxu0 0.0
        %1121 = vmatprep.subr.mxu0 0.0
        %1122 = vmatpush1.xpose.msra.mxu0 0.0
        %1123 = vmatprep.subr.mxu0 0.0
        %1124 = vmatpush1.xpose.msra.mxu0 0.0
        %1125 = vmatprep.subr.mxu0 0.0
        %1126 = vmatpush1.xpose.msra.mxu0 0.0
        %1127 = vmatprep.subr.mxu0 0.0
        %1128 = vmatpush1.xpose.msra.mxu0 0.0
        %1129 = vmatprep.subr.mxu0 0.0
        %1130 = vmatpush1.xpose.msra.mxu0 0.0
        %1131 = vmatprep.subr.mxu0 0.0
        %1132 = vmatpush1.xpose.msra.mxu0 0.0
        %1133 = vmatprep.subr.mxu0 0.0
        %1134 = vmatpush1.xpose.msra.mxu0 0.0
        %1135 = vmatprep.subr.mxu0 0.0
        %1136 = vmatpush1.xpose.msra.mxu0 0.0
        %1137 = vmatprep.subr.mxu0 0.0
        %1138 = vmatpush1.xpose.msra.mxu0 0.0
        %1139 = vmatprep.subr.mxu0 0.0
        %1140 = vmatpush1.xpose.msra.mxu0 0.0
        %1141 = vmatprep.subr.mxu0 0.0
        %1142 = vmatpush1.xpose.msra.mxu0 0.0
        %1143 = vmatprep.subr.mxu0 0.0
        %1144 = vmatpush1.xpose.msra.mxu0 0.0
        %1145 = vmatprep.subr.mxu0 0.0
        %1146 = vmatpush1.xpose.msra.mxu0 0.0
        %1147 = vmatprep.subr.mxu0 0.0
        %1148 = vmatpush1.xpose.msra.mxu0 0.0
        %1149 = vmatprep.subr.mxu0 0.0
        %1150 = vmatpush1.xpose.msra.mxu0 0.0
        %1151 = vmatprep.subr.mxu0 0.0
        %1152 = vmatpush1.xpose.msra.mxu0 0.0
        %1153 = vmatprep.subr.mxu0 0.0
        %1154 = vmatpush1.xpose.msra.mxu0 0.0
        %1155 = vmatprep.subr.mxu0 0.0
        %1156 = vmatpush1.xpose.msra.mxu0 0.0
        %1157 = vmatprep.mubr.f32.mxu0 0.0
        %1158 = vmatmul.mubr.f32.gmra.mrb[0].mxu0 %v1085
        %v1159 = vpop.f32.mrb[0].mxu0
        %v1160 = vadd.f32 0.0, %v1159
        %v1161 = vpop.f32.mrb[0].mxu0
        %1162 = vmatprep.mubr.f32.mxu0 0.0
        %1163 = vmatmul.mubr.f32.gmra.mrb[0].mxu0 %v1087
        %v1164 = vpop.f32.mrb[0].mxu0
        %v1165 = vadd.f32 0.0, %v1164
        %v1166 = vpop.f32.mrb[0].mxu0
        %1167 = vdwg.mxu0
        %v1168 = vmul.f32 %v1160, 0.35355338
        %v1169 = vmul.f32 %v1165, 0.35355338
        %v1170 = vadd.f32 %v1168, %v729
        %v1171 = vadd.f32 %v1169, %v730
        %v1172 = vsel %vm967, %v1170, -inf
        %1173 = vmax.xlane.f32.xlu0 %v1172
        %v1174 = vpop.xlane.xlu0 %1173
        %v1175 = vsel %vm967, %v1171, -inf
        %1176 = vmax.xlane.f32.xlu0 %v1175
        %v1177 = vpop.xlane.xlu0 %1176
        %v1178 = vsub.f32 %v1170, %v1174
        %v1179 = vsub.f32 %v1171, %v1177
        %v1180 = vmul.f32 %v1178, 1.442695
        %v1181 = vpow.pop %v1180
        %v1182 = vmul.f32 %v1179, 1.442695
        %v1183 = vpow.pop %v1182
        %v1184 = vsel %vm967, %v1181, 0.0
        %1185 = vadd.xlane.f32.xlu0 %v1184
        %v1186 = vpop.xlane.xlu0 %1185
        %v1187 = vsel %vm967, %v1183, 0.0
        %1188 = vadd.xlane.f32.xlu0 %v1187
        %v1189 = vpop.xlane.xlu0 %1188
        %v1190 = vrcp.pop %v1186
        %v1191 = vrcp.pop %v1189
        %v1192 = vmul.f32 %v1181, %v1190
        %v1193 = vmul.f32 %v1183, %v1191
        %1194 = vrot.lane.b32.xlu0 %v860, 56
        %v1195 = vpop.permute.xlu0 %1194
        %1196 = vrot.lane.b32.xlu0 %v865, 56
        %v1197 = vpop.permute.xlu0 %1196
        %v1201 = vsel %vm967, %v1192, 0
        %v1204 = vsel %vm967, %v1193, 0
        %1206 = vmatprep.subr.mxu0 0.0
        %1207 = vmatpush1.msra.mxu0 %v1195
        %1208 = vmatprep.subr.mxu0 0.0
        %1209 = vmatpush1.msra.mxu0 %v1197
        %1210 = vmatprep.subr.mxu0 0.0
        %1211 = vmatpush1.msra.mxu0 0.0
        %1212 = vmatprep.subr.mxu0 0.0
        %1213 = vmatpush1.msra.mxu0 0.0
        %1214 = vmatprep.subr.mxu0 0.0
        %1215 = vmatpush1.msra.mxu0 0.0
        %1216 = vmatprep.subr.mxu0 0.0
        %1217 = vmatpush1.msra.mxu0 0.0
        %1218 = vmatprep.subr.mxu0 0.0
        %1219 = vmatpush1.msra.mxu0 0.0
        %1220 = vmatprep.subr.mxu0 0.0
        %1221 = vmatpush1.msra.mxu0 0.0
        %1222 = vmatprep.subr.mxu0 0.0
        %1223 = vmatpush1.msra.mxu0 0.0
        %1224 = vmatprep.subr.mxu0 0.0
        %1225 = vmatpush1.msra.mxu0 0.0
        %1226 = vmatprep.subr.mxu0 0.0
        %1227 = vmatpush1.msra.mxu0 0.0
        %1228 = vmatprep.subr.mxu0 0.0
        %1229 = vmatpush1.msra.mxu0 0.0
        %1230 = vmatprep.subr.mxu0 0.0
        %1231 = vmatpush1.msra.mxu0 0.0
        %1232 = vmatprep.subr.mxu0 0.0
        %1233 = vmatpush1.msra.mxu0 0.0
        %1234 = vmatprep.subr.mxu0 0.0
        %1235 = vmatpush1.msra.mxu0 0.0
        %1236 = vmatprep.subr.mxu0 0.0
        %1237 = vmatpush1.msra.mxu0 0.0
        %1238 = vmatprep.subr.mxu0 0.0
        %1239 = vmatpush1.msra.mxu0 0.0
        %1240 = vmatprep.subr.mxu0 0.0
        %1241 = vmatpush1.msra.mxu0 0.0
        %1242 = vmatprep.subr.mxu0 0.0
        %1243 = vmatpush1.msra.mxu0 0.0
        %1244 = vmatprep.subr.mxu0 0.0
        %1245 = vmatpush1.msra.mxu0 0.0
        %1246 = vmatprep.subr.mxu0 0.0
        %1247 = vmatpush1.msra.mxu0 0.0
        %1248 = vmatprep.subr.mxu0 0.0
        %1249 = vmatpush1.msra.mxu0 0.0
        %1250 = vmatprep.subr.mxu0 0.0
        %1251 = vmatpush1.msra.mxu0 0.0
        %1252 = vmatprep.subr.mxu0 0.0
        %1253 = vmatpush1.msra.mxu0 0.0
        %1254 = vmatprep.subr.mxu0 0.0
        %1255 = vmatpush1.msra.mxu0 0.0
        %1256 = vmatprep.subr.mxu0 0.0
        %1257 = vmatpush1.msra.mxu0 0.0
        %1258 = vmatprep.subr.mxu0 0.0
        %1259 = vmatpush1.msra.mxu0 0.0
        %1260 = vmatprep.subr.mxu0 0.0
        %1261 = vmatpush1.msra.mxu0 0.0
        %1262 = vmatprep.subr.mxu0 0.0
        %1263 = vmatpush1.msra.mxu0 0.0
        %1264 = vmatprep.subr.mxu0 0.0
        %1265 = vmatpush1.msra.mxu0 0.0
        %1266 = vmatprep.subr.mxu0 0.0
        %1267 = vmatpush1.msra.mxu0 0.0
        %1268 = vmatprep.subr.mxu0 0.0
        %1269 = vmatpush1.msra.mxu0 0.0
        %1270 = vmatprep.mubr.f32.mxu0 0.0
        %1271 = vmatmul.mubr.f32.gmra.mrb[0].mxu0 %v1201
        %v1272 = vpop.f32.mrb[0].mxu0
        %v1273 = vadd.f32 0.0, %v1272
        %v1274 = vpop.f32.mrb[0].mxu0
        %1275 = vmatprep.mubr.f32.mxu0 0.0
        %1276 = vmatmul.mubr.f32.gmra.mrb[0].mxu0 %v1204
        %v1277 = vpop.f32.mrb[0].mxu0
        %v1278 = vadd.f32 0.0, %v1277
        %v1279 = vpop.f32.mrb[0].mxu0
        %1280 = vdwg.mxu0
        %1285 = vrot.lane.b32.xlu0 %v868, 120
        %v1286 = vpop.permute.xlu0 %1285
        %1287 = vrot.lane.b32.xlu0 %v869, 120
        %v1288 = vpop.permute.xlu0 %1287
        %1289 = vrot.lane.b32.xlu0 %v870, 120
        %v1290 = vpop.permute.xlu0 %1289
        %1291 = vrot.lane.b32.xlu0 %v871, 120
        %v1292 = vpop.permute.xlu0 %1291
        %v1294 = vsel %vm879, %v1273, 0
        %v1297 = vsel %vm879, %v1278, 0
        %v1299 = vsel %vm879, %v1286, 0
        %v1301 = vsel %vm879, %v1288, 0
        %v1303 = vsel %vm879, %v1290, 0
        %v1305 = vsel %vm879, %v1292, 0
        %1307 = vmatprep.subr.mxu0 0.0
        %1308 = vmatpush1.xpose.msra.mxu0 %v1299
        %1309 = vmatprep.subr.mxu0 0.0
        %1310 = vmatpush1.xpose.msra.mxu0 %v1301
        %1311 = vmatprep.subr.mxu0 0.0
        %1312 = vmatpush1.xpose.msra.mxu0 %v1303
        %1313 = vmatprep.subr.mxu0 0.0
        %1314 = vmatpush1.xpose.msra.mxu0 %v1305
        %1315 = vmatprep.subr.mxu0 0.0
        %1316 = vmatpush1.xpose.msra.mxu0 0.0
        %1317 = vmatprep.subr.mxu0 0.0
        %1318 = vmatpush1.xpose.msra.mxu0 0.0
        %1319 = vmatprep.subr.mxu0 0.0
        %1320 = vmatpush1.xpose.msra.mxu0 0.0
        %1321 = vmatprep.subr.mxu0 0.0
        %1322 = vmatpush1.xpose.msra.mxu0 0.0
        %1323 = vmatprep.subr.mxu0 0.0
        %1324 = vmatpush1.xpose.msra.mxu0 0.0
        %1325 = vmatprep.subr.mxu0 0.0
        %1326 = vmatpush1.xpose.msra.mxu0 0.0
        %1327 = vmatprep.subr.mxu0 0.0
        %1328 = vmatpush1.xpose.msra.mxu0 0.0
        %1329 = vmatprep.subr.mxu0 0.0
        %1330 = vmatpush1.xpose.msra.mxu0 0.0
        %1331 = vmatprep.subr.mxu0 0.0
        %1332 = vmatpush1.xpose.msra.mxu0 0.0
        %1333 = vmatprep.subr.mxu0 0.0
        %1334 = vmatpush1.xpose.msra.mxu0 0.0
        %1335 = vmatprep.subr.mxu0 0.0
        %1336 = vmatpush1.xpose.msra.mxu0 0.0
        %1337 = vmatprep.subr.mxu0 0.0
        %1338 = vmatpush1.xpose.msra.mxu0 0.0
        %1339 = vmatprep.subr.mxu0 0.0
        %1340 = vmatpush1.xpose.msra.mxu0 0.0
        %1341 = vmatprep.subr.mxu0 0.0
        %1342 = vmatpush1.xpose.msra.mxu0 0.0
        %1343 = vmatprep.subr.mxu0 0.0
        %1344 = vmatpush1.xpose.msra.mxu0 0.0
        %1345 = vmatprep.subr.mxu0 0.0
        %1346 = vmatpush1.xpose.msra.mxu0 0.0
        %1347 = vmatprep.subr.mxu0 0.0
        %1348 = vmatpush1.xpose.msra.mxu0 0.0
        %1349 = vmatprep.subr.mxu0 0.0
        %1350 = vmatpush1.xpose.msra.mxu0 0.0
        %1351 = vmatprep.subr.mxu0 0.0
        %1352 = vmatpush1.xpose.msra.mxu0 0.0
        %1353 = vmatprep.subr.mxu0 0.0
        %1354 = vmatpush1.xpose.msra.mxu0 0.0
        %1355 = vmatprep.subr.mxu0 0.0
        %1356 = vmatpush1.xpose.msra.mxu0 0.0
        %1357 = vmatprep.subr.mxu0 0.0
        %1358 = vmatpush1.xpose.msra.mxu0 0.0
        %1359 = vmatprep.subr.mxu0 0.0
        %1360 = vmatpush1.xpose.msra.mxu0 0.0
        %1361 = vmatprep.subr.mxu0 0.0
        %1362 = vmatpush1.xpose.msra.mxu0 0.0
        %1363 = vmatprep.subr.mxu0 0.0
        %1364 = vmatpush1.xpose.msra.mxu0 0.0
        %1365 = vmatprep.subr.mxu0 0.0
        %1366 = vmatpush1.xpose.msra.mxu0 0.0
        %1367 = vmatprep.subr.mxu0 0.0
        %1368 = vmatpush1.xpose.msra.mxu0 0.0
        %1369 = vmatprep.subr.mxu0 0.0
        %1370 = vmatpush1.xpose.msra.mxu0 0.0
        %1371 = vmatprep.mubr.f32.mxu0 0.0
        %1372 = vmatmul.mubr.f32.gmra.mrb[0].mxu0 %v1294
        %v1373 = vpop.f32.mrb[0].mxu0
        %v1374 = vadd.f32 0.0, %v1373
        %v1375 = vpop.f32.mrb[0].mxu0
        %1376 = vmatprep.mubr.f32.mxu0 0.0
        %1377 = vmatmul.mubr.f32.gmra.mrb[0].mxu0 %v1297
        %v1378 = vpop.f32.mrb[0].mxu0
        %v1379 = vadd.f32 0.0, %v1378
        %v1380 = vpop.f32.mrb[0].mxu0
        %1381 = vdwg.mxu0
        %v1383 = vsel %vm879, %v1069, 0
        %v1386 = vsel %vm879, %v1074, 0
        %v1388 = vsel %vm879, %v868, 0
        %v1390 = vsel %vm879, %v869, 0
        %v1392 = vsel %vm879, %v870, 0
        %v1394 = vsel %vm879, %v871, 0
        %1396 = vmatprep.subr.mxu0 0.0
        %1397 = vmatpush1.xpose.msra.mxu0 %v1388
        %1398 = vmatprep.subr.mxu0 0.0
        %1399 = vmatpush1.xpose.msra.mxu0 %v1390
        %1400 = vmatprep.subr.mxu0 0.0
        %1401 = vmatpush1.xpose.msra.mxu0 %v1392
        %1402 = vmatprep.subr.mxu0 0.0
        %1403 = vmatpush1.xpose.msra.mxu0 %v1394
        %1404 = vmatprep.subr.mxu0 0.0
        %1405 = vmatpush1.xpose.msra.mxu0 0.0
        %1406 = vmatprep.subr.mxu0 0.0
        %1407 = vmatpush1.xpose.msra.mxu0 0.0
        %1408 = vmatprep.subr.mxu0 0.0
        %1409 = vmatpush1.xpose.msra.mxu0 0.0
        %1410 = vmatprep.subr.mxu0 0.0
        %1411 = vmatpush1.xpose.msra.mxu0 0.0
        %1412 = vmatprep.subr.mxu0 0.0
        %1413 = vmatpush1.xpose.msra.mxu0 0.0
        %1414 = vmatprep.subr.mxu0 0.0
        %1415 = vmatpush1.xpose.msra.mxu0 0.0
        %1416 = vmatprep.subr.mxu0 0.0
        %1417 = vmatpush1.xpose.msra.mxu0 0.0
        %1418 = vmatprep.subr.mxu0 0.0
        %1419 = vmatpush1.xpose.msra.mxu0 0.0
        %1420 = vmatprep.subr.mxu0 0.0
        %1421 = vmatpush1.xpose.msra.mxu0 0.0
        %1422 = vmatprep.subr.mxu0 0.0
        %1423 = vmatpush1.xpose.msra.mxu0 0.0
        %1424 = vmatprep.subr.mxu0 0.0
        %1425 = vmatpush1.xpose.msra.mxu0 0.0
        %1426 = vmatprep.subr.mxu0 0.0
        %1427 = vmatpush1.xpose.msra.mxu0 0.0
        %1428 = vmatprep.subr.mxu0 0.0
        %1429 = vmatpush1.xpose.msra.mxu0 0.0
        %1430 = vmatprep.subr.mxu0 0.0
        %1431 = vmatpush1.xpose.msra.mxu0 0.0
        %1432 = vmatprep.subr.mxu0 0.0
        %1433 = vmatpush1.xpose.msra.mxu0 0.0
        %1434 = vmatprep.subr.mxu0 0.0
        %1435 = vmatpush1.xpose.msra.mxu0 0.0
        %1436 = vmatprep.subr.mxu0 0.0
        %1437 = vmatpush1.xpose.msra.mxu0 0.0
        %1438 = vmatprep.subr.mxu0 0.0
        %1439 = vmatpush1.xpose.msra.mxu0 0.0
        %1440 = vmatprep.subr.mxu0 0.0
        %1441 = vmatpush1.xpose.msra.mxu0 0.0
        %1442 = vmatprep.subr.mxu0 0.0
        %1443 = vmatpush1.xpose.msra.mxu0 0.0
        %1444 = vmatprep.subr.mxu0 0.0
        %1445 = vmatpush1.xpose.msra.mxu0 0.0
        %1446 = vmatprep.subr.mxu0 0.0
        %1447 = vmatpush1.xpose.msra.mxu0 0.0
        %1448 = vmatprep.subr.mxu0 0.0
        %1449 = vmatpush1.xpose.msra.mxu0 0.0
        %1450 = vmatprep.subr.mxu0 0.0
        %1451 = vmatpush1.xpose.msra.mxu0 0.0
        %1452 = vmatprep.subr.mxu0 0.0
        %1453 = vmatpush1.xpose.msra.mxu0 0.0
        %1454 = vmatprep.subr.mxu0 0.0
        %1455 = vmatpush1.xpose.msra.mxu0 0.0
        %1456 = vmatprep.subr.mxu0 0.0
        %1457 = vmatpush1.xpose.msra.mxu0 0.0
        %1458 = vmatprep.subr.mxu0 0.0
        %1459 = vmatpush1.xpose.msra.mxu0 0.0
        %1460 = vmatprep.mubr.f32.mxu0 0.0
        %1461 = vmatmul.mubr.f32.gmra.mrb[0].mxu0 %v1383
        %v1462 = vpop.f32.mrb[0].mxu0
        %v1463 = vadd.f32 %v1374, %v1462
        %v1464 = vpop.f32.mrb[0].mxu0
        %1465 = vmatprep.mubr.f32.mxu0 0.0
        %1466 = vmatmul.mubr.f32.gmra.mrb[0].mxu0 %v1386
        %v1467 = vpop.f32.mrb[0].mxu0
        %v1468 = vadd.f32 %v1379, %v1467
        %v1469 = vpop.f32.mrb[0].mxu0
        %1470 = vdwg.mxu0
        %1471 = vrot.lane.b32.xlu0 %v860, 112
        %v1472 = vpop.permute.xlu0 %1471
        %1473 = vrot.lane.b32.xlu0 %v865, 112
        %v1474 = vpop.permute.xlu0 %1473
        %1475 = vrot.lane.b32.xlu0 %v860, 80
        %v1476 = vpop.permute.xlu0 %1475
        %1477 = vrot.lane.b32.xlu0 %v865, 80
        %v1478 = vpop.permute.xlu0 %1477
        %v1479 = vsel %vm879, %v1472, 0
        %v1481 = vsel %vm879, %v1474, 0
        %v1483 = vsel %vm879, %v1476, 0
        %v1485 = vsel %vm879, %v1478, 0
        %1487 = vmatprep.subr.mxu0 0.0
        %1488 = vmatpush1.xpose.msra.mxu0 %v1483
        %1489 = vmatprep.subr.mxu0 0.0
        %1490 = vmatpush1.xpose.msra.mxu0 %v1485
        %1491 = vmatprep.subr.mxu0 0.0
        %1492 = vmatpush1.xpose.msra.mxu0 0.0
        %1493 = vmatprep.subr.mxu0 0.0
        %1494 = vmatpush1.xpose.msra.mxu0 0.0
        %1495 = vmatprep.subr.mxu0 0.0
        %1496 = vmatpush1.xpose.msra.mxu0 0.0
        %1497 = vmatprep.subr.mxu0 0.0
        %1498 = vmatpush1.xpose.msra.mxu0 0.0
        %1499 = vmatprep.subr.mxu0 0.0
        %1500 = vmatpush1.xpose.msra.mxu0 0.0
        %1501 = vmatprep.subr.mxu0 0.0
        %1502 = vmatpush1.xpose.msra.mxu0 0.0
        %1503 = vmatprep.subr.mxu0 0.0
        %1504 = vmatpush1.xpose.msra.mxu0 0.0
        %1505 = vmatprep.subr.mxu0 0.0
        %1506 = vmatpush1.xpose.msra.mxu0 0.0
        %1507 = vmatprep.subr.mxu0 0.0
        %1508 = vmatpush1.xpose.msra.mxu0 0.0
        %1509 = vmatprep.subr.mxu0 0.0
        %1510 = vmatpush1.xpose.msra.mxu0 0.0
        %1511 = vmatprep.subr.mxu0 0.0
        %1512 = vmatpush1.xpose.msra.mxu0 0.0
        %1513 = vmatprep.subr.mxu0 0.0
        %1514 = vmatpush1.xpose.msra.mxu0 0.0
        %1515 = vmatprep.subr.mxu0 0.0
        %1516 = vmatpush1.xpose.msra.mxu0 0.0
        %1517 = vmatprep.subr.mxu0 0.0
        %1518 = vmatpush1.xpose.msra.mxu0 0.0
        %1519 = vmatprep.subr.mxu0 0.0
        %1520 = vmatpush1.xpose.msra.mxu0 0.0
        %1521 = vmatprep.subr.mxu0 0.0
        %1522 = vmatpush1.xpose.msra.mxu0 0.0
        %1523 = vmatprep.subr.mxu0 0.0
        %1524 = vmatpush1.xpose.msra.mxu0 0.0
        %1525 = vmatprep.subr.mxu0 0.0
        %1526 = vmatpush1.xpose.msra.mxu0 0.0
        %1527 = vmatprep.subr.mxu0 0.0
        %1528 = vmatpush1.xpose.msra.mxu0 0.0
        %1529 = vmatprep.subr.mxu0 0.0
        %1530 = vmatpush1.xpose.msra.mxu0 0.0
        %1531 = vmatprep.subr.mxu0 0.0
        %1532 = vmatpush1.xpose.msra.mxu0 0.0
        %1533 = vmatprep.subr.mxu0 0.0
        %1534 = vmatpush1.xpose.msra.mxu0 0.0
        %1535 = vmatprep.subr.mxu0 0.0
        %1536 = vmatpush1.xpose.msra.mxu0 0.0
        %1537 = vmatprep.subr.mxu0 0.0
        %1538 = vmatpush1.xpose.msra.mxu0 0.0
        %1539 = vmatprep.subr.mxu0 0.0
        %1540 = vmatpush1.xpose.msra.mxu0 0.0
        %1541 = vmatprep.subr.mxu0 0.0
        %1542 = vmatpush1.xpose.msra.mxu0 0.0
        %1543 = vmatprep.subr.mxu0 0.0
        %1544 = vmatpush1.xpose.msra.mxu0 0.0
        %1545 = vmatprep.subr.mxu0 0.0
        %1546 = vmatpush1.xpose.msra.mxu0 0.0
        %1547 = vmatprep.subr.mxu0 0.0
        %1548 = vmatpush1.xpose.msra.mxu0 0.0
        %1549 = vmatprep.subr.mxu0 0.0
        %1550 = vmatpush1.xpose.msra.mxu0 0.0
        %1551 = vmatprep.mubr.f32.mxu0 0.0
        %1552 = vmatmul.mubr.f32.gmra.mrb[0].mxu0 %v1479
        %v1553 = vpop.f32.mrb[0].mxu0
        %v1554 = vadd.f32 0.0, %v1553
        %v1555 = vpop.f32.mrb[0].mxu0
        %1556 = vmatprep.mubr.f32.mxu0 0.0
        %1557 = vmatmul.mubr.f32.gmra.mrb[0].mxu0 %v1481
        %v1558 = vpop.f32.mrb[0].mxu0
        %v1559 = vadd.f32 0.0, %v1558
        %v1560 = vpop.f32.mrb[0].mxu0
        %1561 = vdwg.mxu0
        %v1562 = vmul.f32 %v1554, 0.35355338
        %v1563 = vmul.f32 %v1559, 0.35355338
        %v1564 = vadd.f32 %v1562, %v729
        %v1565 = vadd.f32 %v1563, %v730
        %v1566 = vsel %vm967, %v1564, -inf
        %1567 = vmax.xlane.f32.xlu0 %v1566
        %v1568 = vpop.xlane.xlu0 %1567
        %v1569 = vsel %vm967, %v1565, -inf
        %1570 = vmax.xlane.f32.xlu0 %v1569
        %v1571 = vpop.xlane.xlu0 %1570
        %v1572 = vsub.f32 %v1564, %v1568
        %v1573 = vsub.f32 %v1565, %v1571
        %v1574 = vmul.f32 %v1572, 1.442695
        %v1575 = vpow.pop %v1574
        %v1576 = vmul.f32 %v1573, 1.442695
        %v1577 = vpow.pop %v1576
        %v1578 = vsel %vm967, %v1575, 0.0
        %1579 = vadd.xlane.f32.xlu0 %v1578
        %v1580 = vpop.xlane.xlu0 %1579
        %v1581 = vsel %vm967, %v1577, 0.0
        %1582 = vadd.xlane.f32.xlu0 %v1581
        %v1583 = vpop.xlane.xlu0 %1582
        %v1584 = vrcp.pop %v1580
        %v1585 = vrcp.pop %v1583
        %v1586 = vmul.f32 %v1575, %v1584
        %v1587 = vmul.f32 %v1577, %v1585
        %1588 = vrot.lane.b32.xlu0 %v860, 48
        %v1589 = vpop.permute.xlu0 %1588
        %1590 = vrot.lane.b32.xlu0 %v865, 48
        %v1591 = vpop.permute.xlu0 %1590
        %v1595 = vsel %vm967, %v1586, 0
        %v1598 = vsel %vm967, %v1587, 0
        %1600 = vmatprep.subr.mxu0 0.0
        %1601 = vmatpush1.msra.mxu0 %v1589
        %1602 = vmatprep.subr.mxu0 0.0
        %1603 = vmatpush1.msra.mxu0 %v1591
        %1604 = vmatprep.subr.mxu0 0.0
        %1605 = vmatpush1.msra.mxu0 0.0
        %1606 = vmatprep.subr.mxu0 0.0
        %1607 = vmatpush1.msra.mxu0 0.0
        %1608 = vmatprep.subr.mxu0 0.0
        %1609 = vmatpush1.msra.mxu0 0.0
        %1610 = vmatprep.subr.mxu0 0.0
        %1611 = vmatpush1.msra.mxu0 0.0
        %1612 = vmatprep.subr.mxu0 0.0
        %1613 = vmatpush1.msra.mxu0 0.0
        %1614 = vmatprep.subr.mxu0 0.0
        %1615 = vmatpush1.msra.mxu0 0.0
        %1616 = vmatprep.subr.mxu0 0.0
        %1617 = vmatpush1.msra.mxu0 0.0
        %1618 = vmatprep.subr.mxu0 0.0
        %1619 = vmatpush1.msra.mxu0 0.0
        %1620 = vmatprep.subr.mxu0 0.0
        %1621 = vmatpush1.msra.mxu0 0.0
        %1622 = vmatprep.subr.mxu0 0.0
        %1623 = vmatpush1.msra.mxu0 0.0
        %1624 = vmatprep.subr.mxu0 0.0
        %1625 = vmatpush1.msra.mxu0 0.0
        %1626 = vmatprep.subr.mxu0 0.0
        %1627 = vmatpush1.msra.mxu0 0.0
        %1628 = vmatprep.subr.mxu0 0.0
        %1629 = vmatpush1.msra.mxu0 0.0
        %1630 = vmatprep.subr.mxu0 0.0
        %1631 = vmatpush1.msra.mxu0 0.0
        %1632 = vmatprep.subr.mxu0 0.0
        %1633 = vmatpush1.msra.mxu0 0.0
        %1634 = vmatprep.subr.mxu0 0.0
        %1635 = vmatpush1.msra.mxu0 0.0
        %1636 = vmatprep.subr.mxu0 0.0
        %1637 = vmatpush1.msra.mxu0 0.0
        %1638 = vmatprep.subr.mxu0 0.0
        %1639 = vmatpush1.msra.mxu0 0.0
        %1640 = vmatprep.subr.mxu0 0.0
        %1641 = vmatpush1.msra.mxu0 0.0
        %1642 = vmatprep.subr.mxu0 0.0
        %1643 = vmatpush1.msra.mxu0 0.0
        %1644 = vmatprep.subr.mxu0 0.0
        %1645 = vmatpush1.msra.mxu0 0.0
        %1646 = vmatprep.subr.mxu0 0.0
        %1647 = vmatpush1.msra.mxu0 0.0
        %1648 = vmatprep.subr.mxu0 0.0
        %1649 = vmatpush1.msra.mxu0 0.0
        %1650 = vmatprep.subr.mxu0 0.0
        %1651 = vmatpush1.msra.mxu0 0.0
        %1652 = vmatprep.subr.mxu0 0.0
        %1653 = vmatpush1.msra.mxu0 0.0
        %1654 = vmatprep.subr.mxu0 0.0
        %1655 = vmatpush1.msra.mxu0 0.0
        %1656 = vmatprep.subr.mxu0 0.0
        %1657 = vmatpush1.msra.mxu0 0.0
        %1658 = vmatprep.subr.mxu0 0.0
        %1659 = vmatpush1.msra.mxu0 0.0
        %1660 = vmatprep.subr.mxu0 0.0
        %1661 = vmatpush1.msra.mxu0 0.0
        %1662 = vmatprep.subr.mxu0 0.0
        %1663 = vmatpush1.msra.mxu0 0.0
        %1664 = vmatprep.mubr.f32.mxu0 0.0
        %1665 = vmatmul.mubr.f32.gmra.mrb[0].mxu0 %v1595
        %v1666 = vpop.f32.mrb[0].mxu0
        %v1667 = vadd.f32 0.0, %v1666
        %v1668 = vpop.f32.mrb[0].mxu0
        %1669 = vmatprep.mubr.f32.mxu0 0.0
        %1670 = vmatmul.mubr.f32.gmra.mrb[0].mxu0 %v1598
        %v1671 = vpop.f32.mrb[0].mxu0
        %v1672 = vadd.f32 0.0, %v1671
        %v1673 = vpop.f32.mrb[0].mxu0
        %1674 = vdwg.mxu0
        %1675 = vrot.lane.b32.xlu0 %v868, 112
        %v1676 = vpop.permute.xlu0 %1675
        %1677 = vrot.lane.b32.xlu0 %v869, 112
        %v1678 = vpop.permute.xlu0 %1677
        %1679 = vrot.lane.b32.xlu0 %v870, 112
        %v1680 = vpop.permute.xlu0 %1679
        %1681 = vrot.lane.b32.xlu0 %v871, 112
        %v1682 = vpop.permute.xlu0 %1681
        %v1684 = vsel %vm879, %v1667, 0
        %v1687 = vsel %vm879, %v1672, 0
        %v1689 = vsel %vm879, %v1676, 0
        %v1691 = vsel %vm879, %v1678, 0
        %v1693 = vsel %vm879, %v1680, 0
        %v1695 = vsel %vm879, %v1682, 0
        %1697 = vmatprep.subr.mxu0 0.0
        %1698 = vmatpush1.xpose.msra.mxu0 %v1689
        %1699 = vmatprep.subr.mxu0 0.0
        %1700 = vmatpush1.xpose.msra.mxu0 %v1691
        %1701 = vmatprep.subr.mxu0 0.0
        %1702 = vmatpush1.xpose.msra.mxu0 %v1693
        %1703 = vmatprep.subr.mxu0 0.0
        %1704 = vmatpush1.xpose.msra.mxu0 %v1695
        %1705 = vmatprep.subr.mxu0 0.0
        %1706 = vmatpush1.xpose.msra.mxu0 0.0
        %1707 = vmatprep.subr.mxu0 0.0
        %1708 = vmatpush1.xpose.msra.mxu0 0.0
        %1709 = vmatprep.subr.mxu0 0.0
        %1710 = vmatpush1.xpose.msra.mxu0 0.0
        %1711 = vmatprep.subr.mxu0 0.0
        %1712 = vmatpush1.xpose.msra.mxu0 0.0
        %1713 = vmatprep.subr.mxu0 0.0
        %1714 = vmatpush1.xpose.msra.mxu0 0.0
        %1715 = vmatprep.subr.mxu0 0.0
        %1716 = vmatpush1.xpose.msra.mxu0 0.0
        %1717 = vmatprep.subr.mxu0 0.0
        %1718 = vmatpush1.xpose.msra.mxu0 0.0
        %1719 = vmatprep.subr.mxu0 0.0
        %1720 = vmatpush1.xpose.msra.mxu0 0.0
        %1721 = vmatprep.subr.mxu0 0.0
        %1722 = vmatpush1.xpose.msra.mxu0 0.0
        %1723 = vmatprep.subr.mxu0 0.0
        %1724 = vmatpush1.xpose.msra.mxu0 0.0
        %1725 = vmatprep.subr.mxu0 0.0
        %1726 = vmatpush1.xpose.msra.mxu0 0.0
        %1727 = vmatprep.subr.mxu0 0.0
        %1728 = vmatpush1.xpose.msra.mxu0 0.0
        %1729 = vmatprep.subr.mxu0 0.0
        %1730 = vmatpush1.xpose.msra.mxu0 0.0
        %1731 = vmatprep.subr.mxu0 0.0
        %1732 = vmatpush1.xpose.msra.mxu0 0.0
        %1733 = vmatprep.subr.mxu0 0.0
        %1734 = vmatpush1.xpose.msra.mxu0 0.0
        %1735 = vmatprep.subr.mxu0 0.0
        %1736 = vmatpush1.xpose.msra.mxu0 0.0
        %1737 = vmatprep.subr.mxu0 0.0
        %1738 = vmatpush1.xpose.msra.mxu0 0.0
        %1739 = vmatprep.subr.mxu0 0.0
        %1740 = vmatpush1.xpose.msra.mxu0 0.0
        %1741 = vmatprep.subr.mxu0 0.0
        %1742 = vmatpush1.xpose.msra.mxu0 0.0
        %1743 = vmatprep.subr.mxu0 0.0
        %1744 = vmatpush1.xpose.msra.mxu0 0.0
        %1745 = vmatprep.subr.mxu0 0.0
        %1746 = vmatpush1.xpose.msra.mxu0 0.0
        %1747 = vmatprep.subr.mxu0 0.0
        %1748 = vmatpush1.xpose.msra.mxu0 0.0
        %1749 = vmatprep.subr.mxu0 0.0
        %1750 = vmatpush1.xpose.msra.mxu0 0.0
        %1751 = vmatprep.subr.mxu0 0.0
        %1752 = vmatpush1.xpose.msra.mxu0 0.0
        %1753 = vmatprep.subr.mxu0 0.0
        %1754 = vmatpush1.xpose.msra.mxu0 0.0
        %1755 = vmatprep.subr.mxu0 0.0
        %1756 = vmatpush1.xpose.msra.mxu0 0.0
        %1757 = vmatprep.subr.mxu0 0.0
        %1758 = vmatpush1.xpose.msra.mxu0 0.0
        %1759 = vmatprep.subr.mxu0 0.0
        %1760 = vmatpush1.xpose.msra.mxu0 0.0
        %1761 = vmatprep.mubr.f32.mxu0 0.0
        %1762 = vmatmul.mubr.f32.gmra.mrb[0].mxu0 %v1684
        %v1763 = vpop.f32.mrb[0].mxu0
        %v1764 = vadd.f32 0.0, %v1763
        %v1765 = vpop.f32.mrb[0].mxu0
        %1766 = vmatprep.mubr.f32.mxu0 0.0
        %1767 = vmatmul.mubr.f32.gmra.mrb[0].mxu0 %v1687
        %v1768 = vpop.f32.mrb[0].mxu0
        %v1769 = vadd.f32 0.0, %v1768
        %v1770 = vpop.f32.mrb[0].mxu0
        %1771 = vdwg.mxu0
        %v1772 = vadd.f32 %v1463, %v1764
        %v1773 = vadd.f32 %v1468, %v1769
        %1774 = vrot.lane.b32.xlu0 %v860, 104
        %v1775 = vpop.permute.xlu0 %1774
        %1776 = vrot.lane.b32.xlu0 %v865, 104
        %v1777 = vpop.permute.xlu0 %1776
        %1778 = vrot.lane.b32.xlu0 %v860, 72
        %v1779 = vpop.permute.xlu0 %1778
        %1780 = vrot.lane.b32.xlu0 %v865, 72
        %v1781 = vpop.permute.xlu0 %1780
        %v1782 = vsel %vm879, %v1775, 0
        %v1784 = vsel %vm879, %v1777, 0
        %v1786 = vsel %vm879, %v1779, 0
        %v1788 = vsel %vm879, %v1781, 0
        %1790 = vmatprep.subr.mxu0 0.0
        %1791 = vmatpush1.xpose.msra.mxu0 %v1786
        %1792 = vmatprep.subr.mxu0 0.0
        %1793 = vmatpush1.xpose.msra.mxu0 %v1788
        %1794 = vmatprep.subr.mxu0 0.0
        %1795 = vmatpush1.xpose.msra.mxu0 0.0
        %1796 = vmatprep.subr.mxu0 0.0
        %1797 = vmatpush1.xpose.msra.mxu0 0.0
        %1798 = vmatprep.subr.mxu0 0.0
        %1799 = vmatpush1.xpose.msra.mxu0 0.0
        %1800 = vmatprep.subr.mxu0 0.0
        %1801 = vmatpush1.xpose.msra.mxu0 0.0
        %1802 = vmatprep.subr.mxu0 0.0
        %1803 = vmatpush1.xpose.msra.mxu0 0.0
        %1804 = vmatprep.subr.mxu0 0.0
        %1805 = vmatpush1.xpose.msra.mxu0 0.0
        %1806 = vmatprep.subr.mxu0 0.0
        %1807 = vmatpush1.xpose.msra.mxu0 0.0
        %1808 = vmatprep.subr.mxu0 0.0
        %1809 = vmatpush1.xpose.msra.mxu0 0.0
        %1810 = vmatprep.subr.mxu0 0.0
        %1811 = vmatpush1.xpose.msra.mxu0 0.0
        %1812 = vmatprep.subr.mxu0 0.0
        %1813 = vmatpush1.xpose.msra.mxu0 0.0
        %1814 = vmatprep.subr.mxu0 0.0
        %1815 = vmatpush1.xpose.msra.mxu0 0.0
        %1816 = vmatprep.subr.mxu0 0.0
        %1817 = vmatpush1.xpose.msra.mxu0 0.0
        %1818 = vmatprep.subr.mxu0 0.0
        %1819 = vmatpush1.xpose.msra.mxu0 0.0
        %1820 = vmatprep.subr.mxu0 0.0
        %1821 = vmatpush1.xpose.msra.mxu0 0.0
        %1822 = vmatprep.subr.mxu0 0.0
        %1823 = vmatpush1.xpose.msra.mxu0 0.0
        %1824 = vmatprep.subr.mxu0 0.0
        %1825 = vmatpush1.xpose.msra.mxu0 0.0
        %1826 = vmatprep.subr.mxu0 0.0
        %1827 = vmatpush1.xpose.msra.mxu0 0.0
        %1828 = vmatprep.subr.mxu0 0.0
        %1829 = vmatpush1.xpose.msra.mxu0 0.0
        %1830 = vmatprep.subr.mxu0 0.0
        %1831 = vmatpush1.xpose.msra.mxu0 0.0
        %1832 = vmatprep.subr.mxu0 0.0
        %1833 = vmatpush1.xpose.msra.mxu0 0.0
        %1834 = vmatprep.subr.mxu0 0.0
        %1835 = vmatpush1.xpose.msra.mxu0 0.0
        %1836 = vmatprep.subr.mxu0 0.0
        %1837 = vmatpush1.xpose.msra.mxu0 0.0
        %1838 = vmatprep.subr.mxu0 0.0
        %1839 = vmatpush1.xpose.msra.mxu0 0.0
        %1840 = vmatprep.subr.mxu0 0.0
        %1841 = vmatpush1.xpose.msra.mxu0 0.0
        %1842 = vmatprep.subr.mxu0 0.0
        %1843 = vmatpush1.xpose.msra.mxu0 0.0
        %1844 = vmatprep.subr.mxu0 0.0
        %1845 = vmatpush1.xpose.msra.mxu0 0.0
        %1846 = vmatprep.subr.mxu0 0.0
        %1847 = vmatpush1.xpose.msra.mxu0 0.0
        %1848 = vmatprep.subr.mxu0 0.0
        %1849 = vmatpush1.xpose.msra.mxu0 0.0
        %1850 = vmatprep.subr.mxu0 0.0
        %1851 = vmatpush1.xpose.msra.mxu0 0.0
        %1852 = vmatprep.subr.mxu0 0.0
        %1853 = vmatpush1.xpose.msra.mxu0 0.0
        %1854 = vmatprep.mubr.f32.mxu0 0.0
        %1855 = vmatmul.mubr.f32.gmra.mrb[0].mxu0 %v1782
        %v1856 = vpop.f32.mrb[0].mxu0
        %v1857 = vadd.f32 0.0, %v1856
        %v1858 = vpop.f32.mrb[0].mxu0
        %1859 = vmatprep.mubr.f32.mxu0 0.0
        %1860 = vmatmul.mubr.f32.gmra.mrb[0].mxu0 %v1784
        %v1861 = vpop.f32.mrb[0].mxu0
        %v1862 = vadd.f32 0.0, %v1861
        %v1863 = vpop.f32.mrb[0].mxu0
        %1864 = vdwg.mxu0
        %v1865 = vmul.f32 %v1857, 0.35355338
        %v1866 = vmul.f32 %v1862, 0.35355338
        %v1867 = vadd.f32 %v1865, %v729
        %v1868 = vadd.f32 %v1866, %v730
        %v1869 = vsel %vm967, %v1867, -inf
        %1870 = vmax.xlane.f32.xlu0 %v1869
        %v1871 = vpop.xlane.xlu0 %1870
        %v1872 = vsel %vm967, %v1868, -inf
        %1873 = vmax.xlane.f32.xlu0 %v1872
        %v1874 = vpop.xlane.xlu0 %1873
        %v1875 = vsub.f32 %v1867, %v1871
        %v1876 = vsub.f32 %v1868, %v1874
        %v1877 = vmul.f32 %v1875, 1.442695
        %v1878 = vpow.pop %v1877
        %v1879 = vmul.f32 %v1876, 1.442695
        %v1880 = vpow.pop %v1879
        %v1881 = vsel %vm967, %v1878, 0.0
        %1882 = vadd.xlane.f32.xlu0 %v1881
        %v1883 = vpop.xlane.xlu0 %1882
        %v1884 = vsel %vm967, %v1880, 0.0
        %1885 = vadd.xlane.f32.xlu0 %v1884
        %v1886 = vpop.xlane.xlu0 %1885
        %v1887 = vrcp.pop %v1883
        %v1888 = vrcp.pop %v1886
        %v1889 = vmul.f32 %v1878, %v1887
        %v1890 = vmul.f32 %v1880, %v1888
        %1891 = vrot.lane.b32.xlu0 %v860, 40
        %v1892 = vpop.permute.xlu0 %1891
        %1893 = vrot.lane.b32.xlu0 %v865, 40
        %v1894 = vpop.permute.xlu0 %1893
        %v1898 = vsel %vm967, %v1889, 0
        %v1901 = vsel %vm967, %v1890, 0
        %1903 = vmatprep.subr.mxu0 0.0
        %1904 = vmatpush1.msra.mxu0 %v1892
        %1905 = vmatprep.subr.mxu0 0.0
        %1906 = vmatpush1.msra.mxu0 %v1894
        %1907 = vmatprep.subr.mxu0 0.0
        %1908 = vmatpush1.msra.mxu0 0.0
        %1909 = vmatprep.subr.mxu0 0.0
        %1910 = vmatpush1.msra.mxu0 0.0
        %1911 = vmatprep.subr.mxu0 0.0
        %1912 = vmatpush1.msra.mxu0 0.0
        %1913 = vmatprep.subr.mxu0 0.0
        %1914 = vmatpush1.msra.mxu0 0.0
        %1915 = vmatprep.subr.mxu0 0.0
        %1916 = vmatpush1.msra.mxu0 0.0
        %1917 = vmatprep.subr.mxu0 0.0
        %1918 = vmatpush1.msra.mxu0 0.0
        %1919 = vmatprep.subr.mxu0 0.0
        %1920 = vmatpush1.msra.mxu0 0.0
        %1921 = vmatprep.subr.mxu0 0.0
        %1922 = vmatpush1.msra.mxu0 0.0
        %1923 = vmatprep.subr.mxu0 0.0
        %1924 = vmatpush1.msra.mxu0 0.0
        %1925 = vmatprep.subr.mxu0 0.0
        %1926 = vmatpush1.msra.mxu0 0.0
        %1927 = vmatprep.subr.mxu0 0.0
        %1928 = vmatpush1.msra.mxu0 0.0
        %1929 = vmatprep.subr.mxu0 0.0
        %1930 = vmatpush1.msra.mxu0 0.0
        %1931 = vmatprep.subr.mxu0 0.0
        %1932 = vmatpush1.msra.mxu0 0.0
        %1933 = vmatprep.subr.mxu0 0.0
        %1934 = vmatpush1.msra.mxu0 0.0
        %1935 = vmatprep.subr.mxu0 0.0
        %1936 = vmatpush1.msra.mxu0 0.0
        %1937 = vmatprep.subr.mxu0 0.0
        %1938 = vmatpush1.msra.mxu0 0.0
        %1939 = vmatprep.subr.mxu0 0.0
        %1940 = vmatpush1.msra.mxu0 0.0
        %1941 = vmatprep.subr.mxu0 0.0
        %1942 = vmatpush1.msra.mxu0 0.0
        %1943 = vmatprep.subr.mxu0 0.0
        %1944 = vmatpush1.msra.mxu0 0.0
        %1945 = vmatprep.subr.mxu0 0.0
        %1946 = vmatpush1.msra.mxu0 0.0
        %1947 = vmatprep.subr.mxu0 0.0
        %1948 = vmatpush1.msra.mxu0 0.0
        %1949 = vmatprep.subr.mxu0 0.0
        %1950 = vmatpush1.msra.mxu0 0.0
        %1951 = vmatprep.subr.mxu0 0.0
        %1952 = vmatpush1.msra.mxu0 0.0
        %1953 = vmatprep.subr.mxu0 0.0
        %1954 = vmatpush1.msra.mxu0 0.0
        %1955 = vmatprep.subr.mxu0 0.0
        %1956 = vmatpush1.msra.mxu0 0.0
        %1957 = vmatprep.subr.mxu0 0.0
        %1958 = vmatpush1.msra.mxu0 0.0
        %1959 = vmatprep.subr.mxu0 0.0
        %1960 = vmatpush1.msra.mxu0 0.0
        %1961 = vmatprep.subr.mxu0 0.0
        %1962 = vmatpush1.msra.mxu0 0.0
        %1963 = vmatprep.subr.mxu0 0.0
        %1964 = vmatpush1.msra.mxu0 0.0
        %1965 = vmatprep.subr.mxu0 0.0
        %1966 = vmatpush1.msra.mxu0 0.0
        %1967 = vmatprep.mubr.f32.mxu0 0.0
        %1968 = vmatmul.mubr.f32.gmra.mrb[0].mxu0 %v1898
        %v1969 = vpop.f32.mrb[0].mxu0
        %v1970 = vadd.f32 0.0, %v1969
        %v1971 = vpop.f32.mrb[0].mxu0
        %1972 = vmatprep.mubr.f32.mxu0 0.0
        %1973 = vmatmul.mubr.f32.gmra.mrb[0].mxu0 %v1901
        %v1974 = vpop.f32.mrb[0].mxu0
        %v1975 = vadd.f32 0.0, %v1974
        %v1976 = vpop.f32.mrb[0].mxu0
        %1977 = vdwg.mxu0
        %1978 = vrot.lane.b32.xlu0 %v868, 104
        %v1979 = vpop.permute.xlu0 %1978
        %1980 = vrot.lane.b32.xlu0 %v869, 104
        %v1981 = vpop.permute.xlu0 %1980
        %1982 = vrot.lane.b32.xlu0 %v870, 104
        %v1983 = vpop.permute.xlu0 %1982
        %1984 = vrot.lane.b32.xlu0 %v871, 104
        %v1985 = vpop.permute.xlu0 %1984
        %v1987 = vsel %vm879, %v1970, 0
        %v1990 = vsel %vm879, %v1975, 0
        %v1992 = vsel %vm879, %v1979, 0
        %v1994 = vsel %vm879, %v1981, 0
        %v1996 = vsel %vm879, %v1983, 0
        %v1998 = vsel %vm879, %v1985, 0
        %2000 = vmatprep.subr.mxu0 0.0
        %2001 = vmatpush1.xpose.msra.mxu0 %v1992
        %2002 = vmatprep.subr.mxu0 0.0
        %2003 = vmatpush1.xpose.msra.mxu0 %v1994
        %2004 = vmatprep.subr.mxu0 0.0
        %2005 = vmatpush1.xpose.msra.mxu0 %v1996
        %2006 = vmatprep.subr.mxu0 0.0
        %2007 = vmatpush1.xpose.msra.mxu0 %v1998
        %2008 = vmatprep.subr.mxu0 0.0
        %2009 = vmatpush1.xpose.msra.mxu0 0.0
        %2010 = vmatprep.subr.mxu0 0.0
        %2011 = vmatpush1.xpose.msra.mxu0 0.0
        %2012 = vmatprep.subr.mxu0 0.0
        %2013 = vmatpush1.xpose.msra.mxu0 0.0
        %2014 = vmatprep.subr.mxu0 0.0
        %2015 = vmatpush1.xpose.msra.mxu0 0.0
        %2016 = vmatprep.subr.mxu0 0.0
        %2017 = vmatpush1.xpose.msra.mxu0 0.0
        %2018 = vmatprep.subr.mxu0 0.0
        %2019 = vmatpush1.xpose.msra.mxu0 0.0
        %2020 = vmatprep.subr.mxu0 0.0
        %2021 = vmatpush1.xpose.msra.mxu0 0.0
        %2022 = vmatprep.subr.mxu0 0.0
        %2023 = vmatpush1.xpose.msra.mxu0 0.0
        %2024 = vmatprep.subr.mxu0 0.0
        %2025 = vmatpush1.xpose.msra.mxu0 0.0
        %2026 = vmatprep.subr.mxu0 0.0
        %2027 = vmatpush1.xpose.msra.mxu0 0.0
        %2028 = vmatprep.subr.mxu0 0.0
        %2029 = vmatpush1.xpose.msra.mxu0 0.0
        %2030 = vmatprep.subr.mxu0 0.0
        %2031 = vmatpush1.xpose.msra.mxu0 0.0
        %2032 = vmatprep.subr.mxu0 0.0
        %2033 = vmatpush1.xpose.msra.mxu0 0.0
        %2034 = vmatprep.subr.mxu0 0.0
        %2035 = vmatpush1.xpose.msra.mxu0 0.0
        %2036 = vmatprep.subr.mxu0 0.0
        %2037 = vmatpush1.xpose.msra.mxu0 0.0
        %2038 = vmatprep.subr.mxu0 0.0
        %2039 = vmatpush1.xpose.msra.mxu0 0.0
        %2040 = vmatprep.subr.mxu0 0.0
        %2041 = vmatpush1.xpose.msra.mxu0 0.0
        %2042 = vmatprep.subr.mxu0 0.0
        %2043 = vmatpush1.xpose.msra.mxu0 0.0
        %2044 = vmatprep.subr.mxu0 0.0
        %2045 = vmatpush1.xpose.msra.mxu0 0.0
        %2046 = vmatprep.subr.mxu0 0.0
        %2047 = vmatpush1.xpose.msra.mxu0 0.0
        %2048 = vmatprep.subr.mxu0 0.0
        %2049 = vmatpush1.xpose.msra.mxu0 0.0
        %2050 = vmatprep.subr.mxu0 0.0
        %2051 = vmatpush1.xpose.msra.mxu0 0.0
        %2052 = vmatprep.subr.mxu0 0.0
        %2053 = vmatpush1.xpose.msra.mxu0 0.0
        %2054 = vmatprep.subr.mxu0 0.0
        %2055 = vmatpush1.xpose.msra.mxu0 0.0
        %2056 = vmatprep.subr.mxu0 0.0
        %2057 = vmatpush1.xpose.msra.mxu0 0.0
        %2058 = vmatprep.subr.mxu0 0.0
        %2059 = vmatpush1.xpose.msra.mxu0 0.0
        %2060 = vmatprep.subr.mxu0 0.0
        %2061 = vmatpush1.xpose.msra.mxu0 0.0
        %2062 = vmatprep.subr.mxu0 0.0
        %2063 = vmatpush1.xpose.msra.mxu0 0.0
        %2064 = vmatprep.mubr.f32.mxu0 0.0
        %2065 = vmatmul.mubr.f32.gmra.mrb[0].mxu0 %v1987
        %v2066 = vpop.f32.mrb[0].mxu0
        %v2067 = vadd.f32 0.0, %v2066
        %v2068 = vpop.f32.mrb[0].mxu0
        %2069 = vmatprep.mubr.f32.mxu0 0.0
        %2070 = vmatmul.mubr.f32.gmra.mrb[0].mxu0 %v1990
        %v2071 = vpop.f32.mrb[0].mxu0
        %v2072 = vadd.f32 0.0, %v2071
        %v2073 = vpop.f32.mrb[0].mxu0
        %2074 = vdwg.mxu0
        %v2075 = vadd.f32 %v1772, %v2067
        %v2076 = vadd.f32 %v1773, %v2072
        %v2078 = vlaneseq
        %v2079 = vshrl.u32 %v2078, 7
        %v2080 = vsub.s32 0, %v2079
        %v2081 = vrot.slane %v872, %v2080
        %v2083 = vadd.f32 %v2075, %v2081
        %v2084 = vadd.f32 %v2076, %v2081
        %v2085 = vadd.f32 %v720, %v2083
        %v2086 = vadd.f32 %v721, %v2084
        %v2087 = vld [vmem:[%s10] sm:$0x1]
        %v2088 = vld [vmem:[%s11] sm:$0x1]
        %v2089 = vsel %vm750, %v2085, 0.0
        %2090 = vadd.xlane.f32.xlu0 %v2089
        %v2091 = vpop.xlane.xlu0 %2090
        %v2092 = vsel %vm750, %v2086, 0.0
        %2093 = vadd.xlane.f32.xlu0 %v2092
        %v2094 = vpop.xlane.xlu0 %2093
        %v2095 = vrcp.pop 32.0
        %v2096 = vmul.f32 %v2091, %v2095
        %v2097 = vmul.f32 %v2094, %v2095
        %v2098 = vsub.f32 %v2085, %v2096
        %v2099 = vsub.f32 %v2086, %v2097
        %v2100 = vmul.f32 %v2098, %v2098
        %v2101 = vmul.f32 %v2099, %v2099
        %v2102 = vsel %vm750, %v2100, 0.0
        %2103 = vadd.xlane.f32.xlu0 %v2102
        %v2104 = vpop.xlane.xlu0 %2103
        %v2105 = vsel %vm750, %v2101, 0.0
        %2106 = vadd.xlane.f32.xlu0 %v2105
        %v2107 = vpop.xlane.xlu0 %2106
        %v2108 = vmul.f32 %v2104, %v2095
        %v2109 = vmul.f32 %v2107, %v2095
        %v2110 = vadd.f32 %v2108, 1e-05
        %v2111 = vadd.f32 %v2109, 1e-05
        %v2112 = vrsqrt.pop %v2110
        %v2113 = vrsqrt.pop %v2111
        %v2114 = vmul.f32 %v2098, %v2112
        %v2115 = vmul.f32 %v2099, %v2113
        %v2117 = vlaneseq
        %v2118 = vshrl.u32 %v2117, 7
        %v2119 = vsub.s32 0, %v2118
        %v2120 = vrot.slane %v2087, %v2119
        %v2122 = vmul.f32 %v2114, %v2120
        %v2123 = vmul.f32 %v2115, %v2120
        %v2125 = vlaneseq
        %v2126 = vshrl.u32 %v2125, 7
        %v2127 = vsub.s32 0, %v2126
        %v2128 = vrot.slane %v2088, %v2127
        %v2130 = vadd.f32 %v2122, %v2128
        %v2131 = vadd.f32 %v2123, %v2128
        %v2132 = vld [vmem:[%s6] sm:$0xff]
        %v2133 = vld [vmem:[%s6 + $0x8] sm:$0xff]
        %v2134 = vld [vmem:[%s6 + $0x10] sm:$0xff]
        %v2135 = vld [vmem:[%s6 + $0x18] sm:$0xff]
        %v2136 = vld [vmem:[%s6 + $0x20] sm:$0xff]
        %v2137 = vld [vmem:[%s6 + $0x28] sm:$0xff]
        %v2138 = vld [vmem:[%s6 + $0x30] sm:$0xff]
        %v2139 = vld [vmem:[%s6 + $0x38] sm:$0xff]
        %v2140 = vld [vmem:[%s6 + $0x40] sm:$0xff]
        %v2141 = vld [vmem:[%s6 + $0x48] sm:$0xff]
        %v2142 = vld [vmem:[%s6 + $0x50] sm:$0xff]
        %v2143 = vld [vmem:[%s6 + $0x58] sm:$0xff]
        %v2144 = vld [vmem:[%s6 + $0x60] sm:$0xff]
        %v2145 = vld [vmem:[%s6 + $0x68] sm:$0xff]
        %v2146 = vld [vmem:[%s6 + $0x70] sm:$0xff]
        %v2147 = vld [vmem:[%s6 + $0x78] sm:$0xff]
        %v2148 = vld [vmem:[%s7] sm:$0x1]
        %v2150 = vlaneseq
        %v2151 = vshrl.u32 %v2150, 7
        %v2152 = vsub.s32 0, %v2151
        %v2153 = vrot.slane %v2148, %v2152
        %v2156 = vsel %vm750, %v2130, 0
        %v2159 = vsel %vm750, %v2131, 0
        %v2162 = vsel %vm750, %v2132, 0
        %v2165 = vsel %vm750, %v2133, 0
        %v2168 = vsel %vm750, %v2134, 0
        %v2171 = vsel %vm750, %v2135, 0
        %v2174 = vsel %vm750, %v2136, 0
        %v2177 = vsel %vm750, %v2137, 0
        %v2180 = vsel %vm750, %v2138, 0
        %v2183 = vsel %vm750, %v2139, 0
        %v2186 = vsel %vm750, %v2140, 0
        %v2189 = vsel %vm750, %v2141, 0
        %v2192 = vsel %vm750, %v2142, 0
        %v2195 = vsel %vm750, %v2143, 0
        %v2198 = vsel %vm750, %v2144, 0
        %v2201 = vsel %vm750, %v2145, 0
        %v2204 = vsel %vm750, %v2146, 0
        %v2207 = vsel %vm750, %v2147, 0
        %2209 = vmatprep.subr.mxu0 0.0
        %2210 = vmatpush1.xpose.msra.mxu0 %v2162
        %2211 = vmatprep.subr.mxu0 0.0
        %2212 = vmatpush1.xpose.msra.mxu0 %v2165
        %2213 = vmatprep.subr.mxu0 0.0
        %2214 = vmatpush1.xpose.msra.mxu0 %v2168
        %2215 = vmatprep.subr.mxu0 0.0
        %2216 = vmatpush1.xpose.msra.mxu0 %v2171
        %2217 = vmatprep.subr.mxu0 0.0
        %2218 = vmatpush1.xpose.msra.mxu0 %v2174
        %2219 = vmatprep.subr.mxu0 0.0
        %2220 = vmatpush1.xpose.msra.mxu0 %v2177
        %2221 = vmatprep.subr.mxu0 0.0
        %2222 = vmatpush1.xpose.msra.mxu0 %v2180
        %2223 = vmatprep.subr.mxu0 0.0
        %2224 = vmatpush1.xpose.msra.mxu0 %v2183
        %2225 = vmatprep.subr.mxu0 0.0
        %2226 = vmatpush1.xpose.msra.mxu0 %v2186
        %2227 = vmatprep.subr.mxu0 0.0
        %2228 = vmatpush1.xpose.msra.mxu0 %v2189
        %2229 = vmatprep.subr.mxu0 0.0
        %2230 = vmatpush1.xpose.msra.mxu0 %v2192
        %2231 = vmatprep.subr.mxu0 0.0
        %2232 = vmatpush1.xpose.msra.mxu0 %v2195
        %2233 = vmatprep.subr.mxu0 0.0
        %2234 = vmatpush1.xpose.msra.mxu0 %v2198
        %2235 = vmatprep.subr.mxu0 0.0
        %2236 = vmatpush1.xpose.msra.mxu0 %v2201
        %2237 = vmatprep.subr.mxu0 0.0
        %2238 = vmatpush1.xpose.msra.mxu0 %v2204
        %2239 = vmatprep.subr.mxu0 0.0
        %2240 = vmatpush1.xpose.msra.mxu0 %v2207
        %2241 = vmatprep.subr.mxu0 0.0
        %2242 = vmatpush1.xpose.msra.mxu0 0.0
        %2243 = vmatprep.subr.mxu0 0.0
        %2244 = vmatpush1.xpose.msra.mxu0 0.0
        %2245 = vmatprep.subr.mxu0 0.0
        %2246 = vmatpush1.xpose.msra.mxu0 0.0
        %2247 = vmatprep.subr.mxu0 0.0
        %2248 = vmatpush1.xpose.msra.mxu0 0.0
        %2249 = vmatprep.subr.mxu0 0.0
        %2250 = vmatpush1.xpose.msra.mxu0 0.0
        %2251 = vmatprep.subr.mxu0 0.0
        %2252 = vmatpush1.xpose.msra.mxu0 0.0
        %2253 = vmatprep.subr.mxu0 0.0
        %2254 = vmatpush1.xpose.msra.mxu0 0.0
        %2255 = vmatprep.subr.mxu0 0.0
        %2256 = vmatpush1.xpose.msra.mxu0 0.0
        %2257 = vmatprep.subr.mxu0 0.0
        %2258 = vmatpush1.xpose.msra.mxu0 0.0
        %2259 = vmatprep.subr.mxu0 0.0
        %2260 = vmatpush1.xpose.msra.mxu0 0.0
        %2261 = vmatprep.subr.mxu0 0.0
        %2262 = vmatpush1.xpose.msra.mxu0 0.0
        %2263 = vmatprep.subr.mxu0 0.0
        %2264 = vmatpush1.xpose.msra.mxu0 0.0
        %2265 = vmatprep.subr.mxu0 0.0
        %2266 = vmatpush1.xpose.msra.mxu0 0.0
        %2267 = vmatprep.subr.mxu0 0.0
        %2268 = vmatpush1.xpose.msra.mxu0 0.0
        %2269 = vmatprep.subr.mxu0 0.0
        %2270 = vmatpush1.xpose.msra.mxu0 0.0
        %2271 = vmatprep.subr.mxu0 0.0
        %2272 = vmatpush1.xpose.msra.mxu0 0.0
        %2273 = vmatprep.mubr.f32.mxu0 0.0
        %2274 = vmatmul.mubr.f32.gmra.mrb[0].mxu0 %v2156
        %v2275 = vpop.f32.mrb[0].mxu0
        %v2276 = vadd.f32 %v2153, %v2275
        %v2277 = vpop.f32.mrb[0].mxu0
        %2278 = vmatprep.mubr.f32.mxu0 0.0
        %2279 = vmatmul.mubr.f32.gmra.mrb[0].mxu0 %v2159
        %v2280 = vpop.f32.mrb[0].mxu0
        %v2281 = vadd.f32 %v2153, %v2280
        %v2282 = vpop.f32.mrb[0].mxu0
        %2283 = vdwg.mxu0
        %v2284 = vmax.f32 %v2276, 0.0
        %v2285 = vmax.f32 %v2281, 0.0
        %v2286 = vld [vmem:[%s8] sm:$0xff]
        %v2287 = vld [vmem:[%s8 + $0x8] sm:$0xff]
        %v2288 = vld [vmem:[%s8 + $0x10] sm:$0xff]
        %v2289 = vld [vmem:[%s8 + $0x18] sm:$0xff]
        %v2290 = vld [vmem:[%s9] sm:$0x1]
        %v2292 = vlaneseq
        %v2293 = vshrl.u32 %v2292, 7
        %v2294 = vsub.s32 0, %v2293
        %v2295 = vrot.slane %v2290, %v2294
        %2297 = vmatprep.subr.mxu0 0.0
        %2298 = vmatpush1.xpose.msra.mxu0 %v2286
        %2299 = vmatprep.subr.mxu0 0.0
        %2300 = vmatpush1.xpose.msra.mxu0 %v2287
        %2301 = vmatprep.subr.mxu0 0.0
        %2302 = vmatpush1.xpose.msra.mxu0 %v2288
        %2303 = vmatprep.subr.mxu0 0.0
        %2304 = vmatpush1.xpose.msra.mxu0 %v2289
        %2305 = vmatprep.subr.mxu0 0.0
        %2306 = vmatpush1.xpose.msra.mxu0 0.0
        %2307 = vmatprep.subr.mxu0 0.0
        %2308 = vmatpush1.xpose.msra.mxu0 0.0
        %2309 = vmatprep.subr.mxu0 0.0
        %2310 = vmatpush1.xpose.msra.mxu0 0.0
        %2311 = vmatprep.subr.mxu0 0.0
        %2312 = vmatpush1.xpose.msra.mxu0 0.0
        %2313 = vmatprep.subr.mxu0 0.0
        %2314 = vmatpush1.xpose.msra.mxu0 0.0
        %2315 = vmatprep.subr.mxu0 0.0
        %2316 = vmatpush1.xpose.msra.mxu0 0.0
        %2317 = vmatprep.subr.mxu0 0.0
        %2318 = vmatpush1.xpose.msra.mxu0 0.0
        %2319 = vmatprep.subr.mxu0 0.0
        %2320 = vmatpush1.xpose.msra.mxu0 0.0
        %2321 = vmatprep.subr.mxu0 0.0
        %2322 = vmatpush1.xpose.msra.mxu0 0.0
        %2323 = vmatprep.subr.mxu0 0.0
        %2324 = vmatpush1.xpose.msra.mxu0 0.0
        %2325 = vmatprep.subr.mxu0 0.0
        %2326 = vmatpush1.xpose.msra.mxu0 0.0
        %2327 = vmatprep.subr.mxu0 0.0
        %2328 = vmatpush1.xpose.msra.mxu0 0.0
        %2329 = vmatprep.subr.mxu0 0.0
        %2330 = vmatpush1.xpose.msra.mxu0 0.0
        %2331 = vmatprep.subr.mxu0 0.0
        %2332 = vmatpush1.xpose.msra.mxu0 0.0
        %2333 = vmatprep.subr.mxu0 0.0
        %2334 = vmatpush1.xpose.msra.mxu0 0.0
        %2335 = vmatprep.subr.mxu0 0.0
        %2336 = vmatpush1.xpose.msra.mxu0 0.0
        %2337 = vmatprep.subr.mxu0 0.0
        %2338 = vmatpush1.xpose.msra.mxu0 0.0
        %2339 = vmatprep.subr.mxu0 0.0
        %2340 = vmatpush1.xpose.msra.mxu0 0.0
        %2341 = vmatprep.subr.mxu0 0.0
        %2342 = vmatpush1.xpose.msra.mxu0 0.0
        %2343 = vmatprep.subr.mxu0 0.0
        %2344 = vmatpush1.xpose.msra.mxu0 0.0
        %2345 = vmatprep.subr.mxu0 0.0
        %2346 = vmatpush1.xpose.msra.mxu0 0.0
        %2347 = vmatprep.subr.mxu0 0.0
        %2348 = vmatpush1.xpose.msra.mxu0 0.0
        %2349 = vmatprep.subr.mxu0 0.0
        %2350 = vmatpush1.xpose.msra.mxu0 0.0
        %2351 = vmatprep.subr.mxu0 0.0
        %2352 = vmatpush1.xpose.msra.mxu0 0.0
        %2353 = vmatprep.subr.mxu0 0.0
        %2354 = vmatpush1.xpose.msra.mxu0 0.0
        %2355 = vmatprep.subr.mxu0 0.0
        %2356 = vmatpush1.xpose.msra.mxu0 0.0
        %2357 = vmatprep.subr.mxu0 0.0
        %2358 = vmatpush1.xpose.msra.mxu0 0.0
        %2359 = vmatprep.subr.mxu0 0.0
        %2360 = vmatpush1.xpose.msra.mxu0 0.0
        %2361 = vmatprep.mubr.f32.mxu0 0.0
        %2362 = vmatmul.mubr.f32.gmra.mrb[0].mxu0 %v2284
        %v2363 = vpop.f32.mrb[0].mxu0
        %v2364 = vadd.f32 %v2295, %v2363
        %v2365 = vpop.f32.mrb[0].mxu0
        %2366 = vmatprep.mubr.f32.mxu0 0.0
        %2367 = vmatmul.mubr.f32.gmra.mrb[0].mxu0 %v2285
        %v2368 = vpop.f32.mrb[0].mxu0
        %v2369 = vadd.f32 %v2295, %v2368
        %v2370 = vpop.f32.mrb[0].mxu0
        %2371 = vdwg.mxu0
        %v2372 = vadd.f32 %v2130, %v2364
        %v2373 = vadd.f32 %v2131, %v2369
        %v2374 = vld [vmem:[%s12] sm:$0x1]
        %v2375 = vld [vmem:[%s13] sm:$0x1]
        %v2376 = vsel %vm750, %v2372, 0.0
        %2377 = vadd.xlane.f32.xlu0 %v2376
        %v2378 = vpop.xlane.xlu0 %2377
        %v2379 = vsel %vm750, %v2373, 0.0
        %2380 = vadd.xlane.f32.xlu0 %v2379
        %v2381 = vpop.xlane.xlu0 %2380
        %v2382 = vmul.f32 %v2378, %v2095
        %v2383 = vmul.f32 %v2381, %v2095
        %v2384 = vsub.f32 %v2372, %v2382
        %v2385 = vsub.f32 %v2373, %v2383
        %v2386 = vmul.f32 %v2384, %v2384
        %v2387 = vmul.f32 %v2385, %v2385
        %v2388 = vsel %vm750, %v2386, 0.0
        %2389 = vadd.xlane.f32.xlu0 %v2388
        %v2390 = vpop.xlane.xlu0 %2389
        %v2391 = vsel %vm750, %v2387, 0.0
        %2392 = vadd.xlane.f32.xlu0 %v2391
        %v2393 = vpop.xlane.xlu0 %2392
        %v2394 = vmul.f32 %v2390, %v2095
        %v2395 = vmul.f32 %v2393, %v2095
        %v2396 = vadd.f32 %v2394, 1e-05
        %v2397 = vadd.f32 %v2395, 1e-05
        %v2398 = vrsqrt.pop %v2396
        %v2399 = vrsqrt.pop %v2397
        %v2400 = vmul.f32 %v2384, %v2398
        %v2401 = vmul.f32 %v2385, %v2399
        %v2403 = vlaneseq
        %v2404 = vshrl.u32 %v2403, 7
        %v2405 = vsub.s32 0, %v2404
        %v2406 = vrot.slane %v2374, %v2405
        %v2408 = vmul.f32 %v2400, %v2406
        %v2409 = vmul.f32 %v2401, %v2406
        %v2411 = vlaneseq
        %v2412 = vshrl.u32 %v2411, 7
        %v2413 = vsub.s32 0, %v2412
        %v2414 = vrot.slane %v2375, %v2413
        %v2416 = vadd.f32 %v2408, %v2414
        %v2417 = vadd.f32 %v2409, %v2414
        %v2418 = vld [vmem:[%s1] sm:$0x7]
        %v2420 = vsel %vm967, %v2418, 0
        %2422 = vmatprep.subr.mxu0 0.0
        %2423 = vmatpush1.msra.mxu0 %v2416
        %2424 = vmatprep.subr.mxu0 0.0
        %2425 = vmatpush1.msra.mxu0 %v2417
        %2426 = vmatprep.subr.mxu0 0.0
        %2427 = vmatpush1.msra.mxu0 0.0
        %2428 = vmatprep.subr.mxu0 0.0
        %2429 = vmatpush1.msra.mxu0 0.0
        %2430 = vmatprep.subr.mxu0 0.0
        %2431 = vmatpush1.msra.mxu0 0.0
        %2432 = vmatprep.subr.mxu0 0.0
        %2433 = vmatpush1.msra.mxu0 0.0
        %2434 = vmatprep.subr.mxu0 0.0
        %2435 = vmatpush1.msra.mxu0 0.0
        %2436 = vmatprep.subr.mxu0 0.0
        %2437 = vmatpush1.msra.mxu0 0.0
        %2438 = vmatprep.subr.mxu0 0.0
        %2439 = vmatpush1.msra.mxu0 0.0
        %2440 = vmatprep.subr.mxu0 0.0
        %2441 = vmatpush1.msra.mxu0 0.0
        %2442 = vmatprep.subr.mxu0 0.0
        %2443 = vmatpush1.msra.mxu0 0.0
        %2444 = vmatprep.subr.mxu0 0.0
        %2445 = vmatpush1.msra.mxu0 0.0
        %2446 = vmatprep.subr.mxu0 0.0
        %2447 = vmatpush1.msra.mxu0 0.0
        %2448 = vmatprep.subr.mxu0 0.0
        %2449 = vmatpush1.msra.mxu0 0.0
        %2450 = vmatprep.subr.mxu0 0.0
        %2451 = vmatpush1.msra.mxu0 0.0
        %2452 = vmatprep.subr.mxu0 0.0
        %2453 = vmatpush1.msra.mxu0 0.0
        %2454 = vmatprep.subr.mxu0 0.0
        %2455 = vmatpush1.msra.mxu0 0.0
        %2456 = vmatprep.subr.mxu0 0.0
        %2457 = vmatpush1.msra.mxu0 0.0
        %2458 = vmatprep.subr.mxu0 0.0
        %2459 = vmatpush1.msra.mxu0 0.0
        %2460 = vmatprep.subr.mxu0 0.0
        %2461 = vmatpush1.msra.mxu0 0.0
        %2462 = vmatprep.subr.mxu0 0.0
        %2463 = vmatpush1.msra.mxu0 0.0
        %2464 = vmatprep.subr.mxu0 0.0
        %2465 = vmatpush1.msra.mxu0 0.0
        %2466 = vmatprep.subr.mxu0 0.0
        %2467 = vmatpush1.msra.mxu0 0.0
        %2468 = vmatprep.subr.mxu0 0.0
        %2469 = vmatpush1.msra.mxu0 0.0
        %2470 = vmatprep.subr.mxu0 0.0
        %2471 = vmatpush1.msra.mxu0 0.0
        %2472 = vmatprep.subr.mxu0 0.0
        %2473 = vmatpush1.msra.mxu0 0.0
        %2474 = vmatprep.subr.mxu0 0.0
        %2475 = vmatpush1.msra.mxu0 0.0
        %2476 = vmatprep.subr.mxu0 0.0
        %2477 = vmatpush1.msra.mxu0 0.0
        %2478 = vmatprep.subr.mxu0 0.0
        %2479 = vmatpush1.msra.mxu0 0.0
        %2480 = vmatprep.subr.mxu0 0.0
        %2481 = vmatpush1.msra.mxu0 0.0
        %2482 = vmatprep.subr.mxu0 0.0
        %2483 = vmatpush1.msra.mxu0 0.0
        %2484 = vmatprep.subr.mxu0 0.0
        %2485 = vmatpush1.msra.mxu0 0.0
        %2486 = vmatprep.mubr.f32.mxu0 0.0
        %2487 = vmatmul.mubr.f32.gmra.mrb[0].mxu0 %v2420
        %v2488 = vpop.f32.mrb[0].mxu0
        %v2489 = vadd.f32 0.0, %v2488
        %v2490 = vpop.f32.mrb[0].mxu0
        %2491 = vdwg.mxu0
        %v2492 = vld [vmem:[%s18] sm:$0x1]
        %v2493 = vld [vmem:[%s19] sm:$0x1]
        %vm2494 = vcmask 256000
        %v2495 = vsel %vm2494, %v2489, 0.0
        %2496 = vadd.xlane.f32.xlu0 %v2495
        %v2497 = vpop.xlane.xlu0 %2496
        %v2498 = vmul.f32 %v2497, %v2095
        %v2499 = vsub.f32 %v2489, %v2498
        %v2500 = vmul.f32 %v2499, %v2499
        %v2501 = vsel %vm2494, %v2500, 0.0
        %2502 = vadd.xlane.f32.xlu0 %v2501
        %v2503 = vpop.xlane.xlu0 %2502
        %v2504 = vmul.f32 %v2503, %v2095
        %v2505 = vadd.f32 %v2504, 1e-06
        %v2506 = vrsqrt.pop %v2505
        %v2507 = vmul.f32 %v2499, %v2506
        %v2509 = vlaneseq
        %v2510 = vshrl.u32 %v2509, 7
        %v2511 = vsub.s32 0, %v2510
        %v2512 = vrot.slane %v2492, %v2511
        %v2514 = vmul.f32 %v2507, %v2512
        %v2516 = vlaneseq
        %v2517 = vshrl.u32 %v2516, 7
        %v2518 = vsub.s32 0, %v2517
        %v2519 = vrot.slane %v2493, %v2518
        %v2521 = vadd.f32 %v2514, %v2519
        %v2522 = vsel %vm750, %v2416, 0.0
        %2523 = vadd.xlane.f32.xlu0 %v2522
        %v2524 = vpop.xlane.xlu0 %2523
        %v2525 = vsel %vm750, %v2417, 0.0
        %2526 = vadd.xlane.f32.xlu0 %v2525
        %v2527 = vpop.xlane.xlu0 %2526
        %v2528 = vmul.f32 %v2524, %v2095
        %v2529 = vmul.f32 %v2527, %v2095
        %v2530 = vsub.f32 %v2416, %v2528
        %v2531 = vsub.f32 %v2417, %v2529
        %v2532 = vmul.f32 %v2530, %v2530
        %v2533 = vmul.f32 %v2531, %v2531
        %v2534 = vsel %vm750, %v2532, 0.0
        %2535 = vadd.xlane.f32.xlu0 %v2534
        %v2536 = vpop.xlane.xlu0 %2535
        %v2537 = vsel %vm750, %v2533, 0.0
        %2538 = vadd.xlane.f32.xlu0 %v2537
        %v2539 = vpop.xlane.xlu0 %2538
        %v2540 = vmul.f32 %v2536, %v2095
        %v2541 = vmul.f32 %v2539, %v2095
        %v2542 = vadd.f32 %v2540, 1e-06
        %v2543 = vadd.f32 %v2541, 1e-06
        %v2544 = vrsqrt.pop %v2542
        %v2545 = vrsqrt.pop %v2543
        %v2546 = vmul.f32 %v2530, %v2544
        %v2547 = vmul.f32 %v2531, %v2545
        %v2548 = vmul.f32 %v2546, %v2512
        %v2549 = vmul.f32 %v2547, %v2512
        %v2550 = vadd.f32 %v2548, %v2519
        %v2551 = vadd.f32 %v2549, %v2519
        %v2552 = vld [vmem:[%s14] sm:$0xff]
        %v2553 = vld [vmem:[%s14 + $0x8] sm:$0xff]
        %v2554 = vld [vmem:[%s14 + $0x10] sm:$0xff]
        %v2555 = vld [vmem:[%s14 + $0x18] sm:$0xff]
        %v2556 = vld [vmem:[%s14 + $0x20] sm:$0xff]
        %v2557 = vld [vmem:[%s14 + $0x28] sm:$0xff]
        %v2558 = vld [vmem:[%s14 + $0x30] sm:$0xff]
        %v2559 = vld [vmem:[%s14 + $0x38] sm:$0xff]
        %v2560 = vld [vmem:[%s14 + $0x40] sm:$0xff]
        %v2561 = vld [vmem:[%s14 + $0x48] sm:$0xff]
        %v2562 = vld [vmem:[%s14 + $0x50] sm:$0xff]
        %v2563 = vld [vmem:[%s14 + $0x58] sm:$0xff]
        %v2564 = vld [vmem:[%s15] sm:$0x1]
        %v2566 = vlaneseq
        %v2567 = vshrl.u32 %v2566, 7
        %v2568 = vsub.s32 0, %v2567
        %v2569 = vrot.slane %v2564, %v2568
        %v2572 = vsel %vm750, %v2521, 0
        %v2575 = vsel %vm750, %v2552, 0
        %v2578 = vsel %vm750, %v2553, 0
        %v2581 = vsel %vm750, %v2554, 0
        %v2584 = vsel %vm750, %v2555, 0
        %v2587 = vsel %vm750, %v2556, 0
        %v2590 = vsel %vm750, %v2557, 0
        %v2593 = vsel %vm750, %v2558, 0
        %v2596 = vsel %vm750, %v2559, 0
        %v2599 = vsel %vm750, %v2560, 0
        %v2602 = vsel %vm750, %v2561, 0
        %v2605 = vsel %vm750, %v2562, 0
        %v2608 = vsel %vm750, %v2563, 0
        %2610 = vmatprep.subr.mxu0 0.0
        %2611 = vmatpush1.xpose.msra.mxu0 %v2575
        %2612 = vmatprep.subr.mxu0 0.0
        %2613 = vmatpush1.xpose.msra.mxu0 %v2578
        %2614 = vmatprep.subr.mxu0 0.0
        %2615 = vmatpush1.xpose.msra.mxu0 %v2581
        %2616 = vmatprep.subr.mxu0 0.0
        %2617 = vmatpush1.xpose.msra.mxu0 %v2584
        %2618 = vmatprep.subr.mxu0 0.0
        %2619 = vmatpush1.xpose.msra.mxu0 %v2587
        %2620 = vmatprep.subr.mxu0 0.0
        %2621 = vmatpush1.xpose.msra.mxu0 %v2590
        %2622 = vmatprep.subr.mxu0 0.0
        %2623 = vmatpush1.xpose.msra.mxu0 %v2593
        %2624 = vmatprep.subr.mxu0 0.0
        %2625 = vmatpush1.xpose.msra.mxu0 %v2596
        %2626 = vmatprep.subr.mxu0 0.0
        %2627 = vmatpush1.xpose.msra.mxu0 %v2599
        %2628 = vmatprep.subr.mxu0 0.0
        %2629 = vmatpush1.xpose.msra.mxu0 %v2602
        %2630 = vmatprep.subr.mxu0 0.0
        %2631 = vmatpush1.xpose.msra.mxu0 %v2605
        %2632 = vmatprep.subr.mxu0 0.0
        %2633 = vmatpush1.xpose.msra.mxu0 %v2608
        %2634 = vmatprep.subr.mxu0 0.0
        %2635 = vmatpush1.xpose.msra.mxu0 0.0
        %2636 = vmatprep.subr.mxu0 0.0
        %2637 = vmatpush1.xpose.msra.mxu0 0.0
        %2638 = vmatprep.subr.mxu0 0.0
        %2639 = vmatpush1.xpose.msra.mxu0 0.0
        %2640 = vmatprep.subr.mxu0 0.0
        %2641 = vmatpush1.xpose.msra.mxu0 0.0
        %2642 = vmatprep.subr.mxu0 0.0
        %2643 = vmatpush1.xpose.msra.mxu0 0.0
        %2644 = vmatprep.subr.mxu0 0.0
        %2645 = vmatpush1.xpose.msra.mxu0 0.0
        %2646 = vmatprep.subr.mxu0 0.0
        %2647 = vmatpush1.xpose.msra.mxu0 0.0
        %2648 = vmatprep.subr.mxu0 0.0
        %2649 = vmatpush1.xpose.msra.mxu0 0.0
        %2650 = vmatprep.subr.mxu0 0.0
        %2651 = vmatpush1.xpose.msra.mxu0 0.0
        %2652 = vmatprep.subr.mxu0 0.0
        %2653 = vmatpush1.xpose.msra.mxu0 0.0
        %2654 = vmatprep.subr.mxu0 0.0
        %2655 = vmatpush1.xpose.msra.mxu0 0.0
        %2656 = vmatprep.subr.mxu0 0.0
        %2657 = vmatpush1.xpose.msra.mxu0 0.0
        %2658 = vmatprep.subr.mxu0 0.0
        %2659 = vmatpush1.xpose.msra.mxu0 0.0
        %2660 = vmatprep.subr.mxu0 0.0
        %2661 = vmatpush1.xpose.msra.mxu0 0.0
        %2662 = vmatprep.subr.mxu0 0.0
        %2663 = vmatpush1.xpose.msra.mxu0 0.0
        %2664 = vmatprep.subr.mxu0 0.0
        %2665 = vmatpush1.xpose.msra.mxu0 0.0
        %2666 = vmatprep.subr.mxu0 0.0
        %2667 = vmatpush1.xpose.msra.mxu0 0.0
        %2668 = vmatprep.subr.mxu0 0.0
        %2669 = vmatpush1.xpose.msra.mxu0 0.0
        %2670 = vmatprep.subr.mxu0 0.0
        %2671 = vmatpush1.xpose.msra.mxu0 0.0
        %2672 = vmatprep.subr.mxu0 0.0
        %2673 = vmatpush1.xpose.msra.mxu0 0.0
        %2674 = vmatprep.mubr.f32.mxu0 0.0
        %2675 = vmatmul.mubr.f32.gmra.mrb[0].mxu0 %v2572
        %v2676 = vpop.f32.mrb[0].mxu0
        %v2677 = vadd.f32 %v2569, %v2676
        %v2678 = vpop.f32.mrb[0].mxu0
        %2679 = vdwg.mxu0
        %v2681 = vsel %vm750, %v2550, 0
        %v2684 = vsel %vm750, %v2551, 0
        %2686 = vmatprep.subr.mxu0 0.0
        %2687 = vmatpush1.xpose.msra.mxu0 %v2575
        %2688 = vmatprep.subr.mxu0 0.0
        %2689 = vmatpush1.xpose.msra.mxu0 %v2578
        %2690 = vmatprep.subr.mxu0 0.0
        %2691 = vmatpush1.xpose.msra.mxu0 %v2581
        %2692 = vmatprep.subr.mxu0 0.0
        %2693 = vmatpush1.xpose.msra.mxu0 %v2584
        %2694 = vmatprep.subr.mxu0 0.0
        %2695 = vmatpush1.xpose.msra.mxu0 %v2587
        %2696 = vmatprep.subr.mxu0 0.0
        %2697 = vmatpush1.xpose.msra.mxu0 %v2590
        %2698 = vmatprep.subr.mxu0 0.0
        %2699 = vmatpush1.xpose.msra.mxu0 %v2593
        %2700 = vmatprep.subr.mxu0 0.0
        %2701 = vmatpush1.xpose.msra.mxu0 %v2596
        %2702 = vmatprep.subr.mxu0 0.0
        %2703 = vmatpush1.xpose.msra.mxu0 %v2599
        %2704 = vmatprep.subr.mxu0 0.0
        %2705 = vmatpush1.xpose.msra.mxu0 %v2602
        %2706 = vmatprep.subr.mxu0 0.0
        %2707 = vmatpush1.xpose.msra.mxu0 %v2605
        %2708 = vmatprep.subr.mxu0 0.0
        %2709 = vmatpush1.xpose.msra.mxu0 %v2608
        %2710 = vmatprep.subr.mxu0 0.0
        %2711 = vmatpush1.xpose.msra.mxu0 0.0
        %2712 = vmatprep.subr.mxu0 0.0
        %2713 = vmatpush1.xpose.msra.mxu0 0.0
        %2714 = vmatprep.subr.mxu0 0.0
        %2715 = vmatpush1.xpose.msra.mxu0 0.0
        %2716 = vmatprep.subr.mxu0 0.0
        %2717 = vmatpush1.xpose.msra.mxu0 0.0
        %2718 = vmatprep.subr.mxu0 0.0
        %2719 = vmatpush1.xpose.msra.mxu0 0.0
        %2720 = vmatprep.subr.mxu0 0.0
        %2721 = vmatpush1.xpose.msra.mxu0 0.0
        %2722 = vmatprep.subr.mxu0 0.0
        %2723 = vmatpush1.xpose.msra.mxu0 0.0
        %2724 = vmatprep.subr.mxu0 0.0
        %2725 = vmatpush1.xpose.msra.mxu0 0.0
        %2726 = vmatprep.subr.mxu0 0.0
        %2727 = vmatpush1.xpose.msra.mxu0 0.0
        %2728 = vmatprep.subr.mxu0 0.0
        %2729 = vmatpush1.xpose.msra.mxu0 0.0
        %2730 = vmatprep.subr.mxu0 0.0
        %2731 = vmatpush1.xpose.msra.mxu0 0.0
        %2732 = vmatprep.subr.mxu0 0.0
        %2733 = vmatpush1.xpose.msra.mxu0 0.0
        %2734 = vmatprep.subr.mxu0 0.0
        %2735 = vmatpush1.xpose.msra.mxu0 0.0
        %2736 = vmatprep.subr.mxu0 0.0
        %2737 = vmatpush1.xpose.msra.mxu0 0.0
        %2738 = vmatprep.subr.mxu0 0.0
        %2739 = vmatpush1.xpose.msra.mxu0 0.0
        %2740 = vmatprep.subr.mxu0 0.0
        %2741 = vmatpush1.xpose.msra.mxu0 0.0
        %2742 = vmatprep.subr.mxu0 0.0
        %2743 = vmatpush1.xpose.msra.mxu0 0.0
        %2744 = vmatprep.subr.mxu0 0.0
        %2745 = vmatpush1.xpose.msra.mxu0 0.0
        %2746 = vmatprep.subr.mxu0 0.0
        %2747 = vmatpush1.xpose.msra.mxu0 0.0
        %2748 = vmatprep.subr.mxu0 0.0
        %2749 = vmatpush1.xpose.msra.mxu0 0.0
        %2750 = vmatprep.mubr.f32.mxu0 0.0
        %2751 = vmatmul.mubr.f32.gmra.mrb[0].mxu0 %v2681
        %v2752 = vpop.f32.mrb[0].mxu0
        %v2753 = vadd.f32 %v2569, %v2752
        %v2754 = vpop.f32.mrb[0].mxu0
        %2755 = vmatprep.mubr.f32.mxu0 0.0
        %2756 = vmatmul.mubr.f32.gmra.mrb[0].mxu0 %v2684
        %v2757 = vpop.f32.mrb[0].mxu0
        %v2758 = vadd.f32 %v2569, %v2757
        %v2759 = vpop.f32.mrb[0].mxu0
        %2760 = vdwg.mxu0
        %vm2761 = vcmp.gt.f32.partialorder %v2418, 0.0
        %v2762 = vsel %vm2761, 0.0, -1e+30
        %v2763 = vld [vmem:[%s16] sm:$0xff]
        %v2764 = vld [vmem:[%s16 + $0x8] sm:$0xff]
        %v2765 = vld [vmem:[%s16 + $0x10] sm:$0xff]
        %v2766 = vld [vmem:[%s16 + $0x18] sm:$0xff]
        %v2767 = vld [vmem:[%s17] sm:$0x1]
        %2770 = vrot.lane.b32.xlu0 %v2753, 96
        %v2771 = vpop.permute.xlu0 %2770
        %2772 = vrot.lane.b32.xlu0 %v2758, 96
        %v2773 = vpop.permute.xlu0 %2772
        %v2775 = vsel %vm879, %v2677, 0
        %v2777 = vsel %vm879, %v2771, 0
        %v2779 = vsel %vm879, %v2773, 0
        %2781 = vmatprep.subr.mxu0 0.0
        %2782 = vmatpush1.xpose.msra.mxu0 %v2777
        %2783 = vmatprep.subr.mxu0 0.0
        %2784 = vmatpush1.xpose.msra.mxu0 %v2779
        %2785 = vmatprep.subr.mxu0 0.0
        %2786 = vmatpush1.xpose.msra.mxu0 0.0
        %2787 = vmatprep.subr.mxu0 0.0
        %2788 = vmatpush1.xpose.msra.mxu0 0.0
        %2789 = vmatprep.subr.mxu0 0.0
        %2790 = vmatpush1.xpose.msra.mxu0 0.0
        %2791 = vmatprep.subr.mxu0 0.0
        %2792 = vmatpush1.xpose.msra.mxu0 0.0
        %2793 = vmatprep.subr.mxu0 0.0
        %2794 = vmatpush1.xpose.msra.mxu0 0.0
        %2795 = vmatprep.subr.mxu0 0.0
        %2796 = vmatpush1.xpose.msra.mxu0 0.0
        %2797 = vmatprep.subr.mxu0 0.0
        %2798 = vmatpush1.xpose.msra.mxu0 0.0
        %2799 = vmatprep.subr.mxu0 0.0
        %2800 = vmatpush1.xpose.msra.mxu0 0.0
        %2801 = vmatprep.subr.mxu0 0.0
        %2802 = vmatpush1.xpose.msra.mxu0 0.0
        %2803 = vmatprep.subr.mxu0 0.0
        %2804 = vmatpush1.xpose.msra.mxu0 0.0
        %2805 = vmatprep.subr.mxu0 0.0
        %2806 = vmatpush1.xpose.msra.mxu0 0.0
        %2807 = vmatprep.subr.mxu0 0.0
        %2808 = vmatpush1.xpose.msra.mxu0 0.0
        %2809 = vmatprep.subr.mxu0 0.0
        %2810 = vmatpush1.xpose.msra.mxu0 0.0
        %2811 = vmatprep.subr.mxu0 0.0
        %2812 = vmatpush1.xpose.msra.mxu0 0.0
        %2813 = vmatprep.subr.mxu0 0.0
        %2814 = vmatpush1.xpose.msra.mxu0 0.0
        %2815 = vmatprep.subr.mxu0 0.0
        %2816 = vmatpush1.xpose.msra.mxu0 0.0
        %2817 = vmatprep.subr.mxu0 0.0
        %2818 = vmatpush1.xpose.msra.mxu0 0.0
        %2819 = vmatprep.subr.mxu0 0.0
        %2820 = vmatpush1.xpose.msra.mxu0 0.0
        %2821 = vmatprep.subr.mxu0 0.0
        %2822 = vmatpush1.xpose.msra.mxu0 0.0
        %2823 = vmatprep.subr.mxu0 0.0
        %2824 = vmatpush1.xpose.msra.mxu0 0.0
        %2825 = vmatprep.subr.mxu0 0.0
        %2826 = vmatpush1.xpose.msra.mxu0 0.0
        %2827 = vmatprep.subr.mxu0 0.0
        %2828 = vmatpush1.xpose.msra.mxu0 0.0
        %2829 = vmatprep.subr.mxu0 0.0
        %2830 = vmatpush1.xpose.msra.mxu0 0.0
        %2831 = vmatprep.subr.mxu0 0.0
        %2832 = vmatpush1.xpose.msra.mxu0 0.0
        %2833 = vmatprep.subr.mxu0 0.0
        %2834 = vmatpush1.xpose.msra.mxu0 0.0
        %2835 = vmatprep.subr.mxu0 0.0
        %2836 = vmatpush1.xpose.msra.mxu0 0.0
        %2837 = vmatprep.subr.mxu0 0.0
        %2838 = vmatpush1.xpose.msra.mxu0 0.0
        %2839 = vmatprep.subr.mxu0 0.0
        %2840 = vmatpush1.xpose.msra.mxu0 0.0
        %2841 = vmatprep.subr.mxu0 0.0
        %2842 = vmatpush1.xpose.msra.mxu0 0.0
        %2843 = vmatprep.subr.mxu0 0.0
        %2844 = vmatpush1.xpose.msra.mxu0 0.0
        %2845 = vmatprep.mubr.f32.mxu0 0.0
        %2846 = vmatmul.mubr.f32.gmra.mrb[0].mxu0 %v2775
        %v2847 = vpop.f32.mrb[0].mxu0
        %v2848 = vadd.f32 0.0, %v2847
        %v2849 = vpop.f32.mrb[0].mxu0
        %2850 = vdwg.mxu0
        %v2851 = vmul.f32 %v2848, 0.35355338
        %v2852 = vadd.f32 %v2851, %v2762
        %vm2853 = vcmask 124928
        %v2854 = vsel %vm2853, %v2852, -inf
        %2855 = vmax.xlane.f32.xlu0 %v2854
        %v2856 = vpop.xlane.xlu0 %2855
        %v2857 = vsub.f32 %v2852, %v2856
        %v2858 = vmul.f32 %v2857, 1.442695
        %v2859 = vpow.pop %v2858
        %v2860 = vsel %vm2853, %v2859, 0.0
        %2861 = vadd.xlane.f32.xlu0 %v2860
        %v2862 = vpop.xlane.xlu0 %2861
        %v2863 = vrcp.pop %v2862
        %v2864 = vmul.f32 %v2859, %v2863
        %2865 = vrot.lane.b32.xlu0 %v2753, 64
        %v2866 = vpop.permute.xlu0 %2865
        %2867 = vrot.lane.b32.xlu0 %v2758, 64
        %v2868 = vpop.permute.xlu0 %2867
        %v2872 = vsel %vm967, %v2864, 0
        %2874 = vmatprep.subr.mxu0 0.0
        %2875 = vmatpush1.msra.mxu0 %v2866
        %2876 = vmatprep.subr.mxu0 0.0
        %2877 = vmatpush1.msra.mxu0 %v2868
        %2878 = vmatprep.subr.mxu0 0.0
        %2879 = vmatpush1.msra.mxu0 0.0
        %2880 = vmatprep.subr.mxu0 0.0
        %2881 = vmatpush1.msra.mxu0 0.0
        %2882 = vmatprep.subr.mxu0 0.0
        %2883 = vmatpush1.msra.mxu0 0.0
        %2884 = vmatprep.subr.mxu0 0.0
        %2885 = vmatpush1.msra.mxu0 0.0
        %2886 = vmatprep.subr.mxu0 0.0
        %2887 = vmatpush1.msra.mxu0 0.0
        %2888 = vmatprep.subr.mxu0 0.0
        %2889 = vmatpush1.msra.mxu0 0.0
        %2890 = vmatprep.subr.mxu0 0.0
        %2891 = vmatpush1.msra.mxu0 0.0
        %2892 = vmatprep.subr.mxu0 0.0
        %2893 = vmatpush1.msra.mxu0 0.0
        %2894 = vmatprep.subr.mxu0 0.0
        %2895 = vmatpush1.msra.mxu0 0.0
        %2896 = vmatprep.subr.mxu0 0.0
        %2897 = vmatpush1.msra.mxu0 0.0
        %2898 = vmatprep.subr.mxu0 0.0
        %2899 = vmatpush1.msra.mxu0 0.0
        %2900 = vmatprep.subr.mxu0 0.0
        %2901 = vmatpush1.msra.mxu0 0.0
        %2902 = vmatprep.subr.mxu0 0.0
        %2903 = vmatpush1.msra.mxu0 0.0
        %2904 = vmatprep.subr.mxu0 0.0
        %2905 = vmatpush1.msra.mxu0 0.0
        %2906 = vmatprep.subr.mxu0 0.0
        %2907 = vmatpush1.msra.mxu0 0.0
        %2908 = vmatprep.subr.mxu0 0.0
        %2909 = vmatpush1.msra.mxu0 0.0
        %2910 = vmatprep.subr.mxu0 0.0
        %2911 = vmatpush1.msra.mxu0 0.0
        %2912 = vmatprep.subr.mxu0 0.0
        %2913 = vmatpush1.msra.mxu0 0.0
        %2914 = vmatprep.subr.mxu0 0.0
        %2915 = vmatpush1.msra.mxu0 0.0
        %2916 = vmatprep.subr.mxu0 0.0
        %2917 = vmatpush1.msra.mxu0 0.0
        %2918 = vmatprep.subr.mxu0 0.0
        %2919 = vmatpush1.msra.mxu0 0.0
        %2920 = vmatprep.subr.mxu0 0.0
        %2921 = vmatpush1.msra.mxu0 0.0
        %2922 = vmatprep.subr.mxu0 0.0
        %2923 = vmatpush1.msra.mxu0 0.0
        %2924 = vmatprep.subr.mxu0 0.0
        %2925 = vmatpush1.msra.mxu0 0.0
        %2926 = vmatprep.subr.mxu0 0.0
        %2927 = vmatpush1.msra.mxu0 0.0
        %2928 = vmatprep.subr.mxu0 0.0
        %2929 = vmatpush1.msra.mxu0 0.0
        %2930 = vmatprep.subr.mxu0 0.0
        %2931 = vmatpush1.msra.mxu0 0.0
        %2932 = vmatprep.subr.mxu0 0.0
        %2933 = vmatpush1.msra.mxu0 0.0
        %2934 = vmatprep.subr.mxu0 0.0
        %2935 = vmatpush1.msra.mxu0 0.0
        %2936 = vmatprep.subr.mxu0 0.0
        %2937 = vmatpush1.msra.mxu0 0.0
        %2938 = vmatprep.mubr.f32.mxu0 0.0
        %2939 = vmatmul.mubr.f32.gmra.mrb[0].mxu0 %v2872
        %v2940 = vpop.f32.mrb[0].mxu0
        %v2941 = vadd.f32 0.0, %v2940
        %v2942 = vpop.f32.mrb[0].mxu0
        %2943 = vdwg.mxu0
        %2944 = vrot.lane.b32.xlu0 %v2677, 120
        %v2945 = vpop.permute.xlu0 %2944
        %2946 = vrot.lane.b32.xlu0 %v2753, 88
        %v2947 = vpop.permute.xlu0 %2946
        %2948 = vrot.lane.b32.xlu0 %v2758, 88
        %v2949 = vpop.permute.xlu0 %2948
        %v2950 = vsel %vm879, %v2945, 0
        %v2952 = vsel %vm879, %v2947, 0
        %v2954 = vsel %vm879, %v2949, 0
        %2956 = vmatprep.subr.mxu0 0.0
        %2957 = vmatpush1.xpose.msra.mxu0 %v2952
        %2958 = vmatprep.subr.mxu0 0.0
        %2959 = vmatpush1.xpose.msra.mxu0 %v2954
        %2960 = vmatprep.subr.mxu0 0.0
        %2961 = vmatpush1.xpose.msra.mxu0 0.0
        %2962 = vmatprep.subr.mxu0 0.0
        %2963 = vmatpush1.xpose.msra.mxu0 0.0
        %2964 = vmatprep.subr.mxu0 0.0
        %2965 = vmatpush1.xpose.msra.mxu0 0.0
        %2966 = vmatprep.subr.mxu0 0.0
        %2967 = vmatpush1.xpose.msra.mxu0 0.0
        %2968 = vmatprep.subr.mxu0 0.0
        %2969 = vmatpush1.xpose.msra.mxu0 0.0
        %2970 = vmatprep.subr.mxu0 0.0
        %2971 = vmatpush1.xpose.msra.mxu0 0.0
        %2972 = vmatprep.subr.mxu0 0.0
        %2973 = vmatpush1.xpose.msra.mxu0 0.0
        %2974 = vmatprep.subr.mxu0 0.0
        %2975 = vmatpush1.xpose.msra.mxu0 0.0
        %2976 = vmatprep.subr.mxu0 0.0
        %2977 = vmatpush1.xpose.msra.mxu0 0.0
        %2978 = vmatprep.subr.mxu0 0.0
        %2979 = vmatpush1.xpose.msra.mxu0 0.0
        %2980 = vmatprep.subr.mxu0 0.0
        %2981 = vmatpush1.xpose.msra.mxu0 0.0
        %2982 = vmatprep.subr.mxu0 0.0
        %2983 = vmatpush1.xpose.msra.mxu0 0.0
        %2984 = vmatprep.subr.mxu0 0.0
        %2985 = vmatpush1.xpose.msra.mxu0 0.0
        %2986 = vmatprep.subr.mxu0 0.0
        %2987 = vmatpush1.xpose.msra.mxu0 0.0
        %2988 = vmatprep.subr.mxu0 0.0
        %2989 = vmatpush1.xpose.msra.mxu0 0.0
        %2990 = vmatprep.subr.mxu0 0.0
        %2991 = vmatpush1.xpose.msra.mxu0 0.0
        %2992 = vmatprep.subr.mxu0 0.0
        %2993 = vmatpush1.xpose.msra.mxu0 0.0
        %2994 = vmatprep.subr.mxu0 0.0
        %2995 = vmatpush1.xpose.msra.mxu0 0.0
        %2996 = vmatprep.subr.mxu0 0.0
        %2997 = vmatpush1.xpose.msra.mxu0 0.0
        %2998 = vmatprep.subr.mxu0 0.0
        %2999 = vmatpush1.xpose.msra.mxu0 0.0
        %3000 = vmatprep.subr.mxu0 0.0
        %3001 = vmatpush1.xpose.msra.mxu0 0.0
        %3002 = vmatprep.subr.mxu0 0.0
        %3003 = vmatpush1.xpose.msra.mxu0 0.0
        %3004 = vmatprep.subr.mxu0 0.0
        %3005 = vmatpush1.xpose.msra.mxu0 0.0
        %3006 = vmatprep.subr.mxu0 0.0
        %3007 = vmatpush1.xpose.msra.mxu0 0.0
        %3008 = vmatprep.subr.mxu0 0.0
        %3009 = vmatpush1.xpose.msra.mxu0 0.0
        %3010 = vmatprep.subr.mxu0 0.0
        %3011 = vmatpush1.xpose.msra.mxu0 0.0
        %3012 = vmatprep.subr.mxu0 0.0
        %3013 = vmatpush1.xpose.msra.mxu0 0.0
        %3014 = vmatprep.subr.mxu0 0.0
        %3015 = vmatpush1.xpose.msra.mxu0 0.0
        %3016 = vmatprep.subr.mxu0 0.0
        %3017 = vmatpush1.xpose.msra.mxu0 0.0
        %3018 = vmatprep.subr.mxu0 0.0
        %3019 = vmatpush1.xpose.msra.mxu0 0.0
        %3020 = vmatprep.mubr.f32.mxu0 0.0
        %3021 = vmatmul.mubr.f32.gmra.mrb[0].mxu0 %v2950
        %v3022 = vpop.f32.mrb[0].mxu0
        %v3023 = vadd.f32 0.0, %v3022
        %v3024 = vpop.f32.mrb[0].mxu0
        %3025 = vdwg.mxu0
        %v3026 = vmul.f32 %v3023, 0.35355338
        %v3027 = vadd.f32 %v3026, %v2762
        %v3028 = vsel %vm2853, %v3027, -inf
        %3029 = vmax.xlane.f32.xlu0 %v3028
        %v3030 = vpop.xlane.xlu0 %3029
        %v3031 = vsub.f32 %v3027, %v3030
        %v3032 = vmul.f32 %v3031, 1.442695
        %v3033 = vpow.pop %v3032
        %v3034 = vsel %vm2853, %v3033, 0.0
        %3035 = vadd.xlane.f32.xlu0 %v3034
        %v3036 = vpop.xlane.xlu0 %3035
        %v3037 = vrcp.pop %v3036
        %v3038 = vmul.f32 %v3033, %v3037
        %3039 = vrot.lane.b32.xlu0 %v2753, 56
        %v3040 = vpop.permute.xlu0 %3039
        %3041 = vrot.lane.b32.xlu0 %v2758, 56
        %v3042 = vpop.permute.xlu0 %3041
        %v3046 = vsel %vm967, %v3038, 0
        %3048 = vmatprep.subr.mxu0 0.0
        %3049 = vmatpush1.msra.mxu0 %v3040
        %3050 = vmatprep.subr.mxu0 0.0
        %3051 = vmatpush1.msra.mxu0 %v3042
        %3052 = vmatprep.subr.mxu0 0.0
        %3053 = vmatpush1.msra.mxu0 0.0
        %3054 = vmatprep.subr.mxu0 0.0
        %3055 = vmatpush1.msra.mxu0 0.0
        %3056 = vmatprep.subr.mxu0 0.0
        %3057 = vmatpush1.msra.mxu0 0.0
        %3058 = vmatprep.subr.mxu0 0.0
        %3059 = vmatpush1.msra.mxu0 0.0
        %3060 = vmatprep.subr.mxu0 0.0
        %3061 = vmatpush1.msra.mxu0 0.0
        %3062 = vmatprep.subr.mxu0 0.0
        %3063 = vmatpush1.msra.mxu0 0.0
        %3064 = vmatprep.subr.mxu0 0.0
        %3065 = vmatpush1.msra.mxu0 0.0
        %3066 = vmatprep.subr.mxu0 0.0
        %3067 = vmatpush1.msra.mxu0 0.0
        %3068 = vmatprep.subr.mxu0 0.0
        %3069 = vmatpush1.msra.mxu0 0.0
        %3070 = vmatprep.subr.mxu0 0.0
        %3071 = vmatpush1.msra.mxu0 0.0
        %3072 = vmatprep.subr.mxu0 0.0
        %3073 = vmatpush1.msra.mxu0 0.0
        %3074 = vmatprep.subr.mxu0 0.0
        %3075 = vmatpush1.msra.mxu0 0.0
        %3076 = vmatprep.subr.mxu0 0.0
        %3077 = vmatpush1.msra.mxu0 0.0
        %3078 = vmatprep.subr.mxu0 0.0
        %3079 = vmatpush1.msra.mxu0 0.0
        %3080 = vmatprep.subr.mxu0 0.0
        %3081 = vmatpush1.msra.mxu0 0.0
        %3082 = vmatprep.subr.mxu0 0.0
        %3083 = vmatpush1.msra.mxu0 0.0
        %3084 = vmatprep.subr.mxu0 0.0
        %3085 = vmatpush1.msra.mxu0 0.0
        %3086 = vmatprep.subr.mxu0 0.0
        %3087 = vmatpush1.msra.mxu0 0.0
        %3088 = vmatprep.subr.mxu0 0.0
        %3089 = vmatpush1.msra.mxu0 0.0
        %3090 = vmatprep.subr.mxu0 0.0
        %3091 = vmatpush1.msra.mxu0 0.0
        %3092 = vmatprep.subr.mxu0 0.0
        %3093 = vmatpush1.msra.mxu0 0.0
        %3094 = vmatprep.subr.mxu0 0.0
        %3095 = vmatpush1.msra.mxu0 0.0
        %3096 = vmatprep.subr.mxu0 0.0
        %3097 = vmatpush1.msra.mxu0 0.0
        %3098 = vmatprep.subr.mxu0 0.0
        %3099 = vmatpush1.msra.mxu0 0.0
        %3100 = vmatprep.subr.mxu0 0.0
        %3101 = vmatpush1.msra.mxu0 0.0
        %3102 = vmatprep.subr.mxu0 0.0
        %3103 = vmatpush1.msra.mxu0 0.0
        %3104 = vmatprep.subr.mxu0 0.0
        %3105 = vmatpush1.msra.mxu0 0.0
        %3106 = vmatprep.subr.mxu0 0.0
        %3107 = vmatpush1.msra.mxu0 0.0
        %3108 = vmatprep.subr.mxu0 0.0
        %3109 = vmatpush1.msra.mxu0 0.0
        %3110 = vmatprep.subr.mxu0 0.0
        %3111 = vmatpush1.msra.mxu0 0.0
        %3112 = vmatprep.mubr.f32.mxu0 0.0
        %3113 = vmatmul.mubr.f32.gmra.mrb[0].mxu0 %v3046
        %v3114 = vpop.f32.mrb[0].mxu0
        %v3115 = vadd.f32 0.0, %v3114
        %v3116 = vpop.f32.mrb[0].mxu0
        %3117 = vdwg.mxu0
        %3122 = vrot.lane.b32.xlu0 %v2763, 120
        %v3123 = vpop.permute.xlu0 %3122
        %3124 = vrot.lane.b32.xlu0 %v2764, 120
        %v3125 = vpop.permute.xlu0 %3124
        %3126 = vrot.lane.b32.xlu0 %v2765, 120
        %v3127 = vpop.permute.xlu0 %3126
        %3128 = vrot.lane.b32.xlu0 %v2766, 120
        %v3129 = vpop.permute.xlu0 %3128
        %v3131 = vsel %vm879, %v3115, 0
        %v3133 = vsel %vm879, %v3123, 0
        %v3135 = vsel %vm879, %v3125, 0
        %v3137 = vsel %vm879, %v3127, 0
        %v3139 = vsel %vm879, %v3129, 0
        %3141 = vmatprep.subr.mxu0 0.0
        %3142 = vmatpush1.xpose.msra.mxu0 %v3133
        %3143 = vmatprep.subr.mxu0 0.0
        %3144 = vmatpush1.xpose.msra.mxu0 %v3135
        %3145 = vmatprep.subr.mxu0 0.0
        %3146 = vmatpush1.xpose.msra.mxu0 %v3137
        %3147 = vmatprep.subr.mxu0 0.0
        %3148 = vmatpush1.xpose.msra.mxu0 %v3139
        %3149 = vmatprep.subr.mxu0 0.0
        %3150 = vmatpush1.xpose.msra.mxu0 0.0
        %3151 = vmatprep.subr.mxu0 0.0
        %3152 = vmatpush1.xpose.msra.mxu0 0.0
        %3153 = vmatprep.subr.mxu0 0.0
        %3154 = vmatpush1.xpose.msra.mxu0 0.0
        %3155 = vmatprep.subr.mxu0 0.0
        %3156 = vmatpush1.xpose.msra.mxu0 0.0
        %3157 = vmatprep.subr.mxu0 0.0
        %3158 = vmatpush1.xpose.msra.mxu0 0.0
        %3159 = vmatprep.subr.mxu0 0.0
        %3160 = vmatpush1.xpose.msra.mxu0 0.0
        %3161 = vmatprep.subr.mxu0 0.0
        %3162 = vmatpush1.xpose.msra.mxu0 0.0
        %3163 = vmatprep.subr.mxu0 0.0
        %3164 = vmatpush1.xpose.msra.mxu0 0.0
        %3165 = vmatprep.subr.mxu0 0.0
        %3166 = vmatpush1.xpose.msra.mxu0 0.0
        %3167 = vmatprep.subr.mxu0 0.0
        %3168 = vmatpush1.xpose.msra.mxu0 0.0
        %3169 = vmatprep.subr.mxu0 0.0
        %3170 = vmatpush1.xpose.msra.mxu0 0.0
        %3171 = vmatprep.subr.mxu0 0.0
        %3172 = vmatpush1.xpose.msra.mxu0 0.0
        %3173 = vmatprep.subr.mxu0 0.0
        %3174 = vmatpush1.xpose.msra.mxu0 0.0
        %3175 = vmatprep.subr.mxu0 0.0
        %3176 = vmatpush1.xpose.msra.mxu0 0.0
        %3177 = vmatprep.subr.mxu0 0.0
        %3178 = vmatpush1.xpose.msra.mxu0 0.0
        %3179 = vmatprep.subr.mxu0 0.0
        %3180 = vmatpush1.xpose.msra.mxu0 0.0
        %3181 = vmatprep.subr.mxu0 0.0
        %3182 = vmatpush1.xpose.msra.mxu0 0.0
        %3183 = vmatprep.subr.mxu0 0.0
        %3184 = vmatpush1.xpose.msra.mxu0 0.0
        %3185 = vmatprep.subr.mxu0 0.0
        %3186 = vmatpush1.xpose.msra.mxu0 0.0
        %3187 = vmatprep.subr.mxu0 0.0
        %3188 = vmatpush1.xpose.msra.mxu0 0.0
        %3189 = vmatprep.subr.mxu0 0.0
        %3190 = vmatpush1.xpose.msra.mxu0 0.0
        %3191 = vmatprep.subr.mxu0 0.0
        %3192 = vmatpush1.xpose.msra.mxu0 0.0
        %3193 = vmatprep.subr.mxu0 0.0
        %3194 = vmatpush1.xpose.msra.mxu0 0.0
        %3195 = vmatprep.subr.mxu0 0.0
        %3196 = vmatpush1.xpose.msra.mxu0 0.0
        %3197 = vmatprep.subr.mxu0 0.0
        %3198 = vmatpush1.xpose.msra.mxu0 0.0
        %3199 = vmatprep.subr.mxu0 0.0
        %3200 = vmatpush1.xpose.msra.mxu0 0.0
        %3201 = vmatprep.subr.mxu0 0.0
        %3202 = vmatpush1.xpose.msra.mxu0 0.0
        %3203 = vmatprep.subr.mxu0 0.0
        %3204 = vmatpush1.xpose.msra.mxu0 0.0
        %3205 = vmatprep.mubr.f32.mxu0 0.0
        %3206 = vmatmul.mubr.f32.gmra.mrb[0].mxu0 %v3131
        %v3207 = vpop.f32.mrb[0].mxu0
        %v3208 = vadd.f32 0.0, %v3207
        %v3209 = vpop.f32.mrb[0].mxu0
        %3210 = vdwg.mxu0
        %v3212 = vsel %vm879, %v2941, 0
        %v3214 = vsel %vm879, %v2763, 0
        %v3216 = vsel %vm879, %v2764, 0
        %v3218 = vsel %vm879, %v2765, 0
        %v3220 = vsel %vm879, %v2766, 0
        %3222 = vmatprep.subr.mxu0 0.0
        %3223 = vmatpush1.xpose.msra.mxu0 %v3214
        %3224 = vmatprep.subr.mxu0 0.0
        %3225 = vmatpush1.xpose.msra.mxu0 %v3216
        %3226 = vmatprep.subr.mxu0 0.0
        %3227 = vmatpush1.xpose.msra.mxu0 %v3218
        %3228 = vmatprep.subr.mxu0 0.0
        %3229 = vmatpush1.xpose.msra.mxu0 %v3220
        %3230 = vmatprep.subr.mxu0 0.0
        %3231 = vmatpush1.xpose.msra.mxu0 0.0
        %3232 = vmatprep.subr.mxu0 0.0
        %3233 = vmatpush1.xpose.msra.mxu0 0.0
        %3234 = vmatprep.subr.mxu0 0.0
        %3235 = vmatpush1.xpose.msra.mxu0 0.0
        %3236 = vmatprep.subr.mxu0 0.0
        %3237 = vmatpush1.xpose.msra.mxu0 0.0
        %3238 = vmatprep.subr.mxu0 0.0
        %3239 = vmatpush1.xpose.msra.mxu0 0.0
        %3240 = vmatprep.subr.mxu0 0.0
        %3241 = vmatpush1.xpose.msra.mxu0 0.0
        %3242 = vmatprep.subr.mxu0 0.0
        %3243 = vmatpush1.xpose.msra.mxu0 0.0
        %3244 = vmatprep.subr.mxu0 0.0
        %3245 = vmatpush1.xpose.msra.mxu0 0.0
        %3246 = vmatprep.subr.mxu0 0.0
        %3247 = vmatpush1.xpose.msra.mxu0 0.0
        %3248 = vmatprep.subr.mxu0 0.0
        %3249 = vmatpush1.xpose.msra.mxu0 0.0
        %3250 = vmatprep.subr.mxu0 0.0
        %3251 = vmatpush1.xpose.msra.mxu0 0.0
        %3252 = vmatprep.subr.mxu0 0.0
        %3253 = vmatpush1.xpose.msra.mxu0 0.0
        %3254 = vmatprep.subr.mxu0 0.0
        %3255 = vmatpush1.xpose.msra.mxu0 0.0
        %3256 = vmatprep.subr.mxu0 0.0
        %3257 = vmatpush1.xpose.msra.mxu0 0.0
        %3258 = vmatprep.subr.mxu0 0.0
        %3259 = vmatpush1.xpose.msra.mxu0 0.0
        %3260 = vmatprep.subr.mxu0 0.0
        %3261 = vmatpush1.xpose.msra.mxu0 0.0
        %3262 = vmatprep.subr.mxu0 0.0
        %3263 = vmatpush1.xpose.msra.mxu0 0.0
        %3264 = vmatprep.subr.mxu0 0.0
        %3265 = vmatpush1.xpose.msra.mxu0 0.0
        %3266 = vmatprep.subr.mxu0 0.0
        %3267 = vmatpush1.xpose.msra.mxu0 0.0
        %3268 = vmatprep.subr.mxu0 0.0
        %3269 = vmatpush1.xpose.msra.mxu0 0.0
        %3270 = vmatprep.subr.mxu0 0.0
        %3271 = vmatpush1.xpose.msra.mxu0 0.0
        %3272 = vmatprep.subr.mxu0 0.0
        %3273 = vmatpush1.xpose.msra.mxu0 0.0
        %3274 = vmatprep.subr.mxu0 0.0
        %3275 = vmatpush1.xpose.msra.mxu0 0.0
        %3276 = vmatprep.subr.mxu0 0.0
        %3277 = vmatpush1.xpose.msra.mxu0 0.0
        %3278 = vmatprep.subr.mxu0 0.0
        %3279 = vmatpush1.xpose.msra.mxu0 0.0
        %3280 = vmatprep.subr.mxu0 0.0
        %3281 = vmatpush1.xpose.msra.mxu0 0.0
        %3282 = vmatprep.subr.mxu0 0.0
        %3283 = vmatpush1.xpose.msra.mxu0 0.0
        %3284 = vmatprep.subr.mxu0 0.0
        %3285 = vmatpush1.xpose.msra.mxu0 0.0
        %3286 = vmatprep.mubr.f32.mxu0 0.0
        %3287 = vmatmul.mubr.f32.gmra.mrb[0].mxu0 %v3212
        %v3288 = vpop.f32.mrb[0].mxu0
        %v3289 = vadd.f32 %v3208, %v3288
        %v3290 = vpop.f32.mrb[0].mxu0
        %3291 = vdwg.mxu0
        %3292 = vrot.lane.b32.xlu0 %v2677, 112
        %v3293 = vpop.permute.xlu0 %3292
        %3294 = vrot.lane.b32.xlu0 %v2753, 80
        %v3295 = vpop.permute.xlu0 %3294
        %3296 = vrot.lane.b32.xlu0 %v2758, 80
        %v3297 = vpop.permute.xlu0 %3296
        %v3298 = vsel %vm879, %v3293, 0
        %v3300 = vsel %vm879, %v3295, 0
        %v3302 = vsel %vm879, %v3297, 0
        %3304 = vmatprep.subr.mxu0 0.0
        %3305 = vmatpush1.xpose.msra.mxu0 %v3300
        %3306 = vmatprep.subr.mxu0 0.0
        %3307 = vmatpush1.xpose.msra.mxu0 %v3302
        %3308 = vmatprep.subr.mxu0 0.0
        %3309 = vmatpush1.xpose.msra.mxu0 0.0
        %3310 = vmatprep.subr.mxu0 0.0
        %3311 = vmatpush1.xpose.msra.mxu0 0.0
        %3312 = vmatprep.subr.mxu0 0.0
        %3313 = vmatpush1.xpose.msra.mxu0 0.0
        %3314 = vmatprep.subr.mxu0 0.0
        %3315 = vmatpush1.xpose.msra.mxu0 0.0
        %3316 = vmatprep.subr.mxu0 0.0
        %3317 = vmatpush1.xpose.msra.mxu0 0.0
        %3318 = vmatprep.subr.mxu0 0.0
        %3319 = vmatpush1.xpose.msra.mxu0 0.0
        %3320 = vmatprep.subr.mxu0 0.0
        %3321 = vmatpush1.xpose.msra.mxu0 0.0
        %3322 = vmatprep.subr.mxu0 0.0
        %3323 = vmatpush1.xpose.msra.mxu0 0.0
        %3324 = vmatprep.subr.mxu0 0.0
        %3325 = vmatpush1.xpose.msra.mxu0 0.0
        %3326 = vmatprep.subr.mxu0 0.0
        %3327 = vmatpush1.xpose.msra.mxu0 0.0
        %3328 = vmatprep.subr.mxu0 0.0
        %3329 = vmatpush1.xpose.msra.mxu0 0.0
        %3330 = vmatprep.subr.mxu0 0.0
        %3331 = vmatpush1.xpose.msra.mxu0 0.0
        %3332 = vmatprep.subr.mxu0 0.0
        %3333 = vmatpush1.xpose.msra.mxu0 0.0
        %3334 = vmatprep.subr.mxu0 0.0
        %3335 = vmatpush1.xpose.msra.mxu0 0.0
        %3336 = vmatprep.subr.mxu0 0.0
        %3337 = vmatpush1.xpose.msra.mxu0 0.0
        %3338 = vmatprep.subr.mxu0 0.0
        %3339 = vmatpush1.xpose.msra.mxu0 0.0
        %3340 = vmatprep.subr.mxu0 0.0
        %3341 = vmatpush1.xpose.msra.mxu0 0.0
        %3342 = vmatprep.subr.mxu0 0.0
        %3343 = vmatpush1.xpose.msra.mxu0 0.0
        %3344 = vmatprep.subr.mxu0 0.0
        %3345 = vmatpush1.xpose.msra.mxu0 0.0
        %3346 = vmatprep.subr.mxu0 0.0
        %3347 = vmatpush1.xpose.msra.mxu0 0.0
        %3348 = vmatprep.subr.mxu0 0.0
        %3349 = vmatpush1.xpose.msra.mxu0 0.0
        %3350 = vmatprep.subr.mxu0 0.0
        %3351 = vmatpush1.xpose.msra.mxu0 0.0
        %3352 = vmatprep.subr.mxu0 0.0
        %3353 = vmatpush1.xpose.msra.mxu0 0.0
        %3354 = vmatprep.subr.mxu0 0.0
        %3355 = vmatpush1.xpose.msra.mxu0 0.0
        %3356 = vmatprep.subr.mxu0 0.0
        %3357 = vmatpush1.xpose.msra.mxu0 0.0
        %3358 = vmatprep.subr.mxu0 0.0
        %3359 = vmatpush1.xpose.msra.mxu0 0.0
        %3360 = vmatprep.subr.mxu0 0.0
        %3361 = vmatpush1.xpose.msra.mxu0 0.0
        %3362 = vmatprep.subr.mxu0 0.0
        %3363 = vmatpush1.xpose.msra.mxu0 0.0
        %3364 = vmatprep.subr.mxu0 0.0
        %3365 = vmatpush1.xpose.msra.mxu0 0.0
        %3366 = vmatprep.subr.mxu0 0.0
        %3367 = vmatpush1.xpose.msra.mxu0 0.0
        %3368 = vmatprep.mubr.f32.mxu0 0.0
        %3369 = vmatmul.mubr.f32.gmra.mrb[0].mxu0 %v3298
        %v3370 = vpop.f32.mrb[0].mxu0
        %v3371 = vadd.f32 0.0, %v3370
        %v3372 = vpop.f32.mrb[0].mxu0
        %3373 = vdwg.mxu0
        %v3374 = vmul.f32 %v3371, 0.35355338
        %v3375 = vadd.f32 %v3374, %v2762
        %v3376 = vsel %vm2853, %v3375, -inf
        %3377 = vmax.xlane.f32.xlu0 %v3376
        %v3378 = vpop.xlane.xlu0 %3377
        %v3379 = vsub.f32 %v3375, %v3378
        %v3380 = vmul.f32 %v3379, 1.442695
        %v3381 = vpow.pop %v3380
        %v3382 = vsel %vm2853, %v3381, 0.0
        %3383 = vadd.xlane.f32.xlu0 %v3382
        %v3384 = vpop.xlane.xlu0 %3383
        %v3385 = vrcp.pop %v3384
        %v3386 = vmul.f32 %v3381, %v3385
        %3387 = vrot.lane.b32.xlu0 %v2753, 48
        %v3388 = vpop.permute.xlu0 %3387
        %3389 = vrot.lane.b32.xlu0 %v2758, 48
        %v3390 = vpop.permute.xlu0 %3389
        %v3394 = vsel %vm967, %v3386, 0
        %3396 = vmatprep.subr.mxu0 0.0
        %3397 = vmatpush1.msra.mxu0 %v3388
        %3398 = vmatprep.subr.mxu0 0.0
        %3399 = vmatpush1.msra.mxu0 %v3390
        %3400 = vmatprep.subr.mxu0 0.0
        %3401 = vmatpush1.msra.mxu0 0.0
        %3402 = vmatprep.subr.mxu0 0.0
        %3403 = vmatpush1.msra.mxu0 0.0
        %3404 = vmatprep.subr.mxu0 0.0
        %3405 = vmatpush1.msra.mxu0 0.0
        %3406 = vmatprep.subr.mxu0 0.0
        %3407 = vmatpush1.msra.mxu0 0.0
        %3408 = vmatprep.subr.mxu0 0.0
        %3409 = vmatpush1.msra.mxu0 0.0
        %3410 = vmatprep.subr.mxu0 0.0
        %3411 = vmatpush1.msra.mxu0 0.0
        %3412 = vmatprep.subr.mxu0 0.0
        %3413 = vmatpush1.msra.mxu0 0.0
        %3414 = vmatprep.subr.mxu0 0.0
        %3415 = vmatpush1.msra.mxu0 0.0
        %3416 = vmatprep.subr.mxu0 0.0
        %3417 = vmatpush1.msra.mxu0 0.0
        %3418 = vmatprep.subr.mxu0 0.0
        %3419 = vmatpush1.msra.mxu0 0.0
        %3420 = vmatprep.subr.mxu0 0.0
        %3421 = vmatpush1.msra.mxu0 0.0
        %3422 = vmatprep.subr.mxu0 0.0
        %3423 = vmatpush1.msra.mxu0 0.0
        %3424 = vmatprep.subr.mxu0 0.0
        %3425 = vmatpush1.msra.mxu0 0.0
        %3426 = vmatprep.subr.mxu0 0.0
        %3427 = vmatpush1.msra.mxu0 0.0
        %3428 = vmatprep.subr.mxu0 0.0
        %3429 = vmatpush1.msra.mxu0 0.0
        %3430 = vmatprep.subr.mxu0 0.0
        %3431 = vmatpush1.msra.mxu0 0.0
        %3432 = vmatprep.subr.mxu0 0.0
        %3433 = vmatpush1.msra.mxu0 0.0
        %3434 = vmatprep.subr.mxu0 0.0
        %3435 = vmatpush1.msra.mxu0 0.0
        %3436 = vmatprep.subr.mxu0 0.0
        %3437 = vmatpush1.msra.mxu0 0.0
        %3438 = vmatprep.subr.mxu0 0.0
        %3439 = vmatpush1.msra.mxu0 0.0
        %3440 = vmatprep.subr.mxu0 0.0
        %3441 = vmatpush1.msra.mxu0 0.0
        %3442 = vmatprep.subr.mxu0 0.0
        %3443 = vmatpush1.msra.mxu0 0.0
        %3444 = vmatprep.subr.mxu0 0.0
        %3445 = vmatpush1.msra.mxu0 0.0
        %3446 = vmatprep.subr.mxu0 0.0
        %3447 = vmatpush1.msra.mxu0 0.0
        %3448 = vmatprep.subr.mxu0 0.0
        %3449 = vmatpush1.msra.mxu0 0.0
        %3450 = vmatprep.subr.mxu0 0.0
        %3451 = vmatpush1.msra.mxu0 0.0
        %3452 = vmatprep.subr.mxu0 0.0
        %3453 = vmatpush1.msra.mxu0 0.0
        %3454 = vmatprep.subr.mxu0 0.0
        %3455 = vmatpush1.msra.mxu0 0.0
        %3456 = vmatprep.subr.mxu0 0.0
        %3457 = vmatpush1.msra.mxu0 0.0
        %3458 = vmatprep.subr.mxu0 0.0
        %3459 = vmatpush1.msra.mxu0 0.0
        %3460 = vmatprep.mubr.f32.mxu0 0.0
        %3461 = vmatmul.mubr.f32.gmra.mrb[0].mxu0 %v3394
        %v3462 = vpop.f32.mrb[0].mxu0
        %v3463 = vadd.f32 0.0, %v3462
        %v3464 = vpop.f32.mrb[0].mxu0
        %3465 = vdwg.mxu0
        %3466 = vrot.lane.b32.xlu0 %v2763, 112
        %v3467 = vpop.permute.xlu0 %3466
        %3468 = vrot.lane.b32.xlu0 %v2764, 112
        %v3469 = vpop.permute.xlu0 %3468
        %3470 = vrot.lane.b32.xlu0 %v2765, 112
        %v3471 = vpop.permute.xlu0 %3470
        %3472 = vrot.lane.b32.xlu0 %v2766, 112
        %v3473 = vpop.permute.xlu0 %3472
        %v3475 = vsel %vm879, %v3463, 0
        %v3477 = vsel %vm879, %v3467, 0
        %v3479 = vsel %vm879, %v3469, 0
        %v3481 = vsel %vm879, %v3471, 0
        %v3483 = vsel %vm879, %v3473, 0
        %3485 = vmatprep.subr.mxu0 0.0
        %3486 = vmatpush1.xpose.msra.mxu0 %v3477
        %3487 = vmatprep.subr.mxu0 0.0
        %3488 = vmatpush1.xpose.msra.mxu0 %v3479
        %3489 = vmatprep.subr.mxu0 0.0
        %3490 = vmatpush1.xpose.msra.mxu0 %v3481
        %3491 = vmatprep.subr.mxu0 0.0
        %3492 = vmatpush1.xpose.msra.mxu0 %v3483
        %3493 = vmatprep.subr.mxu0 0.0
        %3494 = vmatpush1.xpose.msra.mxu0 0.0
        %3495 = vmatprep.subr.mxu0 0.0
        %3496 = vmatpush1.xpose.msra.mxu0 0.0
        %3497 = vmatprep.subr.mxu0 0.0
        %3498 = vmatpush1.xpose.msra.mxu0 0.0
        %3499 = vmatprep.subr.mxu0 0.0
        %3500 = vmatpush1.xpose.msra.mxu0 0.0
        %3501 = vmatprep.subr.mxu0 0.0
        %3502 = vmatpush1.xpose.msra.mxu0 0.0
        %3503 = vmatprep.subr.mxu0 0.0
        %3504 = vmatpush1.xpose.msra.mxu0 0.0
        %3505 = vmatprep.subr.mxu0 0.0
        %3506 = vmatpush1.xpose.msra.mxu0 0.0
        %3507 = vmatprep.subr.mxu0 0.0
        %3508 = vmatpush1.xpose.msra.mxu0 0.0
        %3509 = vmatprep.subr.mxu0 0.0
        %3510 = vmatpush1.xpose.msra.mxu0 0.0
        %3511 = vmatprep.subr.mxu0 0.0
        %3512 = vmatpush1.xpose.msra.mxu0 0.0
        %3513 = vmatprep.subr.mxu0 0.0
        %3514 = vmatpush1.xpose.msra.mxu0 0.0
        %3515 = vmatprep.subr.mxu0 0.0
        %3516 = vmatpush1.xpose.msra.mxu0 0.0
        %3517 = vmatprep.subr.mxu0 0.0
        %3518 = vmatpush1.xpose.msra.mxu0 0.0
        %3519 = vmatprep.subr.mxu0 0.0
        %3520 = vmatpush1.xpose.msra.mxu0 0.0
        %3521 = vmatprep.subr.mxu0 0.0
        %3522 = vmatpush1.xpose.msra.mxu0 0.0
        %3523 = vmatprep.subr.mxu0 0.0
        %3524 = vmatpush1.xpose.msra.mxu0 0.0
        %3525 = vmatprep.subr.mxu0 0.0
        %3526 = vmatpush1.xpose.msra.mxu0 0.0
        %3527 = vmatprep.subr.mxu0 0.0
        %3528 = vmatpush1.xpose.msra.mxu0 0.0
        %3529 = vmatprep.subr.mxu0 0.0
        %3530 = vmatpush1.xpose.msra.mxu0 0.0
        %3531 = vmatprep.subr.mxu0 0.0
        %3532 = vmatpush1.xpose.msra.mxu0 0.0
        %3533 = vmatprep.subr.mxu0 0.0
        %3534 = vmatpush1.xpose.msra.mxu0 0.0
        %3535 = vmatprep.subr.mxu0 0.0
        %3536 = vmatpush1.xpose.msra.mxu0 0.0
        %3537 = vmatprep.subr.mxu0 0.0
        %3538 = vmatpush1.xpose.msra.mxu0 0.0
        %3539 = vmatprep.subr.mxu0 0.0
        %3540 = vmatpush1.xpose.msra.mxu0 0.0
        %3541 = vmatprep.subr.mxu0 0.0
        %3542 = vmatpush1.xpose.msra.mxu0 0.0
        %3543 = vmatprep.subr.mxu0 0.0
        %3544 = vmatpush1.xpose.msra.mxu0 0.0
        %3545 = vmatprep.subr.mxu0 0.0
        %3546 = vmatpush1.xpose.msra.mxu0 0.0
        %3547 = vmatprep.subr.mxu0 0.0
        %3548 = vmatpush1.xpose.msra.mxu0 0.0
        %3549 = vmatprep.mubr.f32.mxu0 0.0
        %3550 = vmatmul.mubr.f32.gmra.mrb[0].mxu0 %v3475
        %v3551 = vpop.f32.mrb[0].mxu0
        %v3552 = vadd.f32 0.0, %v3551
        %v3553 = vpop.f32.mrb[0].mxu0
        %3554 = vdwg.mxu0
        %v3555 = vadd.f32 %v3289, %v3552
        %3556 = vrot.lane.b32.xlu0 %v2677, 104
        %v3557 = vpop.permute.xlu0 %3556
        %3558 = vrot.lane.b32.xlu0 %v2753, 72
        %v3559 = vpop.permute.xlu0 %3558
        %3560 = vrot.lane.b32.xlu0 %v2758, 72
        %v3561 = vpop.permute.xlu0 %3560
        %v3562 = vsel %vm879, %v3557, 0
        %v3564 = vsel %vm879, %v3559, 0
        %v3566 = vsel %vm879, %v3561, 0
        %3568 = vmatprep.subr.mxu0 0.0
        %3569 = vmatpush1.xpose.msra.mxu0 %v3564
        %3570 = vmatprep.subr.mxu0 0.0
        %3571 = vmatpush1.xpose.msra.mxu0 %v3566
        %3572 = vmatprep.subr.mxu0 0.0
        %3573 = vmatpush1.xpose.msra.mxu0 0.0
        %3574 = vmatprep.subr.mxu0 0.0
        %3575 = vmatpush1.xpose.msra.mxu0 0.0
        %3576 = vmatprep.subr.mxu0 0.0
        %3577 = vmatpush1.xpose.msra.mxu0 0.0
        %3578 = vmatprep.subr.mxu0 0.0
        %3579 = vmatpush1.xpose.msra.mxu0 0.0
        %3580 = vmatprep.subr.mxu0 0.0
        %3581 = vmatpush1.xpose.msra.mxu0 0.0
        %3582 = vmatprep.subr.mxu0 0.0
        %3583 = vmatpush1.xpose.msra.mxu0 0.0
        %3584 = vmatprep.subr.mxu0 0.0
        %3585 = vmatpush1.xpose.msra.mxu0 0.0
        %3586 = vmatprep.subr.mxu0 0.0
        %3587 = vmatpush1.xpose.msra.mxu0 0.0
        %3588 = vmatprep.subr.mxu0 0.0
        %3589 = vmatpush1.xpose.msra.mxu0 0.0
        %3590 = vmatprep.subr.mxu0 0.0
        %3591 = vmatpush1.xpose.msra.mxu0 0.0
        %3592 = vmatprep.subr.mxu0 0.0
        %3593 = vmatpush1.xpose.msra.mxu0 0.0
        %3594 = vmatprep.subr.mxu0 0.0
        %3595 = vmatpush1.xpose.msra.mxu0 0.0
        %3596 = vmatprep.subr.mxu0 0.0
        %3597 = vmatpush1.xpose.msra.mxu0 0.0
        %3598 = vmatprep.subr.mxu0 0.0
        %3599 = vmatpush1.xpose.msra.mxu0 0.0
        %3600 = vmatprep.subr.mxu0 0.0
        %3601 = vmatpush1.xpose.msra.mxu0 0.0
        %3602 = vmatprep.subr.mxu0 0.0
        %3603 = vmatpush1.xpose.msra.mxu0 0.0
        %3604 = vmatprep.subr.mxu0 0.0
        %3605 = vmatpush1.xpose.msra.mxu0 0.0
        %3606 = vmatprep.subr.mxu0 0.0
        %3607 = vmatpush1.xpose.msra.mxu0 0.0
        %3608 = vmatprep.subr.mxu0 0.0
        %3609 = vmatpush1.xpose.msra.mxu0 0.0
        %3610 = vmatprep.subr.mxu0 0.0
        %3611 = vmatpush1.xpose.msra.mxu0 0.0
        %3612 = vmatprep.subr.mxu0 0.0
        %3613 = vmatpush1.xpose.msra.mxu0 0.0
        %3614 = vmatprep.subr.mxu0 0.0
        %3615 = vmatpush1.xpose.msra.mxu0 0.0
        %3616 = vmatprep.subr.mxu0 0.0
        %3617 = vmatpush1.xpose.msra.mxu0 0.0
        %3618 = vmatprep.subr.mxu0 0.0
        %3619 = vmatpush1.xpose.msra.mxu0 0.0
        %3620 = vmatprep.subr.mxu0 0.0
        %3621 = vmatpush1.xpose.msra.mxu0 0.0
        %3622 = vmatprep.subr.mxu0 0.0
        %3623 = vmatpush1.xpose.msra.mxu0 0.0
        %3624 = vmatprep.subr.mxu0 0.0
        %3625 = vmatpush1.xpose.msra.mxu0 0.0
        %3626 = vmatprep.subr.mxu0 0.0
        %3627 = vmatpush1.xpose.msra.mxu0 0.0
        %3628 = vmatprep.subr.mxu0 0.0
        %3629 = vmatpush1.xpose.msra.mxu0 0.0
        %3630 = vmatprep.subr.mxu0 0.0
        %3631 = vmatpush1.xpose.msra.mxu0 0.0
        %3632 = vmatprep.mubr.f32.mxu0 0.0
        %3633 = vmatmul.mubr.f32.gmra.mrb[0].mxu0 %v3562
        %v3634 = vpop.f32.mrb[0].mxu0
        %v3635 = vadd.f32 0.0, %v3634
        %v3636 = vpop.f32.mrb[0].mxu0
        %3637 = vdwg.mxu0
        %v3638 = vmul.f32 %v3635, 0.35355338
        %v3639 = vadd.f32 %v3638, %v2762
        %v3640 = vsel %vm2853, %v3639, -inf
        %3641 = vmax.xlane.f32.xlu0 %v3640
        %v3642 = vpop.xlane.xlu0 %3641
        %v3643 = vsub.f32 %v3639, %v3642
        %v3644 = vmul.f32 %v3643, 1.442695
        %v3645 = vpow.pop %v3644
        %v3646 = vsel %vm2853, %v3645, 0.0
        %3647 = vadd.xlane.f32.xlu0 %v3646
        %v3648 = vpop.xlane.xlu0 %3647
        %v3649 = vrcp.pop %v3648
        %v3650 = vmul.f32 %v3645, %v3649
        %3651 = vrot.lane.b32.xlu0 %v2753, 40
        %v3652 = vpop.permute.xlu0 %3651
        %3653 = vrot.lane.b32.xlu0 %v2758, 40
        %v3654 = vpop.permute.xlu0 %3653
        %v3658 = vsel %vm967, %v3650, 0
        %3660 = vmatprep.subr.mxu0 0.0
        %3661 = vmatpush1.msra.mxu0 %v3652
        %3662 = vmatprep.subr.mxu0 0.0
        %3663 = vmatpush1.msra.mxu0 %v3654
        %3664 = vmatprep.subr.mxu0 0.0
        %3665 = vmatpush1.msra.mxu0 0.0
        %3666 = vmatprep.subr.mxu0 0.0
        %3667 = vmatpush1.msra.mxu0 0.0
        %3668 = vmatprep.subr.mxu0 0.0
        %3669 = vmatpush1.msra.mxu0 0.0
        %3670 = vmatprep.subr.mxu0 0.0
        %3671 = vmatpush1.msra.mxu0 0.0
        %3672 = vmatprep.subr.mxu0 0.0
        %3673 = vmatpush1.msra.mxu0 0.0
        %3674 = vmatprep.subr.mxu0 0.0
        %3675 = vmatpush1.msra.mxu0 0.0
        %3676 = vmatprep.subr.mxu0 0.0
        %3677 = vmatpush1.msra.mxu0 0.0
        %3678 = vmatprep.subr.mxu0 0.0
        %3679 = vmatpush1.msra.mxu0 0.0
        %3680 = vmatprep.subr.mxu0 0.0
        %3681 = vmatpush1.msra.mxu0 0.0
        %3682 = vmatprep.subr.mxu0 0.0
        %3683 = vmatpush1.msra.mxu0 0.0
        %3684 = vmatprep.subr.mxu0 0.0
        %3685 = vmatpush1.msra.mxu0 0.0
        %3686 = vmatprep.subr.mxu0 0.0
        %3687 = vmatpush1.msra.mxu0 0.0
        %3688 = vmatprep.subr.mxu0 0.0
        %3689 = vmatpush1.msra.mxu0 0.0
        %3690 = vmatprep.subr.mxu0 0.0
        %3691 = vmatpush1.msra.mxu0 0.0
        %3692 = vmatprep.subr.mxu0 0.0
        %3693 = vmatpush1.msra.mxu0 0.0
        %3694 = vmatprep.subr.mxu0 0.0
        %3695 = vmatpush1.msra.mxu0 0.0
        %3696 = vmatprep.subr.mxu0 0.0
        %3697 = vmatpush1.msra.mxu0 0.0
        %3698 = vmatprep.subr.mxu0 0.0
        %3699 = vmatpush1.msra.mxu0 0.0
        %3700 = vmatprep.subr.mxu0 0.0
        %3701 = vmatpush1.msra.mxu0 0.0
        %3702 = vmatprep.subr.mxu0 0.0
        %3703 = vmatpush1.msra.mxu0 0.0
        %3704 = vmatprep.subr.mxu0 0.0
        %3705 = vmatpush1.msra.mxu0 0.0
        %3706 = vmatprep.subr.mxu0 0.0
        %3707 = vmatpush1.msra.mxu0 0.0
        %3708 = vmatprep.subr.mxu0 0.0
        %3709 = vmatpush1.msra.mxu0 0.0
        %3710 = vmatprep.subr.mxu0 0.0
        %3711 = vmatpush1.msra.mxu0 0.0
        %3712 = vmatprep.subr.mxu0 0.0
        %3713 = vmatpush1.msra.mxu0 0.0
        %3714 = vmatprep.subr.mxu0 0.0
        %3715 = vmatpush1.msra.mxu0 0.0
        %3716 = vmatprep.subr.mxu0 0.0
        %3717 = vmatpush1.msra.mxu0 0.0
        %3718 = vmatprep.subr.mxu0 0.0
        %3719 = vmatpush1.msra.mxu0 0.0
        %3720 = vmatprep.subr.mxu0 0.0
        %3721 = vmatpush1.msra.mxu0 0.0
        %3722 = vmatprep.subr.mxu0 0.0
        %3723 = vmatpush1.msra.mxu0 0.0
        %3724 = vmatprep.mubr.f32.mxu0 0.0
        %3725 = vmatmul.mubr.f32.gmra.mrb[0].mxu0 %v3658
        %v3726 = vpop.f32.mrb[0].mxu0
        %v3727 = vadd.f32 0.0, %v3726
        %v3728 = vpop.f32.mrb[0].mxu0
        %3729 = vdwg.mxu0
        %3730 = vrot.lane.b32.xlu0 %v2763, 104
        %v3731 = vpop.permute.xlu0 %3730
        %3732 = vrot.lane.b32.xlu0 %v2764, 104
        %v3733 = vpop.permute.xlu0 %3732
        %3734 = vrot.lane.b32.xlu0 %v2765, 104
        %v3735 = vpop.permute.xlu0 %3734
        %3736 = vrot.lane.b32.xlu0 %v2766, 104
        %v3737 = vpop.permute.xlu0 %3736
        %v3739 = vsel %vm879, %v3727, 0
        %v3741 = vsel %vm879, %v3731, 0
        %v3743 = vsel %vm879, %v3733, 0
        %v3745 = vsel %vm879, %v3735, 0
        %v3747 = vsel %vm879, %v3737, 0
        %3749 = vmatprep.subr.mxu0 0.0
        %3750 = vmatpush1.xpose.msra.mxu0 %v3741
        %3751 = vmatprep.subr.mxu0 0.0
        %3752 = vmatpush1.xpose.msra.mxu0 %v3743
        %3753 = vmatprep.subr.mxu0 0.0
        %3754 = vmatpush1.xpose.msra.mxu0 %v3745
        %3755 = vmatprep.subr.mxu0 0.0
        %3756 = vmatpush1.xpose.msra.mxu0 %v3747
        %3757 = vmatprep.subr.mxu0 0.0
        %3758 = vmatpush1.xpose.msra.mxu0 0.0
        %3759 = vmatprep.subr.mxu0 0.0
        %3760 = vmatpush1.xpose.msra.mxu0 0.0
        %3761 = vmatprep.subr.mxu0 0.0
        %3762 = vmatpush1.xpose.msra.mxu0 0.0
        %3763 = vmatprep.subr.mxu0 0.0
        %3764 = vmatpush1.xpose.msra.mxu0 0.0
        %3765 = vmatprep.subr.mxu0 0.0
        %3766 = vmatpush1.xpose.msra.mxu0 0.0
        %3767 = vmatprep.subr.mxu0 0.0
        %3768 = vmatpush1.xpose.msra.mxu0 0.0
        %3769 = vmatprep.subr.mxu0 0.0
        %3770 = vmatpush1.xpose.msra.mxu0 0.0
        %3771 = vmatprep.subr.mxu0 0.0
        %3772 = vmatpush1.xpose.msra.mxu0 0.0
        %3773 = vmatprep.subr.mxu0 0.0
        %3774 = vmatpush1.xpose.msra.mxu0 0.0
        %3775 = vmatprep.subr.mxu0 0.0
        %3776 = vmatpush1.xpose.msra.mxu0 0.0
        %3777 = vmatprep.subr.mxu0 0.0
        %3778 = vmatpush1.xpose.msra.mxu0 0.0
        %3779 = vmatprep.subr.mxu0 0.0
        %3780 = vmatpush1.xpose.msra.mxu0 0.0
        %3781 = vmatprep.subr.mxu0 0.0
        %3782 = vmatpush1.xpose.msra.mxu0 0.0
        %3783 = vmatprep.subr.mxu0 0.0
        %3784 = vmatpush1.xpose.msra.mxu0 0.0
        %3785 = vmatprep.subr.mxu0 0.0
        %3786 = vmatpush1.xpose.msra.mxu0 0.0
        %3787 = vmatprep.subr.mxu0 0.0
        %3788 = vmatpush1.xpose.msra.mxu0 0.0
        %3789 = vmatprep.subr.mxu0 0.0
        %3790 = vmatpush1.xpose.msra.mxu0 0.0
        %3791 = vmatprep.subr.mxu0 0.0
        %3792 = vmatpush1.xpose.msra.mxu0 0.0
        %3793 = vmatprep.subr.mxu0 0.0
        %3794 = vmatpush1.xpose.msra.mxu0 0.0
        %3795 = vmatprep.subr.mxu0 0.0
        %3796 = vmatpush1.xpose.msra.mxu0 0.0
        %3797 = vmatprep.subr.mxu0 0.0
        %3798 = vmatpush1.xpose.msra.mxu0 0.0
        %3799 = vmatprep.subr.mxu0 0.0
        %3800 = vmatpush1.xpose.msra.mxu0 0.0
        %3801 = vmatprep.subr.mxu0 0.0
        %3802 = vmatpush1.xpose.msra.mxu0 0.0
        %3803 = vmatprep.subr.mxu0 0.0
        %3804 = vmatpush1.xpose.msra.mxu0 0.0
        %3805 = vmatprep.subr.mxu0 0.0
        %3806 = vmatpush1.xpose.msra.mxu0 0.0
        %3807 = vmatprep.subr.mxu0 0.0
        %3808 = vmatpush1.xpose.msra.mxu0 0.0
        %3809 = vmatprep.subr.mxu0 0.0
        %3810 = vmatpush1.xpose.msra.mxu0 0.0
        %3811 = vmatprep.subr.mxu0 0.0
        %3812 = vmatpush1.xpose.msra.mxu0 0.0
        %3813 = vmatprep.mubr.f32.mxu0 0.0
        %3814 = vmatmul.mubr.f32.gmra.mrb[0].mxu0 %v3739
        %v3815 = vpop.f32.mrb[0].mxu0
        %v3816 = vadd.f32 0.0, %v3815
        %v3817 = vpop.f32.mrb[0].mxu0
        %3818 = vdwg.mxu0
        %v3819 = vadd.f32 %v3555, %v3816
        %v3821 = vlaneseq
        %v3822 = vshrl.u32 %v3821, 7
        %v3823 = vsub.s32 0, %v3822
        %v3824 = vrot.slane %v2767, %v3823
        %v3826 = vadd.f32 %v3819, %v3824
        %v3827 = vadd.f32 %v2489, %v3826
        %v3828 = vld [vmem:[%s20] sm:$0x1]
        %v3829 = vld [vmem:[%s21] sm:$0x1]
        %v3831 = vlaneseq
        %v3832 = vshrl.u32 %v3831, 7
        %v3833 = vsub.s32 0, %v3832
        %v3834 = vrot.slane %v3828, %v3833
        %v3836 = vmul.f32 %v2546, %v3834
        %v3837 = vmul.f32 %v2547, %v3834
        %v3839 = vlaneseq
        %v3840 = vshrl.u32 %v3839, 7
        %v3841 = vsub.s32 0, %v3840
        %v3842 = vrot.slane %v3829, %v3841
        %v3844 = vadd.f32 %v3836, %v3842
        %v3845 = vadd.f32 %v3837, %v3842
        %3846 = vst.msk [vmem:[%s704] sm:$0xff] %vm750, %v3844
        %3847 = vst.msk [vmem:[%s704 + $0x8] sm:$0xff] %vm750, %v3845
        %v3848 = vsel %vm2494, %v3827, 0.0
        %3849 = vadd.xlane.f32.xlu0 %v3848
        %v3850 = vpop.xlane.xlu0 %3849
        %v3851 = vmul.f32 %v3850, %v2095
        %v3852 = vsub.f32 %v3827, %v3851
        %v3853 = vmul.f32 %v3852, %v3852
        %v3854 = vsel %vm2494, %v3853, 0.0
        %3855 = vadd.xlane.f32.xlu0 %v3854
        %v3856 = vpop.xlane.xlu0 %3855
        %v3857 = vmul.f32 %v3856, %v2095
        %v3858 = vadd.f32 %v3857, 1e-06
        %v3859 = vrsqrt.pop %v3858
        %v3860 = vmul.f32 %v3852, %v3859
        %v3861 = vmul.f32 %v3860, %v3834
        %v3862 = vadd.f32 %v3861, %v3842
        %3863 = vst.msk [vmem:[%s719] sm:$0x7] %vm2494, %v3862
        %s3864 = sand.u32 %s513, 1
        %s3865 = scalar_lea.sflag [#allocation3], %s3864
        %s3866 = sand.u32 %s513, 1
        %s3867 = smul.addr %s3866, 16
        %s3868 = scalar_lea.vmem [#allocation2], %s3867
        %p3869 = scmp.lt.s32.totalorder %s38, 1
        %s3870 = scalar_select %p3869, %s38, 1
        %s3871 = smul.addr %s3870, 4
        %s3872 = scalar_lea.vmem %s23, %s3871
        // Predicated region
        $region109: #{_lambda_.1} parent=107 // pred_check
          %p3873 = pneg %p523
        $region110: #{_lambda_.1} parent=107 // pred_check_branch
          %3875 = sbr.rel (%p3873) target = $region112
        $region111: #{_lambda_.1} parent=107 // pred_region
          %s3877 = ssub.s32 256, 256
          %3878 = vsyncadd %s3865, %s3877
          %s3879 = smul.addr %s38, 2
          %s3880 = smul.addr %s3879, 128
          %s3881 = scalar_lea.hbm %s22, %s3880
          %s3882 = sshll.u32 %s3868, 4
          %s3883 = int_to_ptr.vmem [resolvable:$true] %s3882
          %3888 = dma.vmem_to_hbm [thread:$0]  %s3883, 256, %s3881, %s3865, 128, 128, 8
        $region112: #{_lambda_.1} parent=107 // pred_fallthru
          _
        // Predicated region
        $region113: #{_lambda_.1} parent=107 // pred_check
          %p3889 = pneg %p549
        $region114: #{_lambda_.1} parent=107 // pred_check_branch
          %3891 = sbr.rel (%p3889) target = $region116
        $region115: #{_lambda_.1} parent=107 // pred_region
          _
        $region116: #{_lambda_.1} parent=107 // pred_fallthru
          _
      $region108: #{_lambda_.1} parent=5 // pred_fallthru
        _
      %p3892 = scmp.le.s32.totalorder 2, %s33
      // Predicated region
      $region117: #{_lambda_.1} parent=5 // pred_check
        %p3893 = pneg %p3892
      $region118: #{_lambda_.1} parent=5 // pred_check_branch
        %3895 = sbr.rel (%p3893) target = $region120
      $region119: #{_lambda_.1} parent=5 // pred_region
        %s3896 = ssub.s32 %s33, 2
        // Predicated region
        $region121: #{_lambda_.1} parent=119 // pred_check
          %p3897 = pneg %p529
        $region122: #{_lambda_.1} parent=119 // pred_check_branch
          %3899 = sbr.rel (%p3897) target = $region124
        $region123: #{_lambda_.1} parent=119 // pred_region
          %s3900 = sand.u32 %s514, 1
          %s3901 = scalar_lea.sflag [#allocation3], %s3900
          %s3902 = sand.u32 %s514, 1
          %s3903 = smul.addr %s3902, 16
          %s3904 = scalar_lea.vmem [#allocation2], %s3903
          %3905 = dma.done %s3901, 256
        $region124: #{_lambda_.1} parent=119 // pred_fallthru
          _
        // Predicated region
        $region125: #{_lambda_.1} parent=119 // pred_check
          %p3906 = pneg %p555
        $region126: #{_lambda_.1} parent=119 // pred_check_branch
          %3908 = sbr.rel (%p3906) target = $region128
        $region127: #{_lambda_.1} parent=119 // pred_region
          %p3909 = scmp.lt.s32.totalorder %s39, 1
          %s3910 = scalar_select %p3909, %s39, 1
          %s3911 = smul.addr %s3910, 4
          %s3912 = scalar_lea.vmem %s23, %s3911
        $region128: #{_lambda_.1} parent=119 // pred_fallthru
          _
      $region120: #{_lambda_.1} parent=5 // pred_fallthru
        _
    $region6: #{_lambda_.1} parent=1 // loop_footer
      %s37 = sadd.s32 1, %s33
    $region7: #{_lambda_.1} parent=1 // loop_footer_branch
      %32 = sbr.rel target = $region3
    $region8: #{_lambda_.1} parent=1 // loop_exit
      _
    %3913 = vsyncpa [#allocation3], 1
    %s3914 = scalar_lea.sflag [#allocation3], 1
    %3915 = vsyncpa %s3914, 1

</llo_original>
